<compile_context>
chip_gen: v5e
topology: v5e:2x2
jax: 0.10.0
libtpu: 0.0.40
codegen_flags: <defaults>
</compile_context>

<pallas_src>
import math

import jax
import jax.numpy as jnp
from jax import lax
from jax.experimental import pallas as pl
from jax.experimental.pallas import tpu as pltpu


TILE_N1 = 1024              # stage-1 column tile (lane-minor rows of the GEMM)
TILE_B2 = 64                # stage-2/fc batch tile (multiple of 8)
VMEM_LIMIT = 32 * 1024 * 1024


def _round_up(a, m):
    return -(-a // m) * m


# ----------------------------- Pallas kernels ------------------------------

def conv1_relu_pool_kernel(p_ref, w_ref, b_ref, o_ref):
    # Gabor conv(1->16, 7x7) + bias + ReLU + 2x2 max-pool (phases folded).
    # p_ref: (4, 49, TILE_N1) phase-major patches, N lane-minor
    # w_ref: (16, 49), b_ref: (16, 1), o_ref: (16, TILE_N1)
    w = w_ref[...]
    b = b_ref[...]
    out = None
    for ph in range(4):                       # 2x2 pooling phases, max in regs
        y = jnp.dot(w, p_ref[ph], preferred_element_type=jnp.float32)
        y = jnp.maximum(y + b, 0.0)
        out = y if out is None else jnp.maximum(out, y)
    o_ref[...] = out


def _make_conv2_pool_fc_kernel(tb):
    def kernel(p_ref, w2_ref, b2_ref, wfc_ref, bfc_ref, o_ref):
        # conv(16->32, 3x3) + ReLU + 2x2 max-pool + flatten + fc(512->128) + ReLU.
        # p_ref:  (4, 16, tb, 144) phase-major / position-major patches
        # w2_ref: (144, 32), b2_ref: (1, 32)
        # wfc_ref:(16, 32, 128)  fc weight permuted to (position, cin, feature)
        # bfc_ref:(1, 128),  o_ref: (tb, 128)  (lane-dense output)
        w2 = w2_ref[...]
        b2 = b2_ref[...]
        acc = jnp.zeros((tb, 128), jnp.float32)
        for k in range(16):                   # 16 pooled spatial positions
            pooled_k = None
            for ph in range(4):               # pooling phases folded, max in regs
                y = jnp.dot(p_ref[ph, k], w2, preferred_element_type=jnp.float32)
                y = jnp.maximum(y + b2, 0.0)
                pooled_k = y if pooled_k is None else jnp.maximum(pooled_k, y)
            acc = acc + jnp.dot(pooled_k, wfc_ref[k],
                                preferred_element_type=jnp.float32)
        o_ref[...] = jnp.maximum(acc + bfc_ref[...], 0.0)
    return kernel


def conv1_relu_pool(slab, w, b):
    """slab: (4, 49, Np); w: (16, 49); b: (16, 1) -> (16, Np)."""
    _, k, np_ = slab.shape
    cout = w.shape[0]
    assert np_ % TILE_N1 == 0
    return pl.pallas_call(
        conv1_relu_pool_kernel,
        out_shape=jax.ShapeDtypeStruct((cout, np_), jnp.float32),
        grid=(np_ // TILE_N1,),
        in_specs=[
            pl.BlockSpec((4, k, TILE_N1), lambda n: (0, 0, n)),
            pl.BlockSpec((cout, k), lambda n: (0, 0)),
            pl.BlockSpec((cout, 1), lambda n: (0, 0)),
        ],
        out_specs=pl.BlockSpec((cout, TILE_N1), lambda n: (0, n)),
        compiler_params=pltpu.CompilerParams(
            dimension_semantics=("parallel",),
            vmem_limit_bytes=VMEM_LIMIT),
    )(slab, w, b)


def conv2_pool_fc(slab, w2, b2, wfc_r, bfc_r, tb):
    """slab: (4, 16, Bp, 144) -> (Bp, 128)."""
    _, pos, bp, k = slab.shape
    assert bp % tb == 0
    return pl.pallas_call(
        _make_conv2_pool_fc_kernel(tb),
        out_shape=jax.ShapeDtypeStruct((bp, 128), jnp.float32),
        grid=(bp // tb,),
        in_specs=[
            pl.BlockSpec((4, pos, tb, k), lambda nb: (0, 0, nb, 0)),
            pl.BlockSpec((k, 32), lambda nb: (0, 0)),
            pl.BlockSpec((1, 32), lambda nb: (0, 0)),
            pl.BlockSpec((pos, 32, 128), lambda nb: (0, 0, 0)),
            pl.BlockSpec((1, 128), lambda nb: (0, 0)),
        ],
        out_specs=pl.BlockSpec((tb, 128), lambda nb: (nb, 0)),
        compiler_params=pltpu.CompilerParams(
            dimension_semantics=("parallel",),
            vmem_limit_bytes=VMEM_LIMIT),
    )(slab, w2, b2, wfc_r, bfc_r)


# ------------------------------- host glue ---------------------------------

def _phase_im2col_stage1(x):
    """x: (Bp, 28, 28) -> (4, 49, Bp*121), one materialized slab.

    slab[r*2+c, i*7+j, n*121 + p*11 + q] = x[n, 2p + r + i, 2q + c + j]
    """
    bp = x.shape[0]
    phases = []
    for r in range(2):
        for c in range(2):
            taps = []
            for i in range(7):
                for j in range(7):
                    sub = x[:, r + i:r + i + 21:2, c + j:c + j + 21:2]  # (Bp,11,11)
                    taps.append(sub.reshape(bp * 121))
            phases.append(jnp.stack(taps, axis=0))                      # (49, Bp*121)
    return jnp.stack(phases, axis=0)                                    # (4, 49, Bp*121)


def _phase_im2col_stage2(a1):
    """a1: (16, Bp, 11, 11) -> (4, 16, Bp, 144), one materialized slab.

    slab[r*2+c, p*4+q, n, ci*9 + i*3 + j] = a1[ci, n, 2p + r + i, 2q + c + j]
    """
    bp = a1.shape[1]
    phases = []
    for r in range(2):
        for c in range(2):
            feats = []
            for ci in range(16):
                for i in range(3):
                    for j in range(3):
                        feats.append(a1[ci, :, r + i:r + i + 7:2, c + j:c + j + 7:2])
            f = jnp.stack(feats, axis=-1)                 # (Bp, 4, 4, 144)
            f = f.reshape(bp, 16, 144)                    # k = p*4 + q
            phases.append(jnp.transpose(f, (1, 0, 2)))    # (16, Bp, 144)
    return jnp.stack(phases, axis=0)                      # (4, 16, Bp, 144)


def gabor_backbone_forward(x_nchw, kparams):
    w1_mat, b1_col, w2_mat, b2_row, wfc_r, bfc_row = kparams
    b = x_nchw.shape[0]
    tb = min(TILE_B2, _round_up(b, 8))
    bp = _round_up(b, tb)

    x = x_nchw.reshape(b, 28, 28).astype(jnp.float32)
    if bp != b:
        x = jnp.pad(x, ((0, bp - b), (0, 0), (0, 0)))

    # Stage 1: Gabor conv(1->16, 7x7) + ReLU + MaxPool2  (fused kernel)
    slab1 = _phase_im2col_stage1(x)                      # (4, 49, bp*121)
    n1 = bp * 121
    n1p = _round_up(n1, TILE_N1)
    if n1p != n1:
        slab1 = jnp.pad(slab1, ((0, 0), (0, 0), (0, n1p - n1)))
    a1 = conv1_relu_pool(slab1, w1_mat, b1_col)          # (16, n1p)
    a1 = a1[:, :n1].reshape(16, bp, 11, 11)              # channel-major activation

    # Stage 2 + FC: conv(16->32) + ReLU + MaxPool2 + flatten + Linear + ReLU
    slab2 = _phase_im2col_stage2(a1)                     # (4, 16, bp, 144)
    out = conv2_pool_fc(slab2, w2_mat, b2_row, wfc_r, bfc_row, tb)  # (bp, 128)
    return out[:b]


# ------------------------------- parameters --------------------------------

def gabor_weight(out_channels=16, k=7):
    # Reproduces TrainableGaborConv2d kernel construction at init-time params.
    thetas = jnp.linspace(0.0, math.pi - math.pi / out_channels, out_channels)
    freqs = jnp.array(([0.15, 0.3] * (out_channels // 2))
                      + ([0.2] if out_channels % 2 else []), dtype=jnp.float32)
    sigmas = jnp.full((out_channels,), k / 4.5, dtype=jnp.float32)
    psis = jnp.zeros((out_channels,), dtype=jnp.float32)
    xs = jnp.linspace(-(k - 1) / 2.0, (k - 1) / 2.0, k)
    gx = jnp.tile(xs[None, :], (k, 1))       # grid_x: x varies along columns
    gy = jnp.tile(xs[:, None], (1, k))       # grid_y: y varies along rows
    ct = jnp.cos(thetas)[:, None, None]
    st = jnp.sin(thetas)[:, None, None]
    rot_x = gx[None] * ct + gy[None] * st
    rot_y = -gx[None] * st + gy[None] * ct
    g = jnp.exp(-0.5 * ((rot_x ** 2 + rot_y ** 2) / (sigmas[:, None, None] ** 2)))
    g = g * jnp.cos(2.0 * math.pi * freqs[:, None, None] * rot_x
                    + psis[:, None, None])
    g = g - g.mean(axis=(1, 2), keepdims=True)
    return g[:, None, :, :].astype(jnp.float32)          # (16, 1, 7, 7) OIHW


def init_params(key):
    k1, k2, k3, k4, k5 = jax.random.split(key, 5)
    w1 = gabor_weight(16, 7)
    bnd1 = 1.0 / math.sqrt(1 * 7 * 7)
    b1 = jax.random.uniform(k1, (16,), jnp.float32, -bnd1, bnd1)
    bnd2 = 1.0 / math.sqrt(16 * 3 * 3)
    w2 = jax.random.uniform(k2, (32, 16, 3, 3), jnp.float32, -bnd2, bnd2)
    b2 = jax.random.uniform(k3, (32,), jnp.float32, -bnd2, bnd2)
    bnd3 = 1.0 / math.sqrt(32 * 4 * 4)
    wfc = jax.random.uniform(k4, (128, 512), jnp.float32, -bnd3, bnd3)
    bfc = jax.random.uniform(k5, (128,), jnp.float32, -bnd3, bnd3)
    return (w1, b1, w2, b2, wfc, bfc)


def prepare_params(params):
    """One-time layout transforms (hoisted out of the per-call forward)."""
    w1, b1, w2, b2, wfc, bfc = params
    w1_mat = w1.reshape(16, 49)                  # (Cout, K) for transposed GEMM
    b1_col = b1.reshape(16, 1)
    w2_mat = w2.reshape(32, 144).T               # (K, Cout), K = (cin, kh, kw)
    b2_row = b2.reshape(1, 32)
    # fc weight (128, 512): columns ordered (cin, h, w); permute to
    # (position k = h*4+w, cin, feature) so the kernel needs no transpose.
    wfc_r = jnp.transpose(wfc.reshape(128, 32, 16), (2, 1, 0))  # (16, 32, 128)
    bfc_row = bfc.reshape(1, 128)
    return (w1_mat, b1_col, w2_mat, b2_row, wfc_r, bfc_row)


# ---------------------------- pure-JAX reference ----------------------------

def reference_forward(x_nchw, w1, b1, w2, b2, wfc, bfc):
    dn = ('NCHW', 'OIHW', 'NCHW')
    y = lax.conv_general_dilated(x_nchw, w1, (1, 1), 'VALID',
                                 dimension_numbers=dn,
                                 precision=lax.Precision.HIGHEST)
    y = jax.nn.relu(y + b1[None, :, None, None])
    y = lax.reduce_window(y, -jnp.inf, lax.max, (1, 1, 2, 2), (1, 1, 2, 2),
                          'VALID')
    y = lax.conv_general_dilated(y, w2, (1, 1), 'VALID',
                                 dimension_numbers=dn,
                                 precision=lax.Precision.HIGHEST)
    y = jax.nn.relu(y + b2[None, :, None, None])
    y = lax.reduce_window(y, -jnp.inf, lax.max, (1, 1, 2, 2), (1, 1, 2, 2),
                          'VALID')
    y = y.reshape(y.shape[0], -1)
    return jax.nn.relu(
        jnp.dot(y, wfc.T, precision=lax.Precision.HIGHEST) + bfc[None, :])


if __name__ == "__main__":
    x = jax.random.normal(jax.random.PRNGKey(0), (2, 1, 28, 28),
                          dtype=jnp.float32)
    params = init_params(jax.random.PRNGKey(1))
    kparams = prepare_params(params)

    out = jax.jit(gabor_backbone_forward)(x, kparams)
    out = jax.block_until_ready(out)
    assert out.shape == (2, 128), out.shape

    ref = reference_forward(x, *params)
    err = float(jnp.max(jnp.abs(out - ref)))
    # Default (single-pass bf16) MXU precision vs. the f32 HIGHEST reference
    # gives ~1e-2-scale deviations; structural bugs would be O(0.1-1).
    assert err < 5e-2, f"mismatch vs reference: {err}"

    print("KERNEL_OK")
</pallas_src>

<mosaic_0001>
module attributes {stable_mosaic.version = 11 : i64} {
  func.func @conv1_relu_pool_kernel(%arg0: i32, %arg1: memref<4x49x1024xf32, #tpu.memory_space<vmem>>, %arg2: memref<16x49xf32, #tpu.memory_space<vmem>>, %arg3: memref<16x1xf32, #tpu.memory_space<vmem>>, %arg4: memref<16x1024xf32, #tpu.memory_space<vmem>>) attributes {dimension_semantics = [#tpu.dimension_semantics<parallel>], iteration_bounds = array<i64: 1>, scalar_prefetch = 0 : i64, scratch_operands = 0 : i64, tpu.core_type = #tpu.core_type<tc>, window_params = [{transform_indices = @transform_0, window_bounds = array<i64: 4, 49, 1024>}, {pipeline_mode = #tpu.pipeline_mode<synchronous>, transform_indices = @transform_1, window_bounds = array<i64: 16, 49>}, {pipeline_mode = #tpu.pipeline_mode<synchronous>, transform_indices = @transform_2, window_bounds = array<i64: 16, 1>}, {transform_indices = @transform_3, window_bounds = array<i64: 16, 1024>}]} {
    %c0 = arith.constant 0 : index
    %c0_0 = arith.constant 0 : index
    %0 = vector.load %arg2[%c0, %c0_0] : memref<16x49xf32, #tpu.memory_space<vmem>>, vector<16x49xf32>
    %c0_1 = arith.constant 0 : index
    %c0_2 = arith.constant 0 : index
    %1 = vector.load %arg3[%c0_1, %c0_2] : memref<16x1xf32, #tpu.memory_space<vmem>>, vector<16x1xf32>
    %c0_3 = arith.constant 0 : index
    %c0_4 = arith.constant 0 : index
    %c0_5 = arith.constant 0 : index
    %2 = vector.load %arg1[%c0_3, %c0_4, %c0_5] : memref<4x49x1024xf32, #tpu.memory_space<vmem>>, vector<1x49x1024xf32>
    %3 = vector.shape_cast %2 : vector<1x49x1024xf32> to vector<49x1024xf32>
    %cst = arith.constant dense<0.000000e+00> : vector<16x1024xf32>
    %4 = tpu.matmul %0, %3, %cst {dimension_numbers = #tpu.dot_dimension_numbers<[1], [0], [0], [1], [0, 0, 1, 1], [], []>} : vector<16x49xf32>, vector<49x1024xf32>, vector<16x1024xf32> -> vector<16x1024xf32>
    %5 = vector.broadcast %1 : vector<16x1xf32> to vector<16x1024xf32>
    %6 = arith.addf %4, %5 : vector<16x1024xf32>
    %cst_6 = arith.constant 0.000000e+00 : f32
    %7 = vector.broadcast %cst_6 : f32 to vector<16x1024xf32>
    %8 = arith.maximumf %6, %7 : vector<16x1024xf32>
    %c1 = arith.constant 1 : index
    %c0_7 = arith.constant 0 : index
    %c0_8 = arith.constant 0 : index
    %9 = vector.load %arg1[%c1, %c0_7, %c0_8] : memref<4x49x1024xf32, #tpu.memory_space<vmem>>, vector<1x49x1024xf32>
    %10 = vector.shape_cast %9 : vector<1x49x1024xf32> to vector<49x1024xf32>
    %cst_9 = arith.constant dense<0.000000e+00> : vector<16x1024xf32>
    %11 = tpu.matmul %0, %10, %cst_9 {dimension_numbers = #tpu.dot_dimension_numbers<[1], [0], [0], [1], [0, 0, 1, 1], [], []>} : vector<16x49xf32>, vector<49x1024xf32>, vector<16x1024xf32> -> vector<16x1024xf32>
    %12 = vector.broadcast %1 : vector<16x1xf32> to vector<16x1024xf32>
    %13 = arith.addf %11, %12 : vector<16x1024xf32>
    %cst_10 = arith.constant 0.000000e+00 : f32
    %14 = vector.broadcast %cst_10 : f32 to vector<16x1024xf32>
    %15 = arith.maximumf %13, %14 : vector<16x1024xf32>
    %16 = arith.maximumf %8, %15 : vector<16x1024xf32>
    %c2 = arith.constant 2 : index
    %c0_11 = arith.constant 0 : index
    %c0_12 = arith.constant 0 : index
    %17 = vector.load %arg1[%c2, %c0_11, %c0_12] : memref<4x49x1024xf32, #tpu.memory_space<vmem>>, vector<1x49x1024xf32>
    %18 = vector.shape_cast %17 : vector<1x49x1024xf32> to vector<49x1024xf32>
    %cst_13 = arith.constant dense<0.000000e+00> : vector<16x1024xf32>
    %19 = tpu.matmul %0, %18, %cst_13 {dimension_numbers = #tpu.dot_dimension_numbers<[1], [0], [0], [1], [0, 0, 1, 1], [], []>} : vector<16x49xf32>, vector<49x1024xf32>, vector<16x1024xf32> -> vector<16x1024xf32>
    %20 = vector.broadcast %1 : vector<16x1xf32> to vector<16x1024xf32>
    %21 = arith.addf %19, %20 : vector<16x1024xf32>
    %cst_14 = arith.constant 0.000000e+00 : f32
    %22 = vector.broadcast %cst_14 : f32 to vector<16x1024xf32>
    %23 = arith.maximumf %21, %22 : vector<16x1024xf32>
    %24 = arith.maximumf %16, %23 : vector<16x1024xf32>
    %c3 = arith.constant 3 : index
    %c0_15 = arith.constant 0 : index
    %c0_16 = arith.constant 0 : index
    %25 = vector.load %arg1[%c3, %c0_15, %c0_16] : memref<4x49x1024xf32, #tpu.memory_space<vmem>>, vector<1x49x1024xf32>
    %26 = vector.shape_cast %25 : vector<1x49x1024xf32> to vector<49x1024xf32>
    %cst_17 = arith.constant dense<0.000000e+00> : vector<16x1024xf32>
    %27 = tpu.matmul %0, %26, %cst_17 {dimension_numbers = #tpu.dot_dimension_numbers<[1], [0], [0], [1], [0, 0, 1, 1], [], []>} : vector<16x49xf32>, vector<49x1024xf32>, vector<16x1024xf32> -> vector<16x1024xf32>
    %28 = vector.broadcast %1 : vector<16x1xf32> to vector<16x1024xf32>
    %29 = arith.addf %27, %28 : vector<16x1024xf32>
    %cst_18 = arith.constant 0.000000e+00 : f32
    %30 = vector.broadcast %cst_18 : f32 to vector<16x1024xf32>
    %31 = arith.maximumf %29, %30 : vector<16x1024xf32>
    %32 = arith.maximumf %24, %31 : vector<16x1024xf32>
    %c0_19 = arith.constant 0 : index
    %c0_20 = arith.constant 0 : index
    %33 = vector.load %arg4[%c0_19, %c0_20] : memref<16x1024xf32, #tpu.memory_space<vmem>>, vector<16x1024xf32>
    tpu.vector_store %arg4[%c0_19, %c0_20], %32 {strides = array<i32>} : memref<16x1024xf32, #tpu.memory_space<vmem>>, vector<16x1024xf32>,
    return
  }
  func.func @transform_0(%arg0: i32) -> (i32, i32, i32) {
    %c0_i32 = arith.constant 0 : i32
    %c0_i32_0 = arith.constant 0 : i32
    %c0_i32_1 = arith.constant 0 : i32
    return %c0_i32, %c0_i32_0, %arg0 : i32, i32, i32
  }
  func.func @transform_1(%arg0: i32) -> (i32, i32) {
    %c0_i32 = arith.constant 0 : i32
    %c0_i32_0 = arith.constant 0 : i32
    %c0_i32_1 = arith.constant 0 : i32
    return %c0_i32, %c0_i32_0 : i32, i32
  }
  func.func @transform_2(%arg0: i32) -> (i32, i32) {
    %c0_i32 = arith.constant 0 : i32
    %c0_i32_0 = arith.constant 0 : i32
    %c0_i32_1 = arith.constant 0 : i32
    return %c0_i32, %c0_i32_0 : i32, i32
  }
  func.func @transform_3(%arg0: i32) -> (i32, i32) {
    %c0_i32 = arith.constant 0 : i32
    %c0_i32_0 = arith.constant 0 : i32
    return %c0_i32, %arg0 : i32, i32
  }
}

module attributes {stable_mosaic.version = 11 : i64} {
  func.func @kernel(%arg0: i32, %arg1: memref<4x16x8x144xf32, #tpu.memory_space<vmem>>, %arg2: memref<144x32xf32, #tpu.memory_space<vmem>>, %arg3: memref<1x32xf32, #tpu.memory_space<vmem>>, %arg4: memref<16x32x128xf32, #tpu.memory_space<vmem>>, %arg5: memref<1x128xf32, #tpu.memory_space<vmem>>, %arg6: memref<8x128xf32, #tpu.memory_space<vmem>>) attributes {dimension_semantics = [#tpu.dimension_semantics<parallel>], iteration_bounds = array<i64: 1>, scalar_prefetch = 0 : i64, scratch_operands = 0 : i64, tpu.core_type = #tpu.core_type<tc>, window_params = [{transform_indices = @transform_0, window_bounds = array<i64: 4, 16, 8, 144>}, {pipeline_mode = #tpu.pipeline_mode<synchronous>, transform_indices = @transform_1, window_bounds = array<i64: 144, 32>}, {pipeline_mode = #tpu.pipeline_mode<synchronous>, transform_indices = @transform_2, window_bounds = array<i64: 1, 32>}, {pipeline_mode = #tpu.pipeline_mode<synchronous>, transform_indices = @transform_3, window_bounds = array<i64: 16, 32, 128>}, {pipeline_mode = #tpu.pipeline_mode<synchronous>, transform_indices = @transform_4, window_bounds = array<i64: 1, 128>}, {transform_indices = @transform_5, window_bounds = array<i64: 8, 128>}]} {
    %c0 = arith.constant 0 : index
    %c0_0 = arith.constant 0 : index
    %0 = vector.load %arg2[%c0, %c0_0] : memref<144x32xf32, #tpu.memory_space<vmem>>, vector<144x32xf32>
    %c0_1 = arith.constant 0 : index
    %c0_2 = arith.constant 0 : index
    %1 = vector.load %arg3[%c0_1, %c0_2] : memref<1x32xf32, #tpu.memory_space<vmem>>, vector<1x32xf32>
    %cst = arith.constant 0.000000e+00 : f32
    %2 = vector.broadcast %cst : f32 to vector<8x128xf32>
    %c0_3 = arith.constant 0 : index
    %c0_4 = arith.constant 0 : index
    %c0_5 = arith.constant 0 : index
    %c0_6 = arith.constant 0 : index
    %3 = vector.load %arg1[%c0_3, %c0_4, %c0_5, %c0_6] : memref<4x16x8x144xf32, #tpu.memory_space<vmem>>, vector<1x1x8x144xf32>
    %4 = vector.shape_cast %3 : vector<1x1x8x144xf32> to vector<8x144xf32>
    %cst_7 = arith.constant dense<0.000000e+00> : vector<8x32xf32>
    %5 = tpu.matmul %4, %0, %cst_7 {dimension_numbers = #tpu.dot_dimension_numbers<[1], [0], [0], [1], [0, 0, 1, 1], [], []>} : vector<8x144xf32>, vector<144x32xf32>, vector<8x32xf32> -> vector<8x32xf32>
    %6 = vector.broadcast %1 : vector<1x32xf32> to vector<8x32xf32>
    %7 = arith.addf %5, %6 : vector<8x32xf32>
    %cst_8 = arith.constant 0.000000e+00 : f32
    %8 = vector.broadcast %cst_8 : f32 to vector<8x32xf32>
    %9 = arith.maximumf %7, %8 : vector<8x32xf32>
    %c1 = arith.constant 1 : index
    %c0_9 = arith.constant 0 : index
    %c0_10 = arith.constant 0 : index
    %c0_11 = arith.constant 0 : index
    %10 = vector.load %arg1[%c1, %c0_9, %c0_10, %c0_11] : memref<4x16x8x144xf32, #tpu.memory_space<vmem>>, vector<1x1x8x144xf32>
    %11 = vector.shape_cast %10 : vector<1x1x8x144xf32> to vector<8x144xf32>
    %cst_12 = arith.constant dense<0.000000e+00> : vector<8x32xf32>
    %12 = tpu.matmul %11, %0, %cst_12 {dimension_numbers = #tpu.dot_dimension_numbers<[1], [0], [0], [1], [0, 0, 1, 1], [], []>} : vector<8x144xf32>, vector<144x32xf32>, vector<8x32xf32> -> vector<8x32xf32>
    %13 = vector.broadcast %1 : vector<1x32xf32> to vector<8x32xf32>
    %14 = arith.addf %12, %13 : vector<8x32xf32>
    %cst_13 = arith.constant 0.000000e+00 : f32
    %15 = vector.broadcast %cst_13 : f32 to vector<8x32xf32>
    %16 = arith.maximumf %14, %15 : vector<8x32xf32>
    %17 = arith.maximumf %9, %16 : vector<8x32xf32>
    %c2 = arith.constant 2 : index
    %c0_14 = arith.constant 0 : index
    %c0_15 = arith.constant 0 : index
    %c0_16 = arith.constant 0 : index
    %18 = vector.load %arg1[%c2, %c0_14, %c0_15, %c0_16] : memref<4x16x8x144xf32, #tpu.memory_space<vmem>>, vector<1x1x8x144xf32>
    %19 = vector.shape_cast %18 : vector<1x1x8x144xf32> to vector<8x144xf32>
    %cst_17 = arith.constant dense<0.000000e+00> : vector<8x32xf32>
    %20 = tpu.matmul %19, %0, %cst_17 {dimension_numbers = #tpu.dot_dimension_numbers<[1], [0], [0], [1], [0, 0, 1, 1], [], []>} : vector<8x144xf32>, vector<144x32xf32>, vector<8x32xf32> -> vector<8x32xf32>
    %21 = vector.broadcast %1 : vector<1x32xf32> to vector<8x32xf32>
    %22 = arith.addf %20, %21 : vector<8x32xf32>
    %cst_18 = arith.constant 0.000000e+00 : f32
    %23 = vector.broadcast %cst_18 : f32 to vector<8x32xf32>
    %24 = arith.maximumf %22, %23 : vector<8x32xf32>
    %25 = arith.maximumf %17, %24 : vector<8x32xf32>
    %c3 = arith.constant 3 : index
    %c0_19 = arith.constant 0 : index
    %c0_20 = arith.constant 0 : index
    %c0_21 = arith.constant 0 : index
    %26 = vector.load %arg1[%c3, %c0_19, %c0_20, %c0_21] : memref<4x16x8x144xf32, #tpu.memory_space<vmem>>, vector<1x1x8x144xf32>
    %27 = vector.shape_cast %26 : vector<1x1x8x144xf32> to vector<8x144xf32>
    %cst_22 = arith.constant dense<0.000000e+00> : vector<8x32xf32>
    %28 = tpu.matmul %27, %0, %cst_22 {dimension_numbers = #tpu.dot_dimension_numbers<[1], [0], [0], [1], [0, 0, 1, 1], [], []>} : vector<8x144xf32>, vector<144x32xf32>, vector<8x32xf32> -> vector<8x32xf32>
    %29 = vector.broadcast %1 : vector<1x32xf32> to vector<8x32xf32>
    %30 = arith.addf %28, %29 : vector<8x32xf32>
    %cst_23 = arith.constant 0.000000e+00 : f32
    %31 = vector.broadcast %cst_23 : f32 to vector<8x32xf32>
    %32 = arith.maximumf %30, %31 : vector<8x32xf32>
    %33 = arith.maximumf %25, %32 : vector<8x32xf32>
    %c0_24 = arith.constant 0 : index
    %c0_25 = arith.constant 0 : index
    %c0_26 = arith.constant 0 : index
    %34 = vector.load %arg4[%c0_24, %c0_25, %c0_26] : memref<16x32x128xf32, #tpu.memory_space<vmem>>, vector<1x32x128xf32>
    %35 = vector.shape_cast %34 : vector<1x32x128xf32> to vector<32x128xf32>
    %cst_27 = arith.constant dense<0.000000e+00> : vector<8x128xf32>
    %36 = tpu.matmul %33, %35, %cst_27 {dimension_numbers = #tpu.dot_dimension_numbers<[1], [0], [0], [1], [0, 0, 1, 1], [], []>} : vector<8x32xf32>, vector<32x128xf32>, vector<8x128xf32> -> vector<8x128xf32>
    %37 = arith.addf %2, %36 : vector<8x128xf32>
    %c0_28 = arith.constant 0 : index
    %c1_29 = arith.constant 1 : index
    %c0_30 = arith.constant 0 : index
    %c0_31 = arith.constant 0 : index
    %38 = vector.load %arg1[%c0_28, %c1_29, %c0_30, %c0_31] : memref<4x16x8x144xf32, #tpu.memory_space<vmem>>, vector<1x1x8x144xf32>
    %39 = vector.shape_cast %38 : vector<1x1x8x144xf32> to vector<8x144xf32>
    %cst_32 = arith.constant dense<0.000000e+00> : vector<8x32xf32>
    %40 = tpu.matmul %39, %0, %cst_32 {dimension_numbers = #tpu.dot_dimension_numbers<[1], [0], [0], [1], [0, 0, 1, 1], [], []>} : vector<8x144xf32>, vector<144x32xf32>, vector<8x32xf32> -> vector<8x32xf32>
    %41 = vector.broadcast %1 : vector<1x32xf32> to vector<8x32xf32>
    %42 = arith.addf %40, %41 : vector<8x32xf32>
    %cst_33 = arith.constant 0.000000e+00 : f32
    %43 = vector.broadcast %cst_33 : f32 to vector<8x32xf32>
    %44 = arith.maximumf %42, %43 : vector<8x32xf32>
    %c1_34 = arith.constant 1 : index
    %c1_35 = arith.constant 1 : index
    %c0_36 = arith.constant 0 : index
    %c0_37 = arith.constant 0 : index
    %45 = vector.load %arg1[%c1_34, %c1_35, %c0_36, %c0_37] : memref<4x16x8x144xf32, #tpu.memory_space<vmem>>, vector<1x1x8x144xf32>
    %46 = vector.shape_cast %45 : vector<1x1x8x144xf32> to vector<8x144xf32>
    %cst_38 = arith.constant dense<0.000000e+00> : vector<8x32xf32>
    %47 = tpu.matmul %46, %0, %cst_38 {dimension_numbers = #tpu.dot_dimension_numbers<[1], [0], [0], [1], [0, 0, 1, 1], [], []>} : vector<8x144xf32>, vector<144x32xf32>, vector<8x32xf32> -> vector<8x32xf32>
    %48 = vector.broadcast %1 : vector<1x32xf32> to vector<8x32xf32>
    %49 = arith.addf %47, %48 : vector<8x32xf32>
    %cst_39 = arith.constant 0.000000e+00 : f32
    %50 = vector.broadcast %cst_39 : f32 to vector<8x32xf32>
    %51 = arith.maximumf %49, %50 : vector<8x32xf32>
    %52 = arith.maximumf %44, %51 : vector<8x32xf32>
    %c2_40 = arith.constant 2 : index
    %c1_41 = arith.constant 1 : index
    %c0_42 = arith.constant 0 : index
    %c0_43 = arith.constant 0 : index
    %53 = vector.load %arg1[%c2_40, %c1_41, %c0_42, %c0_43] : memref<4x16x8x144xf32, #tpu.memory_space<vmem>>, vector<1x1x8x144xf32>
    %54 = vector.shape_cast %53 : vector<1x1x8x144xf32> to vector<8x144xf32>
    %cst_44 = arith.constant dense<0.000000e+00> : vector<8x32xf32>
    %55 = tpu.matmul %54, %0, %cst_44 {dimension_numbers = #tpu.dot_dimension_numbers<[1], [0], [0], [1], [0, 0, 1, 1], [], []>} : vector<8x144xf32>, vector<144x32xf32>, vector<8x32xf32> -> vector<8x32xf32>
    %56 = vector.broadcast %1 : vector<1x32xf32> to vector<8x32xf32>
    %57 = arith.addf %55, %56 : vector<8x32xf32>
    %cst_45 = arith.constant 0.000000e+00 : f32
    %58 = vector.broadcast %cst_45 : f32 to vector<8x32xf32>
    %59 = arith.maximumf %57, %58 : vector<8x32xf32>
    %60 = arith.maximumf %52, %59 : vector<8x32xf32>
    %c3_46 = arith.constant 3 : index
    %c1_47 = arith.constant 1 : index
    %c0_48 = arith.constant 0 : index
    %c0_49 = arith.constant 0 : index
    %61 = vector.load %arg1[%c3_46, %c1_47, %c0_48, %c0_49] : memref<4x16x8x144xf32, #tpu.memory_space<vmem>>, vector<1x1x8x144xf32>
    %62 = vector.shape_cast %61 : vector<1x1x8x144xf32> to vector<8x144xf32>
    %cst_50 = arith.constant dense<0.000000e+00> : vector<8x32xf32>
    %63 = tpu.matmul %62, %0, %cst_50 {dimension_numbers = #tpu.dot_dimension_numbers<[1], [0], [0], [1], [0, 0, 1, 1], [], []>} : vector<8x144xf32>, vector<144x32xf32>, vector<8x32xf32> -> vector<8x32xf32>
    %64 = vector.broadcast %1 : vector<1x32xf32> to vector<8x32xf32>
    %65 = arith.addf %63, %64 : vector<8x32xf32>
    %cst_51 = arith.constant 0.000000e+00 : f32
    %66 = vector.broadcast %cst_51 : f32 to vector<8x32xf32>
    %67 = arith.maximumf %65, %66 : vector<8x32xf32>
    %68 = arith.maximumf %60, %67 : vector<8x32xf32>
    %c1_52 = arith.constant 1 : index
    %c0_53 = arith.constant 0 : index
    %c0_54 = arith.constant 0 : index
    %69 = vector.load %arg4[%c1_52, %c0_53, %c0_54] : memref<16x32x128xf32, #tpu.memory_space<vmem>>, vector<1x32x128xf32>
    %70 = vector.shape_cast %69 : vector<1x32x128xf32> to vector<32x128xf32>
    %cst_55 = arith.constant dense<0.000000e+00> : vector<8x128xf32>
    %71 = tpu.matmul %68, %70, %cst_55 {dimension_numbers = #tpu.dot_dimension_numbers<[1], [0], [0], [1], [0, 0, 1, 1], [], []>} : vector<8x32xf32>, vector<32x128xf32>, vector<8x128xf32> -> vector<8x128xf32>
    %72 = arith.addf %37, %71 : vector<8x128xf32>
    %c0_56 = arith.constant 0 : index
    %c2_57 = arith.constant 2 : index
    %c0_58 = arith.constant 0 : index
    %c0_59 = arith.constant 0 : index
    %73 = vector.load %arg1[%c0_56, %c2_57, %c0_58, %c0_59] : memref<4x16x8x144xf32, #tpu.memory_space<vmem>>, vector<1x1x8x144xf32>
    %74 = vector.shape_cast %73 : vector<1x1x8x144xf32> to vector<8x144xf32>
    %cst_60 = arith.constant dense<0.000000e+00> : vector<8x32xf32>
    %75 = tpu.matmul %74, %0, %cst_60 {dimension_numbers = #tpu.dot_dimension_numbers<[1], [0], [0], [1], [0, 0, 1, 1], [], []>} : vector<8x144xf32>, vector<144x32xf32>, vector<8x32xf32> -> vector<8x32xf32>
    %76 = vector.broadcast %1 : vector<1x32xf32> to vector<8x32xf32>
    %77 = arith.addf %75, %76 : vector<8x32xf32>
    %cst_61 = arith.constant 0.000000e+00 : f32
    %78 = vector.broadcast %cst_61 : f32 to vector<8x32xf32>
    %79 = arith.maximumf %77, %78 : vector<8x32xf32>
    %c1_62 = arith.constant 1 : index
    %c2_63 = arith.constant 2 : index
    %c0_64 = arith.constant 0 : index
    %c0_65 = arith.constant 0 : index
    %80 = vector.load %arg1[%c1_62, %c2_63, %c0_64, %c0_65] : memref<4x16x8x144xf32, #tpu.memory_space<vmem>>, vector<1x1x8x144xf32>
    %81 = vector.shape_cast %80 : vector<1x1x8x144xf32> to vector<8x144xf32>
    %cst_66 = arith.constant dense<0.000000e+00> : vector<8x32xf32>
    %82 = tpu.matmul %81, %0, %cst_66 {dimension_numbers = #tpu.dot_dimension_numbers<[1], [0], [0], [1], [0, 0, 1, 1], [], []>} : vector<8x144xf32>, vector<144x32xf32>, vector<8x32xf32> -> vector<8x32xf32>
    %83 = vector.broadcast %1 : vector<1x32xf32> to vector<8x32xf32>
    %84 = arith.addf %82, %83 : vector<8x32xf32>
    %cst_67 = arith.constant 0.000000e+00 : f32
    %85 = vector.broadcast %cst_67 : f32 to vector<8x32xf32>
    %86 = arith.maximumf %84, %85 : vector<8x32xf32>
    %87 = arith.maximumf %79, %86 : vector<8x32xf32>
    %c2_68 = arith.constant 2 : index
    %c2_69 = arith.constant 2 : index
    %c0_70 = arith.constant 0 : index
    %c0_71 = arith.constant 0 : index
    %88 = vector.load %arg1[%c2_68, %c2_69, %c0_70, %c0_71] : memref<4x16x8x144xf32, #tpu.memory_space<vmem>>, vector<1x1x8x144xf32>
    %89 = vector.shape_cast %88 : vector<1x1x8x144xf32> to vector<8x144xf32>
    %cst_72 = arith.constant dense<0.000000e+00> : vector<8x32xf32>
    %90 = tpu.matmul %89, %0, %cst_72 {dimension_numbers = #tpu.dot_dimension_numbers<[1], [0], [0], [1], [0, 0, 1, 1], [], []>} : vector<8x144xf32>, vector<144x32xf32>, vector<8x32xf32> -> vector<8x32xf32>
    %91 = vector.broadcast %1 : vector<1x32xf32> to vector<8x32xf32>
    %92 = arith.addf %90, %91 : vector<8x32xf32>
    %cst_73 = arith.constant 0.000000e+00 : f32
    %93 = vector.broadcast %cst_73 : f32 to vector<8x32xf32>
    %94 = arith.maximumf %92, %93 : vector<8x32xf32>
    %95 = arith.maximumf %87, %94 : vector<8x32xf32>
    %c3_74 = arith.constant 3 : index
    %c2_75 = arith.constant 2 : index
    %c0_76 = arith.constant 0 : index
    %c0_77 = arith.constant 0 : index
    %96 = vector.load %arg1[%c3_74, %c2_75, %c0_76, %c0_77] : memref<4x16x8x144xf32, #tpu.memory_space<vmem>>, vector<1x1x8x144xf32>
    %97 = vector.shape_cast %96 : vector<1x1x8x144xf32> to vector<8x144xf32>
    %cst_78 = arith.constant dense<0.000000e+00> : vector<8x32xf32>
    %98 = tpu.matmul %97, %0, %cst_78 {dimension_numbers = #tpu.dot_dimension_numbers<[1], [0], [0], [1], [0, 0, 1, 1], [], []>} : vector<8x144xf32>, vector<144x32xf32>, vector<8x32xf32> -> vector<8x32xf32>
    %99 = vector.broadcast %1 : vector<1x32xf32> to vector<8x32xf32>
    %100 = arith.addf %98, %99 : vector<8x32xf32>
    %cst_79 = arith.constant 0.000000e+00 : f32
    %101 = vector.broadcast %cst_79 : f32 to vector<8x32xf32>
    %102 = arith.maximumf %100, %101 : vector<8x32xf32>
    %103 = arith.maximumf %95, %102 : vector<8x32xf32>
    %c2_80 = arith.constant 2 : index
    %c0_81 = arith.constant 0 : index
    %c0_82 = arith.constant 0 : index
    %104 = vector.load %arg4[%c2_80, %c0_81, %c0_82] : memref<16x32x128xf32, #tpu.memory_space<vmem>>, vector<1x32x128xf32>
    %105 = vector.shape_cast %104 : vector<1x32x128xf32> to vector<32x128xf32>
    %cst_83 = arith.constant dense<0.000000e+00> : vector<8x128xf32>
    %106 = tpu.matmul %103, %105, %cst_83 {dimension_numbers = #tpu.dot_dimension_numbers<[1], [0], [0], [1], [0, 0, 1, 1], [], []>} : vector<8x32xf32>, vector<32x128xf32>, vector<8x128xf32> -> vector<8x128xf32>
    %107 = arith.addf %72, %106 : vector<8x128xf32>
    %c0_84 = arith.constant 0 : index
    %c3_85 = arith.constant 3 : index
    %c0_86 = arith.constant 0 : index
    %c0_87 = arith.constant 0 : index
    %108 = vector.load %arg1[%c0_84, %c3_85, %c0_86, %c0_87] : memref<4x16x8x144xf32, #tpu.memory_space<vmem>>, vector<1x1x8x144xf32>
    %109 = vector.shape_cast %108 : vector<1x1x8x144xf32> to vector<8x144xf32>
    %cst_88 = arith.constant dense<0.000000e+00> : vector<8x32xf32>
    %110 = tpu.matmul %109, %0, %cst_88 {dimension_numbers = #tpu.dot_dimension_numbers<[1], [0], [0], [1], [0, 0, 1, 1], [], []>} : vector<8x144xf32>, vector<144x32xf32>, vector<8x32xf32> -> vector<8x32xf32>
    %111 = vector.broadcast %1 : vector<1x32xf32> to vector<8x32xf32>
    %112 = arith.addf %110, %111 : vector<8x32xf32>
    %cst_89 = arith.constant 0.000000e+00 : f32
    %113 = vector.broadcast %cst_89 : f32 to vector<8x32xf32>
    %114 = arith.maximumf %112, %113 : vector<8x32xf32>
    %c1_90 = arith.constant 1 : index
    %c3_91 = arith.constant 3 : index
    %c0_92 = arith.constant 0 : index
    %c0_93 = arith.constant 0 : index
    %115 = vector.load %arg1[%c1_90, %c3_91, %c0_92, %c0_93] : memref<4x16x8x144xf32, #tpu.memory_space<vmem>>, vector<1x1x8x144xf32>
    %116 = vector.shape_cast %115 : vector<1x1x8x144xf32> to vector<8x144xf32>
    %cst_94 = arith.constant dense<0.000000e+00> : vector<8x32xf32>
    %117 = tpu.matmul %116, %0, %cst_94 {dimension_numbers = #tpu.dot_dimension_numbers<[1], [0], [0], [1], [0, 0, 1, 1], [], []>} : vector<8x144xf32>, vector<144x32xf32>, vector<8x32xf32> -> vector<8x32xf32>
    %118 = vector.broadcast %1 : vector<1x32xf32> to vector<8x32xf32>
    %119 = arith.addf %117, %118 : vector<8x32xf32>
    %cst_95 = arith.constant 0.000000e+00 : f32
    %120 = vector.broadcast %cst_95 : f32 to vector<8x32xf32>
    %121 = arith.maximumf %119, %120 : vector<8x32xf32>
    %122 = arith.maximumf %114, %121 : vector<8x32xf32>
    %c2_96 = arith.constant 2 : index
    %c3_97 = arith.constant 3 : index
    %c0_98 = arith.constant 0 : index
    %c0_99 = arith.constant 0 : index
    %123 = vector.load %arg1[%c2_96, %c3_97, %c0_98, %c0_99] : memref<4x16x8x144xf32, #tpu.memory_space<vmem>>, vector<1x1x8x144xf32>
    %124 = vector.shape_cast %123 : vector<1x1x8x144xf32> to vector<8x144xf32>
    %cst_100 = arith.constant dense<0.000000e+00> : vector<8x32xf32>
    %125 = tpu.matmul %124, %0, %cst_100 {dimension_numbers = #tpu.dot_dimension_numbers<[1], [0], [0], [1], [0, 0, 1, 1], [], []>} : vector<8x144xf32>, vector<144x32xf32>, vector<8x32xf32> -> vector<8x32xf32>
    %126 = vector.broadcast %1 : vector<1x32xf32> to vector<8x32xf32>
    %127 = arith.addf %125, %126 : vector<8x32xf32>
    %cst_101 = arith.constant 0.000000e+00 : f32
    %128 = vector.broadcast %cst_101 : f32 to vector<8x32xf32>
    %129 = arith.maximumf %127, %128 : vector<8x32xf32>
    %130 = arith.maximumf %122, %129 : vector<8x32xf32>
    %c3_102 = arith.constant 3 : index
    %c3_103 = arith.constant 3 : index
    %c0_104 = arith.constant 0 : index
    %c0_105 = arith.constant 0 : index
    %131 = vector.load %arg1[%c3_102, %c3_103, %c0_104, %c0_105] : memref<4x16x8x144xf32, #tpu.memory_space<vmem>>, vector<1x1x8x144xf32>
    %132 = vector.shape_cast %131 : vector<1x1x8x144xf32> to vector<8x144xf32>
    %cst_106 = arith.constant dense<0.000000e+00> : vector<8x32xf32>
    %133 = tpu.matmul %132, %0, %cst_106 {dimension_numbers = #tpu.dot_dimension_numbers<[1], [0], [0], [1], [0, 0, 1, 1], [], []>} : vector<8x144xf32>, vector<144x32xf32>, vector<8x32xf32> -> vector<8x32xf32>
    %134 = vector.broadcast %1 : vector<1x32xf32> to vector<8x32xf32>
    %135 = arith.addf %133, %134 : vector<8x32xf32>
    %cst_107 = arith.constant 0.000000e+00 : f32
    %136 = vector.broadcast %cst_107 : f32 to vector<8x32xf32>
    %137 = arith.maximumf %135, %136 : vector<8x32xf32>
    %138 = arith.maximumf %130, %137 : vector<8x32xf32>
    %c3_108 = arith.constant 3 : index
    %c0_109 = arith.constant 0 : index
    %c0_110 = arith.constant 0 : index
    %139 = vector.load %arg4[%c3_108, %c0_109, %c0_110] : memref<16x32x128xf32, #tpu.memory_space<vmem>>, vector<1x32x128xf32>
    %140 = vector.shape_cast %139 : vector<1x32x128xf32> to vector<32x128xf32>
    %cst_111 = arith.constant dense<0.000000e+00> : vector<8x128xf32>
    %141 = tpu.matmul %138, %140, %cst_111 {dimension_numbers = #tpu.dot_dimension_numbers<[1], [0], [0], [1], [0, 0, 1, 1], [], []>} : vector<8x32xf32>, vector<32x128xf32>, vector<8x128xf32> -> vector<8x128xf32>
    %142 = arith.addf %107, %141 : vector<8x128xf32>
    %c0_112 = arith.constant 0 : index
    %c4 = arith.constant 4 : index
    %c0_113 = arith.constant 0 : index
    %c0_114 = arith.constant 0 : index
    %143 = vector.load %arg1[%c0_112, %c4, %c0_113, %c0_114] : memref<4x16x8x144xf32, #tpu.memory_space<vmem>>, vector<1x1x8x144xf32>
    %144 = vector.shape_cast %143 : vector<1x1x8x144xf32> to vector<8x144xf32>
    %cst_115 = arith.constant dense<0.000000e+00> : vector<8x32xf32>
    %145 = tpu.matmul %144, %0, %cst_115 {dimension_numbers = #tpu.dot_dimension_numbers<[1], [0], [0], [1], [0, 0, 1, 1], [], []>} : vector<8x144xf32>, vector<144x32xf32>, vector<8x32xf32> -> vector<8x32xf32>
    %146 = vector.broadcast %1 : vector<1x32xf32> to vector<8x32xf32>
    %147 = arith.addf %145, %146 : vector<8x32xf32>
    %cst_116 = arith.constant 0.000000e+00 : f32
    %148 = vector.broadcast %cst_116 : f32 to vector<8x32xf32>
    %149 = arith.maximumf %147, %148 : vector<8x32xf32>
    %c1_117 = arith.constant 1 : index
    %c4_118 = arith.constant 4 : index
    %c0_119 = arith.constant 0 : index
    %c0_120 = arith.constant 0 : index
    %150 = vector.load %arg1[%c1_117, %c4_118, %c0_119, %c0_120] : memref<4x16x8x144xf32, #tpu.memory_space<vmem>>, vector<1x1x8x144xf32>
    %151 = vector.shape_cast %150 : vector<1x1x8x144xf32> to vector<8x144xf32>
    %cst_121 = arith.constant dense<0.000000e+00> : vector<8x32xf32>
    %152 = tpu.matmul %151, %0, %cst_121 {dimension_numbers = #tpu.dot_dimension_numbers<[1], [0], [0], [1], [0, 0, 1, 1], [], []>} : vector<8x144xf32>, vector<144x32xf32>, vector<8x32xf32> -> vector<8x32xf32>
    %153 = vector.broadcast %1 : vector<1x32xf32> to vector<8x32xf32>
    %154 = arith.addf %152, %153 : vector<8x32xf32>
    %cst_122 = arith.constant 0.000000e+00 : f32
    %155 = vector.broadcast %cst_122 : f32 to vector<8x32xf32>
    %156 = arith.maximumf %154, %155 : vector<8x32xf32>
    %157 = arith.maximumf %149, %156 : vector<8x32xf32>
    %c2_123 = arith.constant 2 : index
    %c4_124 = arith.constant 4 : index
    %c0_125 = arith.constant 0 : index
    %c0_126 = arith.constant 0 : index
    %158 = vector.load %arg1[%c2_123, %c4_124, %c0_125, %c0_126] : memref<4x16x8x144xf32, #tpu.memory_space<vmem>>, vector<1x1x8x144xf32>
    %159 = vector.shape_cast %158 : vector<1x1x8x144xf32> to vector<8x144xf32>
    %cst_127 = arith.constant dense<0.000000e+00> : vector<8x32xf32>
    %160 = tpu.matmul %159, %0, %cst_127 {dimension_numbers = #tpu.dot_dimension_numbers<[1], [0], [0], [1], [0, 0, 1, 1], [], []>} : vector<8x144xf32>, vector<144x32xf32>, vector<8x32xf32> -> vector<8x32xf32>
    %161 = vector.broadcast %1 : vector<1x32xf32> to vector<8x32xf32>
    %162 = arith.addf %160, %161 : vector<8x32xf32>
    %cst_128 = arith.constant 0.000000e+00 : f32
    %163 = vector.broadcast %cst_128 : f32 to vector<8x32xf32>
    %164 = arith.maximumf %162, %163 : vector<8x32xf32>
    %165 = arith.maximumf %157, %164 : vector<8x32xf32>
    %c3_129 = arith.constant 3 : index
    %c4_130 = arith.constant 4 : index
    %c0_131 = arith.constant 0 : index
    %c0_132 = arith.constant 0 : index
    %166 = vector.load %arg1[%c3_129, %c4_130, %c0_131, %c0_132] : memref<4x16x8x144xf32, #tpu.memory_space<vmem>>, vector<1x1x8x144xf32>
    %167 = vector.shape_cast %166 : vector<1x1x8x144xf32> to vector<8x144xf32>
    %cst_133 = arith.constant dense<0.000000e+00> : vector<8x32xf32>
    %168 = tpu.matmul %167, %0, %cst_133 {dimension_numbers = #tpu.dot_dimension_numbers<[1], [0], [0], [1], [0, 0, 1, 1], [], []>} : vector<8x144xf32>, vector<144x32xf32>, vector<8x32xf32> -> vector<8x32xf32>
    %169 = vector.broadcast %1 : vector<1x32xf32> to vector<8x32xf32>
    %170 = arith.addf %168, %169 : vector<8x32xf32>
    %cst_134 = arith.constant 0.000000e+00 : f32
    %171 = vector.broadcast %cst_134 : f32 to vector<8x32xf32>
    %172 = arith.maximumf %170, %171 : vector<8x32xf32>
    %173 = arith.maximumf %165, %172 : vector<8x32xf32>
    %c4_135 = arith.constant 4 : index
    %c0_136 = arith.constant 0 : index
    %c0_137 = arith.constant 0 : index
    %174 = vector.load %arg4[%c4_135, %c0_136, %c0_137] : memref<16x32x128xf32, #tpu.memory_space<vmem>>, vector<1x32x128xf32>
    %175 = vector.shape_cast %174 : vector<1x32x128xf32> to vector<32x128xf32>
    %cst_138 = arith.constant dense<0.000000e+00> : vector<8x128xf32>
    %176 = tpu.matmul %173, %175, %cst_138 {dimension_numbers = #tpu.dot_dimension_numbers<[1], [0], [0], [1], [0, 0, 1, 1], [], []>} : vector<8x32xf32>, vector<32x128xf32>, vector<8x128xf32> -> vector<8x128xf32>
    %177 = arith.addf %142, %176 : vector<8x128xf32>
    %c0_139 = arith.constant 0 : index
    %c5 = arith.constant 5 : index
    %c0_140 = arith.constant 0 : index
    %c0_141 = arith.constant 0 : index
    %178 = vector.load %arg1[%c0_139, %c5, %c0_140, %c0_141] : memref<4x16x8x144xf32, #tpu.memory_space<vmem>>, vector<1x1x8x144xf32>
    %179 = vector.shape_cast %178 : vector<1x1x8x144xf32> to vector<8x144xf32>
    %cst_142 = arith.constant dense<0.000000e+00> : vector<8x32xf32>
    %180 = tpu.matmul %179, %0, %cst_142 {dimension_numbers = #tpu.dot_dimension_numbers<[1], [0], [0], [1], [0, 0, 1, 1], [], []>} : vector<8x144xf32>, vector<144x32xf32>, vector<8x32xf32> -> vector<8x32xf32>
    %181 = vector.broadcast %1 : vector<1x32xf32> to vector<8x32xf32>
    %182 = arith.addf %180, %181 : vector<8x32xf32>
    %cst_143 = arith.constant 0.000000e+00 : f32
    %183 = vector.broadcast %cst_143 : f32 to vector<8x32xf32>
    %184 = arith.maximumf %182, %183 : vector<8x32xf32>
    %c1_144 = arith.constant 1 : index
    %c5_145 = arith.constant 5 : index
    %c0_146 = arith.constant 0 : index
    %c0_147 = arith.constant 0 : index
    %185 = vector.load %arg1[%c1_144, %c5_145, %c0_146, %c0_147] : memref<4x16x8x144xf32, #tpu.memory_space<vmem>>, vector<1x1x8x144xf32>
    %186 = vector.shape_cast %185 : vector<1x1x8x144xf32> to vector<8x144xf32>
    %cst_148 = arith.constant dense<0.000000e+00> : vector<8x32xf32>
    %187 = tpu.matmul %186, %0, %cst_148 {dimension_numbers = #tpu.dot_dimension_numbers<[1], [0], [0], [1], [0, 0, 1, 1], [], []>} : vector<8x144xf32>, vector<144x32xf32>, vector<8x32xf32> -> vector<8x32xf32>
    %188 = vector.broadcast %1 : vector<1x32xf32> to vector<8x32xf32>
    %189 = arith.addf %187, %188 : vector<8x32xf32>
    %cst_149 = arith.constant 0.000000e+00 : f32
    %190 = vector.broadcast %cst_149 : f32 to vector<8x32xf32>
    %191 = arith.maximumf %189, %190 : vector<8x32xf32>
    %192 = arith.maximumf %184, %191 : vector<8x32xf32>
    %c2_150 = arith.constant 2 : index
    %c5_151 = arith.constant 5 : index
    %c0_152 = arith.constant 0 : index
    %c0_153 = arith.constant 0 : index
    %193 = vector.load %arg1[%c2_150, %c5_151, %c0_152, %c0_153] : memref<4x16x8x144xf32, #tpu.memory_space<vmem>>, vector<1x1x8x144xf32>
    %194 = vector.shape_cast %193 : vector<1x1x8x144xf32> to vector<8x144xf32>
    %cst_154 = arith.constant dense<0.000000e+00> : vector<8x32xf32>
    %195 = tpu.matmul %194, %0, %cst_154 {dimension_numbers = #tpu.dot_dimension_numbers<[1], [0], [0], [1], [0, 0, 1, 1], [], []>} : vector<8x144xf32>, vector<144x32xf32>, vector<8x32xf32> -> vector<8x32xf32>
    %196 = vector.broadcast %1 : vector<1x32xf32> to vector<8x32xf32>
    %197 = arith.addf %195, %196 : vector<8x32xf32>
    %cst_155 = arith.constant 0.000000e+00 : f32
    %198 = vector.broadcast %cst_155 : f32 to vector<8x32xf32>
    %199 = arith.maximumf %197, %198 : vector<8x32xf32>
    %200 = arith.maximumf %192, %199 : vector<8x32xf32>
    %c3_156 = arith.constant 3 : index
    %c5_157 = arith.constant 5 : index
    %c0_158 = arith.constant 0 : index
    %c0_159 = arith.constant 0 : index
    %201 = vector.load %arg1[%c3_156, %c5_157, %c0_158, %c0_159] : memref<4x16x8x144xf32, #tpu.memory_space<vmem>>, vector<1x1x8x144xf32>
    %202 = vector.shape_cast %201 : vector<1x1x8x144xf32> to vector<8x144xf32>
    %cst_160 = arith.constant dense<0.000000e+00> : vector<8x32xf32>
    %203 = tpu.matmul %202, %0, %cst_160 {dimension_numbers = #tpu.dot_dimension_numbers<[1], [0], [0], [1], [0, 0, 1, 1], [], []>} : vector<8x144xf32>, vector<144x32xf32>, vector<8x32xf32> -> vector<8x32xf32>
    %204 = vector.broadcast %1 : vector<1x32xf32> to vector<8x32xf32>
    %205 = arith.addf %203, %204 : vector<8x32xf32>
    %cst_161 = arith.constant 0.000000e+00 : f32
    %206 = vector.broadcast %cst_161 : f32 to vector<8x32xf32>
    %207 = arith.maximumf %205, %206 : vector<8x32xf32>
    %208 = arith.maximumf %200, %207 : vector<8x32xf32>
    %c5_162 = arith.constant 5 : index
    %c0_163 = arith.constant 0 : index
    %c0_164 = arith.constant 0 : index
    %209 = vector.load %arg4[%c5_162, %c0_163, %c0_164] : memref<16x32x128xf32, #tpu.memory_space<vmem>>, vector<1x32x128xf32>
    %210 = vector.shape_cast %209 : vector<1x32x128xf32> to vector<32x128xf32>
    %cst_165 = arith.constant dense<0.000000e+00> : vector<8x128xf32>
    %211 = tpu.matmul %208, %210, %cst_165 {dimension_numbers = #tpu.dot_dimension_numbers<[1], [0], [0], [1], [0, 0, 1, 1], [], []>} : vector<8x32xf32>, vector<32x128xf32>, vector<8x128xf32> -> vector<8x128xf32>
    %212 = arith.addf %177, %211 : vector<8x128xf32>
    %c0_166 = arith.constant 0 : index
    %c6 = arith.constant 6 : index
    %c0_167 = arith.constant 0 : index
    %c0_168 = arith.constant 0 : index
    %213 = vector.load %arg1[%c0_166, %c6, %c0_167, %c0_168] : memref<4x16x8x144xf32, #tpu.memory_space<vmem>>, vector<1x1x8x144xf32>
    %214 = vector.shape_cast %213 : vector<1x1x8x144xf32> to vector<8x144xf32>
    %cst_169 = arith.constant dense<0.000000e+00> : vector<8x32xf32>
    %215 = tpu.matmul %214, %0, %cst_169 {dimension_numbers = #tpu.dot_dimension_numbers<[1], [0], [0], [1], [0, 0, 1, 1], [], []>} : vector<8x144xf32>, vector<144x32xf32>, vector<8x32xf32> -> vector<8x32xf32>
    %216 = vector.broadcast %1 : vector<1x32xf32> to vector<8x32xf32>
    %217 = arith.addf %215, %216 : vector<8x32xf32>
    %cst_170 = arith.constant 0.000000e+00 : f32
    %218 = vector.broadcast %cst_170 : f32 to vector<8x32xf32>
    %219 = arith.maximumf %217, %218 : vector<8x32xf32>
    %c1_171 = arith.constant 1 : index
    %c6_172 = arith.constant 6 : index
    %c0_173 = arith.constant 0 : index
    %c0_174 = arith.constant 0 : index
    %220 = vector.load %arg1[%c1_171, %c6_172, %c0_173, %c0_174] : memref<4x16x8x144xf32, #tpu.memory_space<vmem>>, vector<1x1x8x144xf32>
    %221 = vector.shape_cast %220 : vector<1x1x8x144xf32> to vector<8x144xf32>
    %cst_175 = arith.constant dense<0.000000e+00> : vector<8x32xf32>
    %222 = tpu.matmul %221, %0, %cst_175 {dimension_numbers = #tpu.dot_dimension_numbers<[1], [0], [0], [1], [0, 0, 1, 1], [], []>} : vector<8x144xf32>, vector<144x32xf32>, vector<8x32xf32> -> vector<8x32xf32>
    %223 = vector.broadcast %1 : vector<1x32xf32> to vector<8x32xf32>
    %224 = arith.addf %222, %223 : vector<8x32xf32>
    %cst_176 = arith.constant 0.000000e+00 : f32
    %225 = vector.broadcast %cst_176 : f32 to vector<8x32xf32>
    %226 = arith.maximumf %224, %225 : vector<8x32xf32>
    %227 = arith.maximumf %219, %226 : vector<8x32xf32>
    %c2_177 = arith.constant 2 : index
    %c6_178 = arith.constant 6 : index
    %c0_179 = arith.constant 0 : index
    %c0_180 = arith.constant 0 : index
    %228 = vector.load %arg1[%c2_177, %c6_178, %c0_179, %c0_180] : memref<4x16x8x144xf32, #tpu.memory_space<vmem>>, vector<1x1x8x144xf32>
    %229 = vector.shape_cast %228 : vector<1x1x8x144xf32> to vector<8x144xf32>
    %cst_181 = arith.constant dense<0.000000e+00> : vector<8x32xf32>
    %230 = tpu.matmul %229, %0, %cst_181 {dimension_numbers = #tpu.dot_dimension_numbers<[1], [0], [0], [1], [0, 0, 1, 1], [], []>} : vector<8x144xf32>, vector<144x32xf32>, vector<8x32xf32> -> vector<8x32xf32>
    %231 = vector.broadcast %1 : vector<1x32xf32> to vector<8x32xf32>
    %232 = arith.addf %230, %231 : vector<8x32xf32>
    %cst_182 = arith.constant 0.000000e+00 : f32
    %233 = vector.broadcast %cst_182 : f32 to vector<8x32xf32>
    %234 = arith.maximumf %232, %233 : vector<8x32xf32>
    %235 = arith.maximumf %227, %234 : vector<8x32xf32>
    %c3_183 = arith.constant 3 : index
    %c6_184 = arith.constant 6 : index
    %c0_185 = arith.constant 0 : index
    %c0_186 = arith.constant 0 : index
    %236 = vector.load %arg1[%c3_183, %c6_184, %c0_185, %c0_186] : memref<4x16x8x144xf32, #tpu.memory_space<vmem>>, vector<1x1x8x144xf32>
    %237 = vector.shape_cast %236 : vector<1x1x8x144xf32> to vector<8x144xf32>
    %cst_187 = arith.constant dense<0.000000e+00> : vector<8x32xf32>
    %238 = tpu.matmul %237, %0, %cst_187 {dimension_numbers = #tpu.dot_dimension_numbers<[1], [0], [0], [1], [0, 0, 1, 1], [], []>} : vector<8x144xf32>, vector<144x32xf32>, vector<8x32xf32> -> vector<8x32xf32>
    %239 = vector.broadcast %1 : vector<1x32xf32> to vector<8x32xf32>
    %240 = arith.addf %238, %239 : vector<8x32xf32>
    %cst_188 = arith.constant 0.000000e+00 : f32
    %241 = vector.broadcast %cst_188 : f32 to vector<8x32xf32>
    %242 = arith.maximumf %240, %241 : vector<8x32xf32>
    %243 = arith.maximumf %235, %242 : vector<8x32xf32>
    %c6_189 = arith.constant 6 : index
    %c0_190 = arith.constant 0 : index
    %c0_191 = arith.constant 0 : index
    %244 = vector.load %arg4[%c6_189, %c0_190, %c0_191] : memref<16x32x128xf32, #tpu.memory_space<vmem>>, vector<1x32x128xf32>
    %245 = vector.shape_cast %244 : vector<1x32x128xf32> to vector<32x128xf32>
    %cst_192 = arith.constant dense<0.000000e+00> : vector<8x128xf32>
    %246 = tpu.matmul %243, %245, %cst_192 {dimension_numbers = #tpu.dot_dimension_numbers<[1], [0], [0], [1], [0, 0, 1, 1], [], []>} : vector<8x32xf32>, vector<32x128xf32>, vector<8x128xf32> -> vector<8x128xf32>
    %247 = arith.addf %212, %246 : vector<8x128xf32>
    %c0_193 = arith.constant 0 : index
    %c7 = arith.constant 7 : index
    %c0_194 = arith.constant 0 : index
    %c0_195 = arith.constant 0 : index
    %248 = vector.load %arg1[%c0_193, %c7, %c0_194, %c0_195] : memref<4x16x8x144xf32, #tpu.memory_space<vmem>>, vector<1x1x8x144xf32>
    %249 = vector.shape_cast %248 : vector<1x1x8x144xf32> to vector<8x144xf32>
    %cst_196 = arith.constant dense<0.000000e+00> : vector<8x32xf32>
    %250 = tpu.matmul %249, %0, %cst_196 {dimension_numbers = #tpu.dot_dimension_numbers<[1], [0], [0], [1], [0, 0, 1, 1], [], []>} : vector<8x144xf32>, vector<144x32xf32>, vector<8x32xf32> -> vector<8x32xf32>
    %251 = vector.broadcast %1 : vector<1x32xf32> to vector<8x32xf32>
    %252 = arith.addf %250, %251 : vector<8x32xf32>
    %cst_197 = arith.constant 0.000000e+00 : f32
    %253 = vector.broadcast %cst_197 : f32 to vector<8x32xf32>
    %254 = arith.maximumf %252, %253 : vector<8x32xf32>
    %c1_198 = arith.constant 1 : index
    %c7_199 = arith.constant 7 : index
    %c0_200 = arith.constant 0 : index
    %c0_201 = arith.constant 0 : index
    %255 = vector.load %arg1[%c1_198, %c7_199, %c0_200, %c0_201] : memref<4x16x8x144xf32, #tpu.memory_space<vmem>>, vector<1x1x8x144xf32>
    %256 = vector.shape_cast %255 : vector<1x1x8x144xf32> to vector<8x144xf32>
    %cst_202 = arith.constant dense<0.000000e+00> : vector<8x32xf32>
    %257 = tpu.matmul %256, %0, %cst_202 {dimension_numbers = #tpu.dot_dimension_numbers<[1], [0], [0], [1], [0, 0, 1, 1], [], []>} : vector<8x144xf32>, vector<144x32xf32>, vector<8x32xf32> -> vector<8x32xf32>
    %258 = vector.broadcast %1 : vector<1x32xf32> to vector<8x32xf32>
    %259 = arith.addf %257, %258 : vector<8x32xf32>
    %cst_203 = arith.constant 0.000000e+00 : f32
    %260 = vector.broadcast %cst_203 : f32 to vector<8x32xf32>
    %261 = arith.maximumf %259, %260 : vector<8x32xf32>
    %262 = arith.maximumf %254, %261 : vector<8x32xf32>
    %c2_204 = arith.constant 2 : index
    %c7_205 = arith.constant 7 : index
    %c0_206 = arith.constant 0 : index
    %c0_207 = arith.constant 0 : index
    %263 = vector.load %arg1[%c2_204, %c7_205, %c0_206, %c0_207] : memref<4x16x8x144xf32, #tpu.memory_space<vmem>>, vector<1x1x8x144xf32>
    %264 = vector.shape_cast %263 : vector<1x1x8x144xf32> to vector<8x144xf32>
    %cst_208 = arith.constant dense<0.000000e+00> : vector<8x32xf32>
    %265 = tpu.matmul %264, %0, %cst_208 {dimension_numbers = #tpu.dot_dimension_numbers<[1], [0], [0], [1], [0, 0, 1, 1], [], []>} : vector<8x144xf32>, vector<144x32xf32>, vector<8x32xf32> -> vector<8x32xf32>
    %266 = vector.broadcast %1 : vector<1x32xf32> to vector<8x32xf32>
    %267 = arith.addf %265, %266 : vector<8x32xf32>
    %cst_209 = arith.constant 0.000000e+00 : f32
    %268 = vector.broadcast %cst_209 : f32 to vector<8x32xf32>
    %269 = arith.maximumf %267, %268 : vector<8x32xf32>
    %270 = arith.maximumf %262, %269 : vector<8x32xf32>
    %c3_210 = arith.constant 3 : index
    %c7_211 = arith.constant 7 : index
    %c0_212 = arith.constant 0 : index
    %c0_213 = arith.constant 0 : index
    %271 = vector.load %arg1[%c3_210, %c7_211, %c0_212, %c0_213] : memref<4x16x8x144xf32, #tpu.memory_space<vmem>>, vector<1x1x8x144xf32>
    %272 = vector.shape_cast %271 : vector<1x1x8x144xf32> to vector<8x144xf32>
    %cst_214 = arith.constant dense<0.000000e+00> : vector<8x32xf32>
    %273 = tpu.matmul %272, %0, %cst_214 {dimension_numbers = #tpu.dot_dimension_numbers<[1], [0], [0], [1], [0, 0, 1, 1], [], []>} : vector<8x144xf32>, vector<144x32xf32>, vector<8x32xf32> -> vector<8x32xf32>
    %274 = vector.broadcast %1 : vector<1x32xf32> to vector<8x32xf32>
    %275 = arith.addf %273, %274 : vector<8x32xf32>
    %cst_215 = arith.constant 0.000000e+00 : f32
    %276 = vector.broadcast %cst_215 : f32 to vector<8x32xf32>
    %277 = arith.maximumf %275, %276 : vector<8x32xf32>
    %278 = arith.maximumf %270, %277 : vector<8x32xf32>
    %c7_216 = arith.constant 7 : index
    %c0_217 = arith.constant 0 : index
    %c0_218 = arith.constant 0 : index
    %279 = vector.load %arg4[%c7_216, %c0_217, %c0_218] : memref<16x32x128xf32, #tpu.memory_space<vmem>>, vector<1x32x128xf32>
    %280 = vector.shape_cast %279 : vector<1x32x128xf32> to vector<32x128xf32>
    %cst_219 = arith.constant dense<0.000000e+00> : vector<8x128xf32>
    %281 = tpu.matmul %278, %280, %cst_219 {dimension_numbers = #tpu.dot_dimension_numbers<[1], [0], [0], [1], [0, 0, 1, 1], [], []>} : vector<8x32xf32>, vector<32x128xf32>, vector<8x128xf32> -> vector<8x128xf32>
    %282 = arith.addf %247, %281 : vector<8x128xf32>
    %c0_220 = arith.constant 0 : index
    %c8 = arith.constant 8 : index
    %c0_221 = arith.constant 0 : index
    %c0_222 = arith.constant 0 : index
    %283 = vector.load %arg1[%c0_220, %c8, %c0_221, %c0_222] : memref<4x16x8x144xf32, #tpu.memory_space<vmem>>, vector<1x1x8x144xf32>
    %284 = vector.shape_cast %283 : vector<1x1x8x144xf32> to vector<8x144xf32>
    %cst_223 = arith.constant dense<0.000000e+00> : vector<8x32xf32>
    %285 = tpu.matmul %284, %0, %cst_223 {dimension_numbers = #tpu.dot_dimension_numbers<[1], [0], [0], [1], [0, 0, 1, 1], [], []>} : vector<8x144xf32>, vector<144x32xf32>, vector<8x32xf32> -> vector<8x32xf32>
    %286 = vector.broadcast %1 : vector<1x32xf32> to vector<8x32xf32>
    %287 = arith.addf %285, %286 : vector<8x32xf32>
    %cst_224 = arith.constant 0.000000e+00 : f32
    %288 = vector.broadcast %cst_224 : f32 to vector<8x32xf32>
    %289 = arith.maximumf %287, %288 : vector<8x32xf32>
    %c1_225 = arith.constant 1 : index
    %c8_226 = arith.constant 8 : index
    %c0_227 = arith.constant 0 : index
    %c0_228 = arith.constant 0 : index
    %290 = vector.load %arg1[%c1_225, %c8_226, %c0_227, %c0_228] : memref<4x16x8x144xf32, #tpu.memory_space<vmem>>, vector<1x1x8x144xf32>
    %291 = vector.shape_cast %290 : vector<1x1x8x144xf32> to vector<8x144xf32>
    %cst_229 = arith.constant dense<0.000000e+00> : vector<8x32xf32>
    %292 = tpu.matmul %291, %0, %cst_229 {dimension_numbers = #tpu.dot_dimension_numbers<[1], [0], [0], [1], [0, 0, 1, 1], [], []>} : vector<8x144xf32>, vector<144x32xf32>, vector<8x32xf32> -> vector<8x32xf32>
    %293 = vector.broadcast %1 : vector<1x32xf32> to vector<8x32xf32>
    %294 = arith.addf %292, %293 : vector<8x32xf32>
    %cst_230 = arith.constant 0.000000e+00 : f32
    %295 = vector.broadcast %cst_230 : f32 to vector<8x32xf32>
    %296 = arith.maximumf %294, %295 : vector<8x32xf32>
    %297 = arith.maximumf %289, %296 : vector<8x32xf32>
    %c2_231 = arith.constant 2 : index
    %c8_232 = arith.constant 8 : index
    %c0_233 = arith.constant 0 : index
    %c0_234 = arith.constant 0 : index
    %298 = vector.load %arg1[%c2_231, %c8_232, %c0_233, %c0_234] : memref<4x16x8x144xf32, #tpu.memory_space<vmem>>, vector<1x1x8x144xf32>
    %299 = vector.shape_cast %298 : vector<1x1x8x144xf32> to vector<8x144xf32>
    %cst_235 = arith.constant dense<0.000000e+00> : vector<8x32xf32>
    %300 = tpu.matmul %299, %0, %cst_235 {dimension_numbers = #tpu.dot_dimension_numbers<[1], [0], [0], [1], [0, 0, 1, 1], [], []>} : vector<8x144xf32>, vector<144x32xf32>, vector<8x32xf32> -> vector<8x32xf32>
    %301 = vector.broadcast %1 : vector<1x32xf32> to vector<8x32xf32>
    %302 = arith.addf %300, %301 : vector<8x32xf32>
    %cst_236 = arith.constant 0.000000e+00 : f32
    %303 = vector.broadcast %cst_236 : f32 to vector<8x32xf32>
    %304 = arith.maximumf %302, %303 : vector<8x32xf32>
    %305 = arith.maximumf %297, %304 : vector<8x32xf32>
    %c3_237 = arith.constant 3 : index
    %c8_238 = arith.constant 8 : index
    %c0_239 = arith.constant 0 : index
    %c0_240 = arith.constant 0 : index
    %306 = vector.load %arg1[%c3_237, %c8_238, %c0_239, %c0_240] : memref<4x16x8x144xf32, #tpu.memory_space<vmem>>, vector<1x1x8x144xf32>
    %307 = vector.shape_cast %306 : vector<1x1x8x144xf32> to vector<8x144xf32>
    %cst_241 = arith.constant dense<0.000000e+00> : vector<8x32xf32>
    %308 = tpu.matmul %307, %0, %cst_241 {dimension_numbers = #tpu.dot_dimension_numbers<[1], [0], [0], [1], [0, 0, 1, 1], [], []>} : vector<8x144xf32>, vector<144x32xf32>, vector<8x32xf32> -> vector<8x32xf32>
    %309 = vector.broadcast %1 : vector<1x32xf32> to vector<8x32xf32>
    %310 = arith.addf %308, %309 : vector<8x32xf32>
    %cst_242 = arith.constant 0.000000e+00 : f32
    %311 = vector.broadcast %cst_242 : f32 to vector<8x32xf32>
    %312 = arith.maximumf %310, %311 : vector<8x32xf32>
    %313 = arith.maximumf %305, %312 : vector<8x32xf32>
    %c8_243 = arith.constant 8 : index
    %c0_244 = arith.constant 0 : index
    %c0_245 = arith.constant 0 : index
    %314 = vector.load %arg4[%c8_243, %c0_244, %c0_245] : memref<16x32x128xf32, #tpu.memory_space<vmem>>, vector<1x32x128xf32>
    %315 = vector.shape_cast %314 : vector<1x32x128xf32> to vector<32x128xf32>
    %cst_246 = arith.constant dense<0.000000e+00> : vector<8x128xf32>
    %316 = tpu.matmul %313, %315, %cst_246 {dimension_numbers = #tpu.dot_dimension_numbers<[1], [0], [0], [1], [0, 0, 1, 1], [], []>} : vector<8x32xf32>, vector<32x128xf32>, vector<8x128xf32> -> vector<8x128xf32>
    %317 = arith.addf %282, %316 : vector<8x128xf32>
    %c0_247 = arith.constant 0 : index
    %c9 = arith.constant 9 : index
    %c0_248 = arith.constant 0 : index
    %c0_249 = arith.constant 0 : index
    %318 = vector.load %arg1[%c0_247, %c9, %c0_248, %c0_249] : memref<4x16x8x144xf32, #tpu.memory_space<vmem>>, vector<1x1x8x144xf32>
    %319 = vector.shape_cast %318 : vector<1x1x8x144xf32> to vector<8x144xf32>
    %cst_250 = arith.constant dense<0.000000e+00> : vector<8x32xf32>
    %320 = tpu.matmul %319, %0, %cst_250 {dimension_numbers = #tpu.dot_dimension_numbers<[1], [0], [0], [1], [0, 0, 1, 1], [], []>} : vector<8x144xf32>, vector<144x32xf32>, vector<8x32xf32> -> vector<8x32xf32>
    %321 = vector.broadcast %1 : vector<1x32xf32> to vector<8x32xf32>
    %322 = arith.addf %320, %321 : vector<8x32xf32>
    %cst_251 = arith.constant 0.000000e+00 : f32
    %323 = vector.broadcast %cst_251 : f32 to vector<8x32xf32>
    %324 = arith.maximumf %322, %323 : vector<8x32xf32>
    %c1_252 = arith.constant 1 : index
    %c9_253 = arith.constant 9 : index
    %c0_254 = arith.constant 0 : index
    %c0_255 = arith.constant 0 : index
    %325 = vector.load %arg1[%c1_252, %c9_253, %c0_254, %c0_255] : memref<4x16x8x144xf32, #tpu.memory_space<vmem>>, vector<1x1x8x144xf32>
    %326 = vector.shape_cast %325 : vector<1x1x8x144xf32> to vector<8x144xf32>
    %cst_256 = arith.constant dense<0.000000e+00> : vector<8x32xf32>
    %327 = tpu.matmul %326, %0, %cst_256 {dimension_numbers = #tpu.dot_dimension_numbers<[1], [0], [0], [1], [0, 0, 1, 1], [], []>} : vector<8x144xf32>, vector<144x32xf32>, vector<8x32xf32> -> vector<8x32xf32>
    %328 = vector.broadcast %1 : vector<1x32xf32> to vector<8x32xf32>
    %329 = arith.addf %327, %328 : vector<8x32xf32>
    %cst_257 = arith.constant 0.000000e+00 : f32
    %330 = vector.broadcast %cst_257 : f32 to vector<8x32xf32>
    %331 = arith.maximumf %329, %330 : vector<8x32xf32>
    %332 = arith.maximumf %324, %331 : vector<8x32xf32>
    %c2_258 = arith.constant 2 : index
    %c9_259 = arith.constant 9 : index
    %c0_260 = arith.constant 0 : index
    %c0_261 = arith.constant 0 : index
    %333 = vector.load %arg1[%c2_258, %c9_259, %c0_260, %c0_261] : memref<4x16x8x144xf32, #tpu.memory_space<vmem>>, vector<1x1x8x144xf32>
    %334 = vector.shape_cast %333 : vector<1x1x8x144xf32> to vector<8x144xf32>
    %cst_262 = arith.constant dense<0.000000e+00> : vector<8x32xf32>
    %335 = tpu.matmul %334, %0, %cst_262 {dimension_numbers = #tpu.dot_dimension_numbers<[1], [0], [0], [1], [0, 0, 1, 1], [], []>} : vector<8x144xf32>, vector<144x32xf32>, vector<8x32xf32> -> vector<8x32xf32>
    %336 = vector.broadcast %1 : vector<1x32xf32> to vector<8x32xf32>
    %337 = arith.addf %335, %336 : vector<8x32xf32>
    %cst_263 = arith.constant 0.000000e+00 : f32
    %338 = vector.broadcast %cst_263 : f32 to vector<8x32xf32>
    %339 = arith.maximumf %337, %338 : vector<8x32xf32>
    %340 = arith.maximumf %332, %339 : vector<8x32xf32>
    %c3_264 = arith.constant 3 : index
    %c9_265 = arith.constant 9 : index
    %c0_266 = arith.constant 0 : index
    %c0_267 = arith.constant 0 : index
    %341 = vector.load %arg1[%c3_264, %c9_265, %c0_266, %c0_267] : memref<4x16x8x144xf32, #tpu.memory_space<vmem>>, vector<1x1x8x144xf32>
    %342 = vector.shape_cast %341 : vector<1x1x8x144xf32> to vector<8x144xf32>
    %cst_268 = arith.constant dense<0.000000e+00> : vector<8x32xf32>
    %343 = tpu.matmul %342, %0, %cst_268 {dimension_numbers = #tpu.dot_dimension_numbers<[1], [0], [0], [1], [0, 0, 1, 1], [], []>} : vector<8x144xf32>, vector<144x32xf32>, vector<8x32xf32> -> vector<8x32xf32>
    %344 = vector.broadcast %1 : vector<1x32xf32> to vector<8x32xf32>
    %345 = arith.addf %343, %344 : vector<8x32xf32>
    %cst_269 = arith.constant 0.000000e+00 : f32
    %346 = vector.broadcast %cst_269 : f32 to vector<8x32xf32>
    %347 = arith.maximumf %345, %346 : vector<8x32xf32>
    %348 = arith.maximumf %340, %347 : vector<8x32xf32>
    %c9_270 = arith.constant 9 : index
    %c0_271 = arith.constant 0 : index
    %c0_272 = arith.constant 0 : index
    %349 = vector.load %arg4[%c9_270, %c0_271, %c0_272] : memref<16x32x128xf32, #tpu.memory_space<vmem>>, vector<1x32x128xf32>
    %350 = vector.shape_cast %349 : vector<1x32x128xf32> to vector<32x128xf32>
    %cst_273 = arith.constant dense<0.000000e+00> : vector<8x128xf32>
    %351 = tpu.matmul %348, %350, %cst_273 {dimension_numbers = #tpu.dot_dimension_numbers<[1], [0], [0], [1], [0, 0, 1, 1], [], []>} : vector<8x32xf32>, vector<32x128xf32>, vector<8x128xf32> -> vector<8x128xf32>
    %352 = arith.addf %317, %351 : vector<8x128xf32>
    %c0_274 = arith.constant 0 : index
    %c10 = arith.constant 10 : index
    %c0_275 = arith.constant 0 : index
    %c0_276 = arith.constant 0 : index
    %353 = vector.load %arg1[%c0_274, %c10, %c0_275, %c0_276] : memref<4x16x8x144xf32, #tpu.memory_space<vmem>>, vector<1x1x8x144xf32>
    %354 = vector.shape_cast %353 : vector<1x1x8x144xf32> to vector<8x144xf32>
    %cst_277 = arith.constant dense<0.000000e+00> : vector<8x32xf32>
    %355 = tpu.matmul %354, %0, %cst_277 {dimension_numbers = #tpu.dot_dimension_numbers<[1], [0], [0], [1], [0, 0, 1, 1], [], []>} : vector<8x144xf32>, vector<144x32xf32>, vector<8x32xf32> -> vector<8x32xf32>
    %356 = vector.broadcast %1 : vector<1x32xf32> to vector<8x32xf32>
    %357 = arith.addf %355, %356 : vector<8x32xf32>
    %cst_278 = arith.constant 0.000000e+00 : f32
    %358 = vector.broadcast %cst_278 : f32 to vector<8x32xf32>
    %359 = arith.maximumf %357, %358 : vector<8x32xf32>
    %c1_279 = arith.constant 1 : index
    %c10_280 = arith.constant 10 : index
    %c0_281 = arith.constant 0 : index
    %c0_282 = arith.constant 0 : index
    %360 = vector.load %arg1[%c1_279, %c10_280, %c0_281, %c0_282] : memref<4x16x8x144xf32, #tpu.memory_space<vmem>>, vector<1x1x8x144xf32>
    %361 = vector.shape_cast %360 : vector<1x1x8x144xf32> to vector<8x144xf32>
    %cst_283 = arith.constant dense<0.000000e+00> : vector<8x32xf32>
    %362 = tpu.matmul %361, %0, %cst_283 {dimension_numbers = #tpu.dot_dimension_numbers<[1], [0], [0], [1], [0, 0, 1, 1], [], []>} : vector<8x144xf32>, vector<144x32xf32>, vector<8x32xf32> -> vector<8x32xf32>
    %363 = vector.broadcast %1 : vector<1x32xf32> to vector<8x32xf32>
    %364 = arith.addf %362, %363 : vector<8x32xf32>
    %cst_284 = arith.constant 0.000000e+00 : f32
    %365 = vector.broadcast %cst_284 : f32 to vector<8x32xf32>
    %366 = arith.maximumf %364, %365 : vector<8x32xf32>
    %367 = arith.maximumf %359, %366 : vector<8x32xf32>
    %c2_285 = arith.constant 2 : index
    %c10_286 = arith.constant 10 : index
    %c0_287 = arith.constant 0 : index
    %c0_288 = arith.constant 0 : index
    %368 = vector.load %arg1[%c2_285, %c10_286, %c0_287, %c0_288] : memref<4x16x8x144xf32, #tpu.memory_space<vmem>>, vector<1x1x8x144xf32>
    %369 = vector.shape_cast %368 : vector<1x1x8x144xf32> to vector<8x144xf32>
    %cst_289 = arith.constant dense<0.000000e+00> : vector<8x32xf32>
    %370 = tpu.matmul %369, %0, %cst_289 {dimension_numbers = #tpu.dot_dimension_numbers<[1], [0], [0], [1], [0, 0, 1, 1], [], []>} : vector<8x144xf32>, vector<144x32xf32>, vector<8x32xf32> -> vector<8x32xf32>
    %371 = vector.broadcast %1 : vector<1x32xf32> to vector<8x32xf32>
    %372 = arith.addf %370, %371 : vector<8x32xf32>
    %cst_290 = arith.constant 0.000000e+00 : f32
    %373 = vector.broadcast %cst_290 : f32 to vector<8x32xf32>
    %374 = arith.maximumf %372, %373 : vector<8x32xf32>
    %375 = arith.maximumf %367, %374 : vector<8x32xf32>
    %c3_291 = arith.constant 3 : index
    %c10_292 = arith.constant 10 : index
    %c0_293 = arith.constant 0 : index
    %c0_294 = arith.constant 0 : index
    %376 = vector.load %arg1[%c3_291, %c10_292, %c0_293, %c0_294] : memref<4x16x8x144xf32, #tpu.memory_space<vmem>>, vector<1x1x8x144xf32>
    %377 = vector.shape_cast %376 : vector<1x1x8x144xf32> to vector<8x144xf32>
    %cst_295 = arith.constant dense<0.000000e+00> : vector<8x32xf32>
    %378 = tpu.matmul %377, %0, %cst_295 {dimension_numbers = #tpu.dot_dimension_numbers<[1], [0], [0], [1], [0, 0, 1, 1], [], []>} : vector<8x144xf32>, vector<144x32xf32>, vector<8x32xf32> -> vector<8x32xf32>
    %379 = vector.broadcast %1 : vector<1x32xf32> to vector<8x32xf32>
    %380 = arith.addf %378, %379 : vector<8x32xf32>
    %cst_296 = arith.constant 0.000000e+00 : f32
    %381 = vector.broadcast %cst_296 : f32 to vector<8x32xf32>
    %382 = arith.maximumf %380, %381 : vector<8x32xf32>
    %383 = arith.maximumf %375, %382 : vector<8x32xf32>
    %c10_297 = arith.constant 10 : index
    %c0_298 = arith.constant 0 : index
    %c0_299 = arith.constant 0 : index
    %384 = vector.load %arg4[%c10_297, %c0_298, %c0_299] : memref<16x32x128xf32, #tpu.memory_space<vmem>>, vector<1x32x128xf32>
    %385 = vector.shape_cast %384 : vector<1x32x128xf32> to vector<32x128xf32>
    %cst_300 = arith.constant dense<0.000000e+00> : vector<8x128xf32>
    %386 = tpu.matmul %383, %385, %cst_300 {dimension_numbers = #tpu.dot_dimension_numbers<[1], [0], [0], [1], [0, 0, 1, 1], [], []>} : vector<8x32xf32>, vector<32x128xf32>, vector<8x128xf32> -> vector<8x128xf32>
    %387 = arith.addf %352, %386 : vector<8x128xf32>
    %c0_301 = arith.constant 0 : index
    %c11 = arith.constant 11 : index
    %c0_302 = arith.constant 0 : index
    %c0_303 = arith.constant 0 : index
    %388 = vector.load %arg1[%c0_301, %c11, %c0_302, %c0_303] : memref<4x16x8x144xf32, #tpu.memory_space<vmem>>, vector<1x1x8x144xf32>
    %389 = vector.shape_cast %388 : vector<1x1x8x144xf32> to vector<8x144xf32>
    %cst_304 = arith.constant dense<0.000000e+00> : vector<8x32xf32>
    %390 = tpu.matmul %389, %0, %cst_304 {dimension_numbers = #tpu.dot_dimension_numbers<[1], [0], [0], [1], [0, 0, 1, 1], [], []>} : vector<8x144xf32>, vector<144x32xf32>, vector<8x32xf32> -> vector<8x32xf32>
    %391 = vector.broadcast %1 : vector<1x32xf32> to vector<8x32xf32>
    %392 = arith.addf %390, %391 : vector<8x32xf32>
    %cst_305 = arith.constant 0.000000e+00 : f32
    %393 = vector.broadcast %cst_305 : f32 to vector<8x32xf32>
    %394 = arith.maximumf %392, %393 : vector<8x32xf32>
    %c1_306 = arith.constant 1 : index
    %c11_307 = arith.constant 11 : index
    %c0_308 = arith.constant 0 : index
    %c0_309 = arith.constant 0 : index
    %395 = vector.load %arg1[%c1_306, %c11_307, %c0_308, %c0_309] : memref<4x16x8x144xf32, #tpu.memory_space<vmem>>, vector<1x1x8x144xf32>
    %396 = vector.shape_cast %395 : vector<1x1x8x144xf32> to vector<8x144xf32>
    %cst_310 = arith.constant dense<0.000000e+00> : vector<8x32xf32>
    %397 = tpu.matmul %396, %0, %cst_310 {dimension_numbers = #tpu.dot_dimension_numbers<[1], [0], [0], [1], [0, 0, 1, 1], [], []>} : vector<8x144xf32>, vector<144x32xf32>, vector<8x32xf32> -> vector<8x32xf32>
    %398 = vector.broadcast %1 : vector<1x32xf32> to vector<8x32xf32>
    %399 = arith.addf %397, %398 : vector<8x32xf32>
    %cst_311 = arith.constant 0.000000e+00 : f32
    %400 = vector.broadcast %cst_311 : f32 to vector<8x32xf32>
    %401 = arith.maximumf %399, %400 : vector<8x32xf32>
    %402 = arith.maximumf %394, %401 : vector<8x32xf32>
    %c2_312 = arith.constant 2 : index
    %c11_313 = arith.constant 11 : index
    %c0_314 = arith.constant 0 : index
    %c0_315 = arith.constant 0 : index
    %403 = vector.load %arg1[%c2_312, %c11_313, %c0_314, %c0_315] : memref<4x16x8x144xf32, #tpu.memory_space<vmem>>, vector<1x1x8x144xf32>
    %404 = vector.shape_cast %403 : vector<1x1x8x144xf32> to vector<8x144xf32>
    %cst_316 = arith.constant dense<0.000000e+00> : vector<8x32xf32>
    %405 = tpu.matmul %404, %0, %cst_316 {dimension_numbers = #tpu.dot_dimension_numbers<[1], [0], [0], [1], [0, 0, 1, 1], [], []>} : vector<8x144xf32>, vector<144x32xf32>, vector<8x32xf32> -> vector<8x32xf32>
    %406 = vector.broadcast %1 : vector<1x32xf32> to vector<8x32xf32>
    %407 = arith.addf %405, %406 : vector<8x32xf32>
    %cst_317 = arith.constant 0.000000e+00 : f32
    %408 = vector.broadcast %cst_317 : f32 to vector<8x32xf32>
    %409 = arith.maximumf %407, %408 : vector<8x32xf32>
    %410 = arith.maximumf %402, %409 : vector<8x32xf32>
    %c3_318 = arith.constant 3 : index
    %c11_319 = arith.constant 11 : index
    %c0_320 = arith.constant 0 : index
    %c0_321 = arith.constant 0 : index
    %411 = vector.load %arg1[%c3_318, %c11_319, %c0_320, %c0_321] : memref<4x16x8x144xf32, #tpu.memory_space<vmem>>, vector<1x1x8x144xf32>
    %412 = vector.shape_cast %411 : vector<1x1x8x144xf32> to vector<8x144xf32>
    %cst_322 = arith.constant dense<0.000000e+00> : vector<8x32xf32>
    %413 = tpu.matmul %412, %0, %cst_322 {dimension_numbers = #tpu.dot_dimension_numbers<[1], [0], [0], [1], [0, 0, 1, 1], [], []>} : vector<8x144xf32>, vector<144x32xf32>, vector<8x32xf32> -> vector<8x32xf32>
    %414 = vector.broadcast %1 : vector<1x32xf32> to vector<8x32xf32>
    %415 = arith.addf %413, %414 : vector<8x32xf32>
    %cst_323 = arith.constant 0.000000e+00 : f32
    %416 = vector.broadcast %cst_323 : f32 to vector<8x32xf32>
    %417 = arith.maximumf %415, %416 : vector<8x32xf32>
    %418 = arith.maximumf %410, %417 : vector<8x32xf32>
    %c11_324 = arith.constant 11 : index
    %c0_325 = arith.constant 0 : index
    %c0_326 = arith.constant 0 : index
    %419 = vector.load %arg4[%c11_324, %c0_325, %c0_326] : memref<16x32x128xf32, #tpu.memory_space<vmem>>, vector<1x32x128xf32>
    %420 = vector.shape_cast %419 : vector<1x32x128xf32> to vector<32x128xf32>
    %cst_327 = arith.constant dense<0.000000e+00> : vector<8x128xf32>
    %421 = tpu.matmul %418, %420, %cst_327 {dimension_numbers = #tpu.dot_dimension_numbers<[1], [0], [0], [1], [0, 0, 1, 1], [], []>} : vector<8x32xf32>, vector<32x128xf32>, vector<8x128xf32> -> vector<8x128xf32>
    %422 = arith.addf %387, %421 : vector<8x128xf32>
    %c0_328 = arith.constant 0 : index
    %c12 = arith.constant 12 : index
    %c0_329 = arith.constant 0 : index
    %c0_330 = arith.constant 0 : index
    %423 = vector.load %arg1[%c0_328, %c12, %c0_329, %c0_330] : memref<4x16x8x144xf32, #tpu.memory_space<vmem>>, vector<1x1x8x144xf32>
    %424 = vector.shape_cast %423 : vector<1x1x8x144xf32> to vector<8x144xf32>
    %cst_331 = arith.constant dense<0.000000e+00> : vector<8x32xf32>
    %425 = tpu.matmul %424, %0, %cst_331 {dimension_numbers = #tpu.dot_dimension_numbers<[1], [0], [0], [1], [0, 0, 1, 1], [], []>} : vector<8x144xf32>, vector<144x32xf32>, vector<8x32xf32> -> vector<8x32xf32>
    %426 = vector.broadcast %1 : vector<1x32xf32> to vector<8x32xf32>
    %427 = arith.addf %425, %426 : vector<8x32xf32>
    %cst_332 = arith.constant 0.000000e+00 : f32
    %428 = vector.broadcast %cst_332 : f32 to vector<8x32xf32>
    %429 = arith.maximumf %427, %428 : vector<8x32xf32>
    %c1_333 = arith.constant 1 : index
    %c12_334 = arith.constant 12 : index
    %c0_335 = arith.constant 0 : index
    %c0_336 = arith.constant 0 : index
    %430 = vector.load %arg1[%c1_333, %c12_334, %c0_335, %c0_336] : memref<4x16x8x144xf32, #tpu.memory_space<vmem>>, vector<1x1x8x144xf32>
    %431 = vector.shape_cast %430 : vector<1x1x8x144xf32> to vector<8x144xf32>
    %cst_337 = arith.constant dense<0.000000e+00> : vector<8x32xf32>
    %432 = tpu.matmul %431, %0, %cst_337 {dimension_numbers = #tpu.dot_dimension_numbers<[1], [0], [0], [1], [0, 0, 1, 1], [], []>} : vector<8x144xf32>, vector<144x32xf32>, vector<8x32xf32> -> vector<8x32xf32>
    %433 = vector.broadcast %1 : vector<1x32xf32> to vector<8x32xf32>
    %434 = arith.addf %432, %433 : vector<8x32xf32>
    %cst_338 = arith.constant 0.000000e+00 : f32
    %435 = vector.broadcast %cst_338 : f32 to vector<8x32xf32>
    %436 = arith.maximumf %434, %435 : vector<8x32xf32>
    %437 = arith.maximumf %429, %436 : vector<8x32xf32>
    %c2_339 = arith.constant 2 : index
    %c12_340 = arith.constant 12 : index
    %c0_341 = arith.constant 0 : index
    %c0_342 = arith.constant 0 : index
    %438 = vector.load %arg1[%c2_339, %c12_340, %c0_341, %c0_342] : memref<4x16x8x144xf32, #tpu.memory_space<vmem>>, vector<1x1x8x144xf32>
    %439 = vector.shape_cast %438 : vector<1x1x8x144xf32> to vector<8x144xf32>
    %cst_343 = arith.constant dense<0.000000e+00> : vector<8x32xf32>
    %440 = tpu.matmul %439, %0, %cst_343 {dimension_numbers = #tpu.dot_dimension_numbers<[1], [0], [0], [1], [0, 0, 1, 1], [], []>} : vector<8x144xf32>, vector<144x32xf32>, vector<8x32xf32> -> vector<8x32xf32>
    %441 = vector.broadcast %1 : vector<1x32xf32> to vector<8x32xf32>
    %442 = arith.addf %440, %441 : vector<8x32xf32>
    %cst_344 = arith.constant 0.000000e+00 : f32
    %443 = vector.broadcast %cst_344 : f32 to vector<8x32xf32>
    %444 = arith.maximumf %442, %443 : vector<8x32xf32>
    %445 = arith.maximumf %437, %444 : vector<8x32xf32>
    %c3_345 = arith.constant 3 : index
    %c12_346 = arith.constant 12 : index
    %c0_347 = arith.constant 0 : index
    %c0_348 = arith.constant 0 : index
    %446 = vector.load %arg1[%c3_345, %c12_346, %c0_347, %c0_348] : memref<4x16x8x144xf32, #tpu.memory_space<vmem>>, vector<1x1x8x144xf32>
    %447 = vector.shape_cast %446 : vector<1x1x8x144xf32> to vector<8x144xf32>
    %cst_349 = arith.constant dense<0.000000e+00> : vector<8x32xf32>
    %448 = tpu.matmul %447, %0, %cst_349 {dimension_numbers = #tpu.dot_dimension_numbers<[1], [0], [0], [1], [0, 0, 1, 1], [], []>} : vector<8x144xf32>, vector<144x32xf32>, vector<8x32xf32> -> vector<8x32xf32>
    %449 = vector.broadcast %1 : vector<1x32xf32> to vector<8x32xf32>
    %450 = arith.addf %448, %449 : vector<8x32xf32>
    %cst_350 = arith.constant 0.000000e+00 : f32
    %451 = vector.broadcast %cst_350 : f32 to vector<8x32xf32>
    %452 = arith.maximumf %450, %451 : vector<8x32xf32>
    %453 = arith.maximumf %445, %452 : vector<8x32xf32>
    %c12_351 = arith.constant 12 : index
    %c0_352 = arith.constant 0 : index
    %c0_353 = arith.constant 0 : index
    %454 = vector.load %arg4[%c12_351, %c0_352, %c0_353] : memref<16x32x128xf32, #tpu.memory_space<vmem>>, vector<1x32x128xf32>
    %455 = vector.shape_cast %454 : vector<1x32x128xf32> to vector<32x128xf32>
    %cst_354 = arith.constant dense<0.000000e+00> : vector<8x128xf32>
    %456 = tpu.matmul %453, %455, %cst_354 {dimension_numbers = #tpu.dot_dimension_numbers<[1], [0], [0], [1], [0, 0, 1, 1], [], []>} : vector<8x32xf32>, vector<32x128xf32>, vector<8x128xf32> -> vector<8x128xf32>
    %457 = arith.addf %422, %456 : vector<8x128xf32>
    %c0_355 = arith.constant 0 : index
    %c13 = arith.constant 13 : index
    %c0_356 = arith.constant 0 : index
    %c0_357 = arith.constant 0 : index
    %458 = vector.load %arg1[%c0_355, %c13, %c0_356, %c0_357] : memref<4x16x8x144xf32, #tpu.memory_space<vmem>>, vector<1x1x8x144xf32>
    %459 = vector.shape_cast %458 : vector<1x1x8x144xf32> to vector<8x144xf32>
    %cst_358 = arith.constant dense<0.000000e+00> : vector<8x32xf32>
    %460 = tpu.matmul %459, %0, %cst_358 {dimension_numbers = #tpu.dot_dimension_numbers<[1], [0], [0], [1], [0, 0, 1, 1], [], []>} : vector<8x144xf32>, vector<144x32xf32>, vector<8x32xf32> -> vector<8x32xf32>
    %461 = vector.broadcast %1 : vector<1x32xf32> to vector<8x32xf32>
    %462 = arith.addf %460, %461 : vector<8x32xf32>
    %cst_359 = arith.constant 0.000000e+00 : f32
    %463 = vector.broadcast %cst_359 : f32 to vector<8x32xf32>
    %464 = arith.maximumf %462, %463 : vector<8x32xf32>
    %c1_360 = arith.constant 1 : index
    %c13_361 = arith.constant 13 : index
    %c0_362 = arith.constant 0 : index
    %c0_363 = arith.constant 0 : index
    %465 = vector.load %arg1[%c1_360, %c13_361, %c0_362, %c0_363] : memref<4x16x8x144xf32, #tpu.memory_space<vmem>>, vector<1x1x8x144xf32>
    %466 = vector.shape_cast %465 : vector<1x1x8x144xf32> to vector<8x144xf32>
    %cst_364 = arith.constant dense<0.000000e+00> : vector<8x32xf32>
    %467 = tpu.matmul %466, %0, %cst_364 {dimension_numbers = #tpu.dot_dimension_numbers<[1], [0], [0], [1], [0, 0, 1, 1], [], []>} : vector<8x144xf32>, vector<144x32xf32>, vector<8x32xf32> -> vector<8x32xf32>
    %468 = vector.broadcast %1 : vector<1x32xf32> to vector<8x32xf32>
    %469 = arith.addf %467, %468 : vector<8x32xf32>
    %cst_365 = arith.constant 0.000000e+00 : f32
    %470 = vector.broadcast %cst_365 : f32 to vector<8x32xf32>
    %471 = arith.maximumf %469, %470 : vector<8x32xf32>
    %472 = arith.maximumf %464, %471 : vector<8x32xf32>
    %c2_366 = arith.constant 2 : index
    %c13_367 = arith.constant 13 : index
    %c0_368 = arith.constant 0 : index
    %c0_369 = arith.constant 0 : index
    %473 = vector.load %arg1[%c2_366, %c13_367, %c0_368, %c0_369] : memref<4x16x8x144xf32, #tpu.memory_space<vmem>>, vector<1x1x8x144xf32>
    %474 = vector.shape_cast %473 : vector<1x1x8x144xf32> to vector<8x144xf32>
    %cst_370 = arith.constant dense<0.000000e+00> : vector<8x32xf32>
    %475 = tpu.matmul %474, %0, %cst_370 {dimension_numbers = #tpu.dot_dimension_numbers<[1], [0], [0], [1], [0, 0, 1, 1], [], []>} : vector<8x144xf32>, vector<144x32xf32>, vector<8x32xf32> -> vector<8x32xf32>
    %476 = vector.broadcast %1 : vector<1x32xf32> to vector<8x32xf32>
    %477 = arith.addf %475, %476 : vector<8x32xf32>
    %cst_371 = arith.constant 0.000000e+00 : f32
    %478 = vector.broadcast %cst_371 : f32 to vector<8x32xf32>
    %479 = arith.maximumf %477, %478 : vector<8x32xf32>
    %480 = arith.maximumf %472, %479 : vector<8x32xf32>
    %c3_372 = arith.constant 3 : index
    %c13_373 = arith.constant 13 : index
    %c0_374 = arith.constant 0 : index
    %c0_375 = arith.constant 0 : index
    %481 = vector.load %arg1[%c3_372, %c13_373, %c0_374, %c0_375] : memref<4x16x8x144xf32, #tpu.memory_space<vmem>>, vector<1x1x8x144xf32>
    %482 = vector.shape_cast %481 : vector<1x1x8x144xf32> to vector<8x144xf32>
    %cst_376 = arith.constant dense<0.000000e+00> : vector<8x32xf32>
    %483 = tpu.matmul %482, %0, %cst_376 {dimension_numbers = #tpu.dot_dimension_numbers<[1], [0], [0], [1], [0, 0, 1, 1], [], []>} : vector<8x144xf32>, vector<144x32xf32>, vector<8x32xf32> -> vector<8x32xf32>
    %484 = vector.broadcast %1 : vector<1x32xf32> to vector<8x32xf32>
    %485 = arith.addf %483, %484 : vector<8x32xf32>
    %cst_377 = arith.constant 0.000000e+00 : f32
    %486 = vector.broadcast %cst_377 : f32 to vector<8x32xf32>
    %487 = arith.maximumf %485, %486 : vector<8x32xf32>
    %488 = arith.maximumf %480, %487 : vector<8x32xf32>
    %c13_378 = arith.constant 13 : index
    %c0_379 = arith.constant 0 : index
    %c0_380 = arith.constant 0 : index
    %489 = vector.load %arg4[%c13_378, %c0_379, %c0_380] : memref<16x32x128xf32, #tpu.memory_space<vmem>>, vector<1x32x128xf32>
    %490 = vector.shape_cast %489 : vector<1x32x128xf32> to vector<32x128xf32>
    %cst_381 = arith.constant dense<0.000000e+00> : vector<8x128xf32>
    %491 = tpu.matmul %488, %490, %cst_381 {dimension_numbers = #tpu.dot_dimension_numbers<[1], [0], [0], [1], [0, 0, 1, 1], [], []>} : vector<8x32xf32>, vector<32x128xf32>, vector<8x128xf32> -> vector<8x128xf32>
    %492 = arith.addf %457, %491 : vector<8x128xf32>
    %c0_382 = arith.constant 0 : index
    %c14 = arith.constant 14 : index
    %c0_383 = arith.constant 0 : index
    %c0_384 = arith.constant 0 : index
    %493 = vector.load %arg1[%c0_382, %c14, %c0_383, %c0_384] : memref<4x16x8x144xf32, #tpu.memory_space<vmem>>, vector<1x1x8x144xf32>
    %494 = vector.shape_cast %493 : vector<1x1x8x144xf32> to vector<8x144xf32>
    %cst_385 = arith.constant dense<0.000000e+00> : vector<8x32xf32>
    %495 = tpu.matmul %494, %0, %cst_385 {dimension_numbers = #tpu.dot_dimension_numbers<[1], [0], [0], [1], [0, 0, 1, 1], [], []>} : vector<8x144xf32>, vector<144x32xf32>, vector<8x32xf32> -> vector<8x32xf32>
    %496 = vector.broadcast %1 : vector<1x32xf32> to vector<8x32xf32>
    %497 = arith.addf %495, %496 : vector<8x32xf32>
    %cst_386 = arith.constant 0.000000e+00 : f32
    %498 = vector.broadcast %cst_386 : f32 to vector<8x32xf32>
    %499 = arith.maximumf %497, %498 : vector<8x32xf32>
    %c1_387 = arith.constant 1 : index
    %c14_388 = arith.constant 14 : index
    %c0_389 = arith.constant 0 : index
    %c0_390 = arith.constant 0 : index
    %500 = vector.load %arg1[%c1_387, %c14_388, %c0_389, %c0_390] : memref<4x16x8x144xf32, #tpu.memory_space<vmem>>, vector<1x1x8x144xf32>
    %501 = vector.shape_cast %500 : vector<1x1x8x144xf32> to vector<8x144xf32>
    %cst_391 = arith.constant dense<0.000000e+00> : vector<8x32xf32>
    %502 = tpu.matmul %501, %0, %cst_391 {dimension_numbers = #tpu.dot_dimension_numbers<[1], [0], [0], [1], [0, 0, 1, 1], [], []>} : vector<8x144xf32>, vector<144x32xf32>, vector<8x32xf32> -> vector<8x32xf32>
    %503 = vector.broadcast %1 : vector<1x32xf32> to vector<8x32xf32>
    %504 = arith.addf %502, %503 : vector<8x32xf32>
    %cst_392 = arith.constant 0.000000e+00 : f32
    %505 = vector.broadcast %cst_392 : f32 to vector<8x32xf32>
    %506 = arith.maximumf %504, %505 : vector<8x32xf32>
    %507 = arith.maximumf %499, %506 : vector<8x32xf32>
    %c2_393 = arith.constant 2 : index
    %c14_394 = arith.constant 14 : index
    %c0_395 = arith.constant 0 : index
    %c0_396 = arith.constant 0 : index
    %508 = vector.load %arg1[%c2_393, %c14_394, %c0_395, %c0_396] : memref<4x16x8x144xf32, #tpu.memory_space<vmem>>, vector<1x1x8x144xf32>
    %509 = vector.shape_cast %508 : vector<1x1x8x144xf32> to vector<8x144xf32>
    %cst_397 = arith.constant dense<0.000000e+00> : vector<8x32xf32>
    %510 = tpu.matmul %509, %0, %cst_397 {dimension_numbers = #tpu.dot_dimension_numbers<[1], [0], [0], [1], [0, 0, 1, 1], [], []>} : vector<8x144xf32>, vector<144x32xf32>, vector<8x32xf32> -> vector<8x32xf32>
    %511 = vector.broadcast %1 : vector<1x32xf32> to vector<8x32xf32>
    %512 = arith.addf %510, %511 : vector<8x32xf32>
    %cst_398 = arith.constant 0.000000e+00 : f32
    %513 = vector.broadcast %cst_398 : f32 to vector<8x32xf32>
    %514 = arith.maximumf %512, %513 : vector<8x32xf32>
    %515 = arith.maximumf %507, %514 : vector<8x32xf32>
    %c3_399 = arith.constant 3 : index
    %c14_400 = arith.constant 14 : index
    %c0_401 = arith.constant 0 : index
    %c0_402 = arith.constant 0 : index
    %516 = vector.load %arg1[%c3_399, %c14_400, %c0_401, %c0_402] : memref<4x16x8x144xf32, #tpu.memory_space<vmem>>, vector<1x1x8x144xf32>
    %517 = vector.shape_cast %516 : vector<1x1x8x144xf32> to vector<8x144xf32>
    %cst_403 = arith.constant dense<0.000000e+00> : vector<8x32xf32>
    %518 = tpu.matmul %517, %0, %cst_403 {dimension_numbers = #tpu.dot_dimension_numbers<[1], [0], [0], [1], [0, 0, 1, 1], [], []>} : vector<8x144xf32>, vector<144x32xf32>, vector<8x32xf32> -> vector<8x32xf32>
    %519 = vector.broadcast %1 : vector<1x32xf32> to vector<8x32xf32>
    %520 = arith.addf %518, %519 : vector<8x32xf32>
    %cst_404 = arith.constant 0.000000e+00 : f32
    %521 = vector.broadcast %cst_404 : f32 to vector<8x32xf32>
    %522 = arith.maximumf %520, %521 : vector<8x32xf32>
    %523 = arith.maximumf %515, %522 : vector<8x32xf32>
    %c14_405 = arith.constant 14 : index
    %c0_406 = arith.constant 0 : index
    %c0_407 = arith.constant 0 : index
    %524 = vector.load %arg4[%c14_405, %c0_406, %c0_407] : memref<16x32x128xf32, #tpu.memory_space<vmem>>, vector<1x32x128xf32>
    %525 = vector.shape_cast %524 : vector<1x32x128xf32> to vector<32x128xf32>
    %cst_408 = arith.constant dense<0.000000e+00> : vector<8x128xf32>
    %526 = tpu.matmul %523, %525, %cst_408 {dimension_numbers = #tpu.dot_dimension_numbers<[1], [0], [0], [1], [0, 0, 1, 1], [], []>} : vector<8x32xf32>, vector<32x128xf32>, vector<8x128xf32> -> vector<8x128xf32>
    %527 = arith.addf %492, %526 : vector<8x128xf32>
    %c0_409 = arith.constant 0 : index
    %c15 = arith.constant 15 : index
    %c0_410 = arith.constant 0 : index
    %c0_411 = arith.constant 0 : index
    %528 = vector.load %arg1[%c0_409, %c15, %c0_410, %c0_411] : memref<4x16x8x144xf32, #tpu.memory_space<vmem>>, vector<1x1x8x144xf32>
    %529 = vector.shape_cast %528 : vector<1x1x8x144xf32> to vector<8x144xf32>
    %cst_412 = arith.constant dense<0.000000e+00> : vector<8x32xf32>
    %530 = tpu.matmul %529, %0, %cst_412 {dimension_numbers = #tpu.dot_dimension_numbers<[1], [0], [0], [1], [0, 0, 1, 1], [], []>} : vector<8x144xf32>, vector<144x32xf32>, vector<8x32xf32> -> vector<8x32xf32>
    %531 = vector.broadcast %1 : vector<1x32xf32> to vector<8x32xf32>
    %532 = arith.addf %530, %531 : vector<8x32xf32>
    %cst_413 = arith.constant 0.000000e+00 : f32
    %533 = vector.broadcast %cst_413 : f32 to vector<8x32xf32>
    %534 = arith.maximumf %532, %533 : vector<8x32xf32>
    %c1_414 = arith.constant 1 : index
    %c15_415 = arith.constant 15 : index
    %c0_416 = arith.constant 0 : index
    %c0_417 = arith.constant 0 : index
    %535 = vector.load %arg1[%c1_414, %c15_415, %c0_416, %c0_417] : memref<4x16x8x144xf32, #tpu.memory_space<vmem>>, vector<1x1x8x144xf32>
    %536 = vector.shape_cast %535 : vector<1x1x8x144xf32> to vector<8x144xf32>
    %cst_418 = arith.constant dense<0.000000e+00> : vector<8x32xf32>
    %537 = tpu.matmul %536, %0, %cst_418 {dimension_numbers = #tpu.dot_dimension_numbers<[1], [0], [0], [1], [0, 0, 1, 1], [], []>} : vector<8x144xf32>, vector<144x32xf32>, vector<8x32xf32> -> vector<8x32xf32>
    %538 = vector.broadcast %1 : vector<1x32xf32> to vector<8x32xf32>
    %539 = arith.addf %537, %538 : vector<8x32xf32>
    %cst_419 = arith.constant 0.000000e+00 : f32
    %540 = vector.broadcast %cst_419 : f32 to vector<8x32xf32>
    %541 = arith.maximumf %539, %540 : vector<8x32xf32>
    %542 = arith.maximumf %534, %541 : vector<8x32xf32>
    %c2_420 = arith.constant 2 : index
    %c15_421 = arith.constant 15 : index
    %c0_422 = arith.constant 0 : index
    %c0_423 = arith.constant 0 : index
    %543 = vector.load %arg1[%c2_420, %c15_421, %c0_422, %c0_423] : memref<4x16x8x144xf32, #tpu.memory_space<vmem>>, vector<1x1x8x144xf32>
    %544 = vector.shape_cast %543 : vector<1x1x8x144xf32> to vector<8x144xf32>
    %cst_424 = arith.constant dense<0.000000e+00> : vector<8x32xf32>
    %545 = tpu.matmul %544, %0, %cst_424 {dimension_numbers = #tpu.dot_dimension_numbers<[1], [0], [0], [1], [0, 0, 1, 1], [], []>} : vector<8x144xf32>, vector<144x32xf32>, vector<8x32xf32> -> vector<8x32xf32>
    %546 = vector.broadcast %1 : vector<1x32xf32> to vector<8x32xf32>
    %547 = arith.addf %545, %546 : vector<8x32xf32>
    %cst_425 = arith.constant 0.000000e+00 : f32
    %548 = vector.broadcast %cst_425 : f32 to vector<8x32xf32>
    %549 = arith.maximumf %547, %548 : vector<8x32xf32>
    %550 = arith.maximumf %542, %549 : vector<8x32xf32>
    %c3_426 = arith.constant 3 : index
    %c15_427 = arith.constant 15 : index
    %c0_428 = arith.constant 0 : index
    %c0_429 = arith.constant 0 : index
    %551 = vector.load %arg1[%c3_426, %c15_427, %c0_428, %c0_429] : memref<4x16x8x144xf32, #tpu.memory_space<vmem>>, vector<1x1x8x144xf32>
    %552 = vector.shape_cast %551 : vector<1x1x8x144xf32> to vector<8x144xf32>
    %cst_430 = arith.constant dense<0.000000e+00> : vector<8x32xf32>
    %553 = tpu.matmul %552, %0, %cst_430 {dimension_numbers = #tpu.dot_dimension_numbers<[1], [0], [0], [1], [0, 0, 1, 1], [], []>} : vector<8x144xf32>, vector<144x32xf32>, vector<8x32xf32> -> vector<8x32xf32>
    %554 = vector.broadcast %1 : vector<1x32xf32> to vector<8x32xf32>
    %555 = arith.addf %553, %554 : vector<8x32xf32>
    %cst_431 = arith.constant 0.000000e+00 : f32
    %556 = vector.broadcast %cst_431 : f32 to vector<8x32xf32>
    %557 = arith.maximumf %555, %556 : vector<8x32xf32>
    %558 = arith.maximumf %550, %557 : vector<8x32xf32>
    %c15_432 = arith.constant 15 : index
    %c0_433 = arith.constant 0 : index
    %c0_434 = arith.constant 0 : index
    %559 = vector.load %arg4[%c15_432, %c0_433, %c0_434] : memref<16x32x128xf32, #tpu.memory_space<vmem>>, vector<1x32x128xf32>
    %560 = vector.shape_cast %559 : vector<1x32x128xf32> to vector<32x128xf32>
    %cst_435 = arith.constant dense<0.000000e+00> : vector<8x128xf32>
    %561 = tpu.matmul %558, %560, %cst_435 {dimension_numbers = #tpu.dot_dimension_numbers<[1], [0], [0], [1], [0, 0, 1, 1], [], []>} : vector<8x32xf32>, vector<32x128xf32>, vector<8x128xf32> -> vector<8x128xf32>
    %562 = arith.addf %527, %561 : vector<8x128xf32>
    %c0_436 = arith.constant 0 : index
    %c0_437 = arith.constant 0 : index
    %563 = vector.load %arg5[%c0_436, %c0_437] : memref<1x128xf32, #tpu.memory_space<vmem>>, vector<1x128xf32>
    %564 = vector.broadcast %563 : vector<1x128xf32> to vector<8x128xf32>
    %565 = arith.addf %562, %564 : vector<8x128xf32>
    %cst_438 = arith.constant 0.000000e+00 : f32
    %566 = vector.broadcast %cst_438 : f32 to vector<8x128xf32>
    %567 = arith.maximumf %565, %566 : vector<8x128xf32>
    %c0_439 = arith.constant 0 : index
    %c0_440 = arith.constant 0 : index
    %568 = vector.load %arg6[%c0_439, %c0_440] : memref<8x128xf32, #tpu.memory_space<vmem>>, vector<8x128xf32>
    tpu.vector_store %arg6[%c0_439, %c0_440], %567 {strides = array<i32>} : memref<8x128xf32, #tpu.memory_space<vmem>>, vector<8x128xf32>,
    return
  }
  func.func @transform_0(%arg0: i32) -> (i32, i32, i32, i32) {
    %c0_i32 = arith.constant 0 : i32
    %c0_i32_0 = arith.constant 0 : i32
    %c0_i32_1 = arith.constant 0 : i32
    %c0_i32_2 = arith.constant 0 : i32
    return %c0_i32, %c0_i32_0, %arg0, %c0_i32_1 : i32, i32, i32, i32
  }
  func.func @transform_1(%arg0: i32) -> (i32, i32) {
    %c0_i32 = arith.constant 0 : i32
    %c0_i32_0 = arith.constant 0 : i32
    %c0_i32_1 = arith.constant 0 : i32
    return %c0_i32, %c0_i32_0 : i32, i32
  }
  func.func @transform_2(%arg0: i32) -> (i32, i32) {
    %c0_i32 = arith.constant 0 : i32
    %c0_i32_0 = arith.constant 0 : i32
    %c0_i32_1 = arith.constant 0 : i32
    return %c0_i32, %c0_i32_0 : i32, i32
  }
  func.func @transform_3(%arg0: i32) -> (i32, i32, i32) {
    %c0_i32 = arith.constant 0 : i32
    %c0_i32_0 = arith.constant 0 : i32
    %c0_i32_1 = arith.constant 0 : i32
    %c0_i32_2 = arith.constant 0 : i32
    return %c0_i32, %c0_i32_0, %c0_i32_1 : i32, i32, i32
  }
  func.func @transform_4(%arg0: i32) -> (i32, i32) {
    %c0_i32 = arith.constant 0 : i32
    %c0_i32_0 = arith.constant 0 : i32
    %c0_i32_1 = arith.constant 0 : i32
    return %c0_i32, %c0_i32_0 : i32, i32
  }
  func.func @transform_5(%arg0: i32) -> (i32, i32) {
    %c0_i32 = arith.constant 0 : i32
    %c0_i32_0 = arith.constant 0 : i32
    return %arg0, %c0_i32 : i32, i32
  }
}

</mosaic_0001>

<llo_original>
// kernel: gabor_backbone_forward.2
$region0: #{gabor_backbone_forward.2}
  #allocation0 [shape = 'u32[]', space=smem, size = 0x4, offset = 0x4, fixed_abs, tag = 'smem constant byte address 0x4 - core index']
  #allocation1 [shape = 'u32[72,128]{1,0:T(1,128)}', space=vmem, size = 0x9000, scoped, tag = 'internal scratch']
  %s0 = inlined_call_operand.vmem [shape: f32[4,49,1024], index: 0, kind: input, shape index: {}]
  %s1 = inlined_call_operand.vmem [shape: f32[16,49], index: 1, kind: input, shape index: {}]
  %s2 = inlined_call_operand.vmem [shape: f32[16,1], index: 2, kind: input, shape index: {}]
  %s3 = inlined_call_operand.vmem [shape: f32[16,1024], index: 3, kind: output, shape index: {}]
  %s4 = sld [smem:[#allocation0]]
  $region22: #{gabor_backbone_forward.2} parent=0
    _
  %s6 = ssub.s32 1, %s4
  %s7 = scalar_select 0, %s6, %s4
  // Predicated region
  $region2: #{gabor_backbone_forward.2} parent=0 // pred_check
    _
  $region3: #{gabor_backbone_forward.2} parent=0 // pred_check_branch
    %9 = sbr.rel (0) target = $region5
  $region4: #{gabor_backbone_forward.2} parent=0 // pred_region
    _
  $region5: #{gabor_backbone_forward.2} parent=0 // pred_fallthru
    _
  // Predicated region
  $region6: #{gabor_backbone_forward.2} parent=0 // pred_check
    _
  $region7: #{gabor_backbone_forward.2} parent=0 // pred_check_branch
    %11 = sbr.rel (0) target = $region9
  $region8: #{gabor_backbone_forward.2} parent=0 // pred_region
    _
  $region9: #{gabor_backbone_forward.2} parent=0 // pred_fallthru
    _
  // Predicated region
  $region10: #{gabor_backbone_forward.2} parent=0 // pred_check
    _
  $region11: #{gabor_backbone_forward.2} parent=0 // pred_check_branch
    %13 = sbr.rel (0) target = $region13
  $region12: #{gabor_backbone_forward.2} parent=0 // pred_region
    _
  $region13: #{gabor_backbone_forward.2} parent=0 // pred_fallthru
    _
  %v14 = vld [vmem:[%s1] sm:$0xff]
  %v15 = vld [vmem:[%s1 + $0x8] sm:$0xff]
  %v16 = vld [vmem:[%s2] sm:$0xff]
  %v17 = vld [vmem:[%s2 + $0x8] sm:$0xff]
  %v18 = vld [vmem:[%s0] sm:$0xff]
  %v19 = vld [vmem:[%s0 + $0x8] sm:$0xff]
  %v20 = vld [vmem:[%s0 + $0x10] sm:$0xff]
  %v21 = vld [vmem:[%s0 + $0x18] sm:$0xff]
  %v22 = vld [vmem:[%s0 + $0x20] sm:$0xff]
  %v23 = vld [vmem:[%s0 + $0x28] sm:$0xff]
  %v24 = vld [vmem:[%s0 + $0x30] sm:$0xff]
  %v25 = vld [vmem:[%s0 + $0x38] sm:$0xff]
  %v26 = vld [vmem:[%s0 + $0x40] sm:$0xff]
  %v27 = vld [vmem:[%s0 + $0x48] sm:$0xff]
  %v28 = vld [vmem:[%s0 + $0x50] sm:$0xff]
  %v29 = vld [vmem:[%s0 + $0x58] sm:$0xff]
  %v30 = vld [vmem:[%s0 + $0x60] sm:$0xff]
  %v31 = vld [vmem:[%s0 + $0x68] sm:$0xff]
  %v32 = vld [vmem:[%s0 + $0x70] sm:$0xff]
  %v33 = vld [vmem:[%s0 + $0x78] sm:$0xff]
  %v34 = vld [vmem:[%s0 + $0x80] sm:$0xff]
  %v35 = vld [vmem:[%s0 + $0x88] sm:$0xff]
  %v36 = vld [vmem:[%s0 + $0x90] sm:$0xff]
  %v37 = vld [vmem:[%s0 + $0x98] sm:$0xff]
  %v38 = vld [vmem:[%s0 + $0xa0] sm:$0xff]
  %v39 = vld [vmem:[%s0 + $0xa8] sm:$0xff]
  %v40 = vld [vmem:[%s0 + $0xb0] sm:$0xff]
  %v41 = vld [vmem:[%s0 + $0xb8] sm:$0xff]
  %v42 = vld [vmem:[%s0 + $0xc0] sm:$0xff]
  %v43 = vld [vmem:[%s0 + $0xc8] sm:$0xff]
  %v44 = vld [vmem:[%s0 + $0xd0] sm:$0xff]
  %v45 = vld [vmem:[%s0 + $0xd8] sm:$0xff]
  %v46 = vld [vmem:[%s0 + $0xe0] sm:$0xff]
  %v47 = vld [vmem:[%s0 + $0xe8] sm:$0xff]
  %v48 = vld [vmem:[%s0 + $0xf0] sm:$0xff]
  %v49 = vld [vmem:[%s0 + $0xf8] sm:$0xff]
  %v50 = vld [vmem:[%s0 + $0x100] sm:$0xff]
  %v51 = vld [vmem:[%s0 + $0x108] sm:$0xff]
  %v52 = vld [vmem:[%s0 + $0x110] sm:$0xff]
  %v53 = vld [vmem:[%s0 + $0x118] sm:$0xff]
  %v54 = vld [vmem:[%s0 + $0x120] sm:$0xff]
  %v55 = vld [vmem:[%s0 + $0x128] sm:$0xff]
  %v56 = vld [vmem:[%s0 + $0x130] sm:$0xff]
  %v57 = vld [vmem:[%s0 + $0x138] sm:$0xff]
  %v58 = vld [vmem:[%s0 + $0x140] sm:$0xff]
  %v59 = vld [vmem:[%s0 + $0x148] sm:$0xff]
  %v60 = vld [vmem:[%s0 + $0x150] sm:$0xff]
  %v61 = vld [vmem:[%s0 + $0x158] sm:$0xff]
  %v62 = vld [vmem:[%s0 + $0x160] sm:$0xff]
  %v63 = vld [vmem:[%s0 + $0x168] sm:$0xff]
  %v64 = vld [vmem:[%s0 + $0x170] sm:$0xff]
  %v65 = vld [vmem:[%s0 + $0x178] sm:$0xff]
  %v66 = vld [vmem:[%s0 + $0x180] sm:$0x1]
  %v67 = vld [vmem:[%s0 + $0x188] sm:$0x1]
  %v68 = vld [vmem:[%s0 + $0x190] sm:$0x1]
  %v69 = vld [vmem:[%s0 + $0x198] sm:$0x1]
  %v70 = vld [vmem:[%s0 + $0x1a0] sm:$0x1]
  %v71 = vld [vmem:[%s0 + $0x1a8] sm:$0x1]
  %v72 = vld [vmem:[%s0 + $0x1b0] sm:$0x1]
  %v73 = vld [vmem:[%s0 + $0x1b8] sm:$0x1]
  %75 = vset.pattern.permute.xlu0 0
  %76 = vperm.xlu0 %75, %v16
  %v77 = vpop.permute.xlu0 %76
  %80 = vset.pattern.permute.xlu0 0
  %81 = vperm.xlu0 %80, %v17
  %v82 = vpop.permute.xlu0 %81
  %vm84 = vcmask 400384
  %v86 = vsel %vm84, %v14, 0
  %v89 = vsel %vm84, %v15, 0
  %vm91 = vcmask 1040384
  %v93 = vsel %vm91, %v66, 0
  %v96 = vsel %vm91, %v67, 0
  %v99 = vsel %vm91, %v68, 0
  %v102 = vsel %vm91, %v69, 0
  %v105 = vsel %vm91, %v70, 0
  %v108 = vsel %vm91, %v71, 0
  %v111 = vsel %vm91, %v72, 0
  %v114 = vsel %vm91, %v73, 0
  %116 = vmatpush.msra.mxu0 0.0
  %117 = vmatpush.msra.mxu0 0.0
  %118 = vmatpush.msra.mxu0 0.0
  %119 = vmatpush.msra.mxu0 0.0
  %120 = vmatpush.msra.mxu0 0.0
  %121 = vmatpush.msra.mxu0 0.0
  %122 = vmatpush.msra.mxu0 0.0
  %123 = vmatpush.msra.mxu0 0.0
  %124 = vmatpush.msra.mxu0 0.0
  %125 = vmatpush.msra.mxu0 %v93
  %126 = vmatpush.msra.mxu0 %v58
  %127 = vmatpush.msra.mxu0 %v50
  %128 = vmatpush.msra.mxu0 %v42
  %129 = vmatpush.msra.mxu0 %v34
  %130 = vmatpush.msra.mxu0 %v26
  %131 = vmatpush.msra.mxu0 %v18
  %132 = vmatmul.f32.gmra.mxu0 %v86
  %v133 = vpop.f32.mrf.mxu0
  %v134 = vadd.f32 %v77, %v133
  %135 = vmatmul.f32.gmra.mxu0 %v89
  %v136 = vpop.f32.mrf.mxu0
  %v137 = vadd.f32 %v82, %v136
  %138 = vdwg.mxu0
  %139 = vmatpush.msra.mxu0 0.0
  %140 = vmatpush.msra.mxu0 0.0
  %141 = vmatpush.msra.mxu0 0.0
  %142 = vmatpush.msra.mxu0 0.0
  %143 = vmatpush.msra.mxu0 0.0
  %144 = vmatpush.msra.mxu0 0.0
  %145 = vmatpush.msra.mxu0 0.0
  %146 = vmatpush.msra.mxu0 0.0
  %147 = vmatpush.msra.mxu0 0.0
  %148 = vmatpush.msra.mxu0 %v96
  %149 = vmatpush.msra.mxu0 %v59
  %150 = vmatpush.msra.mxu0 %v51
  %151 = vmatpush.msra.mxu0 %v43
  %152 = vmatpush.msra.mxu0 %v35
  %153 = vmatpush.msra.mxu0 %v27
  %154 = vmatpush.msra.mxu0 %v19
  %155 = vmatmul.f32.gmra.mxu0 %v86
  %v156 = vpop.f32.mrf.mxu0
  %v157 = vadd.f32 %v77, %v156
  %158 = vmatmul.f32.gmra.mxu0 %v89
  %v159 = vpop.f32.mrf.mxu0
  %v160 = vadd.f32 %v82, %v159
  %161 = vdwg.mxu0
  %162 = vmatpush.msra.mxu0 0.0
  %163 = vmatpush.msra.mxu0 0.0
  %164 = vmatpush.msra.mxu0 0.0
  %165 = vmatpush.msra.mxu0 0.0
  %166 = vmatpush.msra.mxu0 0.0
  %167 = vmatpush.msra.mxu0 0.0
  %168 = vmatpush.msra.mxu0 0.0
  %169 = vmatpush.msra.mxu0 0.0
  %170 = vmatpush.msra.mxu0 0.0
  %171 = vmatpush.msra.mxu0 %v99
  %172 = vmatpush.msra.mxu0 %v60
  %173 = vmatpush.msra.mxu0 %v52
  %174 = vmatpush.msra.mxu0 %v44
  %175 = vmatpush.msra.mxu0 %v36
  %176 = vmatpush.msra.mxu0 %v28
  %177 = vmatpush.msra.mxu0 %v20
  %178 = vmatmul.f32.gmra.mxu0 %v86
  %v179 = vpop.f32.mrf.mxu0
  %v180 = vadd.f32 %v77, %v179
  %181 = vmatmul.f32.gmra.mxu0 %v89
  %v182 = vpop.f32.mrf.mxu0
  %v183 = vadd.f32 %v82, %v182
  %184 = vdwg.mxu0
  %185 = vmatpush.msra.mxu0 0.0
  %186 = vmatpush.msra.mxu0 0.0
  %187 = vmatpush.msra.mxu0 0.0
  %188 = vmatpush.msra.mxu0 0.0
  %189 = vmatpush.msra.mxu0 0.0
  %190 = vmatpush.msra.mxu0 0.0
  %191 = vmatpush.msra.mxu0 0.0
  %192 = vmatpush.msra.mxu0 0.0
  %193 = vmatpush.msra.mxu0 0.0
  %194 = vmatpush.msra.mxu0 %v102
  %195 = vmatpush.msra.mxu0 %v61
  %196 = vmatpush.msra.mxu0 %v53
  %197 = vmatpush.msra.mxu0 %v45
  %198 = vmatpush.msra.mxu0 %v37
  %199 = vmatpush.msra.mxu0 %v29
  %200 = vmatpush.msra.mxu0 %v21
  %201 = vmatmul.f32.gmra.mxu0 %v86
  %v202 = vpop.f32.mrf.mxu0
  %v203 = vadd.f32 %v77, %v202
  %204 = vmatmul.f32.gmra.mxu0 %v89
  %v205 = vpop.f32.mrf.mxu0
  %v206 = vadd.f32 %v82, %v205
  %207 = vdwg.mxu0
  %208 = vmatpush.msra.mxu0 0.0
  %209 = vmatpush.msra.mxu0 0.0
  %210 = vmatpush.msra.mxu0 0.0
  %211 = vmatpush.msra.mxu0 0.0
  %212 = vmatpush.msra.mxu0 0.0
  %213 = vmatpush.msra.mxu0 0.0
  %214 = vmatpush.msra.mxu0 0.0
  %215 = vmatpush.msra.mxu0 0.0
  %216 = vmatpush.msra.mxu0 0.0
  %217 = vmatpush.msra.mxu0 %v105
  %218 = vmatpush.msra.mxu0 %v62
  %219 = vmatpush.msra.mxu0 %v54
  %220 = vmatpush.msra.mxu0 %v46
  %221 = vmatpush.msra.mxu0 %v38
  %222 = vmatpush.msra.mxu0 %v30
  %223 = vmatpush.msra.mxu0 %v22
  %224 = vmatmul.f32.gmra.mxu0 %v86
  %v225 = vpop.f32.mrf.mxu0
  %v226 = vadd.f32 %v77, %v225
  %227 = vmatmul.f32.gmra.mxu0 %v89
  %v228 = vpop.f32.mrf.mxu0
  %v229 = vadd.f32 %v82, %v228
  %230 = vdwg.mxu0
  %231 = vmatpush.msra.mxu0 0.0
  %232 = vmatpush.msra.mxu0 0.0
  %233 = vmatpush.msra.mxu0 0.0
  %234 = vmatpush.msra.mxu0 0.0
  %235 = vmatpush.msra.mxu0 0.0
  %236 = vmatpush.msra.mxu0 0.0
  %237 = vmatpush.msra.mxu0 0.0
  %238 = vmatpush.msra.mxu0 0.0
  %239 = vmatpush.msra.mxu0 0.0
  %240 = vmatpush.msra.mxu0 %v108
  %241 = vmatpush.msra.mxu0 %v63
  %242 = vmatpush.msra.mxu0 %v55
  %243 = vmatpush.msra.mxu0 %v47
  %244 = vmatpush.msra.mxu0 %v39
  %245 = vmatpush.msra.mxu0 %v31
  %246 = vmatpush.msra.mxu0 %v23
  %247 = vmatmul.f32.gmra.mxu0 %v86
  %v248 = vpop.f32.mrf.mxu0
  %v249 = vadd.f32 %v77, %v248
  %250 = vmatmul.f32.gmra.mxu0 %v89
  %v251 = vpop.f32.mrf.mxu0
  %v252 = vadd.f32 %v82, %v251
  %253 = vdwg.mxu0
  %254 = vmatpush.msra.mxu0 0.0
  %255 = vmatpush.msra.mxu0 0.0
  %256 = vmatpush.msra.mxu0 0.0
  %257 = vmatpush.msra.mxu0 0.0
  %258 = vmatpush.msra.mxu0 0.0
  %259 = vmatpush.msra.mxu0 0.0
  %260 = vmatpush.msra.mxu0 0.0
  %261 = vmatpush.msra.mxu0 0.0
  %262 = vmatpush.msra.mxu0 0.0
  %263 = vmatpush.msra.mxu0 %v111
  %264 = vmatpush.msra.mxu0 %v64
  %265 = vmatpush.msra.mxu0 %v56
  %266 = vmatpush.msra.mxu0 %v48
  %267 = vmatpush.msra.mxu0 %v40
  %268 = vmatpush.msra.mxu0 %v32
  %269 = vmatpush.msra.mxu0 %v24
  %270 = vmatmul.f32.gmra.mxu0 %v86
  %v271 = vpop.f32.mrf.mxu0
  %v272 = vadd.f32 %v77, %v271
  %273 = vmatmul.f32.gmra.mxu0 %v89
  %v274 = vpop.f32.mrf.mxu0
  %v275 = vadd.f32 %v82, %v274
  %276 = vdwg.mxu0
  %277 = vmatpush.msra.mxu0 0.0
  %278 = vmatpush.msra.mxu0 0.0
  %279 = vmatpush.msra.mxu0 0.0
  %280 = vmatpush.msra.mxu0 0.0
  %281 = vmatpush.msra.mxu0 0.0
  %282 = vmatpush.msra.mxu0 0.0
  %283 = vmatpush.msra.mxu0 0.0
  %284 = vmatpush.msra.mxu0 0.0
  %285 = vmatpush.msra.mxu0 0.0
  %286 = vmatpush.msra.mxu0 %v114
  %287 = vmatpush.msra.mxu0 %v65
  %288 = vmatpush.msra.mxu0 %v57
  %289 = vmatpush.msra.mxu0 %v49
  %290 = vmatpush.msra.mxu0 %v41
  %291 = vmatpush.msra.mxu0 %v33
  %292 = vmatpush.msra.mxu0 %v25
  %293 = vmatmul.f32.gmra.mxu0 %v86
  %v294 = vpop.f32.mrf.mxu0
  %v295 = vadd.f32 %v77, %v294
  %296 = vmatmul.f32.gmra.mxu0 %v89
  %v297 = vpop.f32.mrf.mxu0
  %v298 = vadd.f32 %v82, %v297
  %299 = vdwg.mxu0
  %v300 = vmax.f32 %v134, 0.0
  %v301 = vmax.f32 %v157, 0.0
  %v302 = vmax.f32 %v180, 0.0
  %v303 = vmax.f32 %v203, 0.0
  %v304 = vmax.f32 %v226, 0.0
  %v305 = vmax.f32 %v249, 0.0
  %v306 = vmax.f32 %v272, 0.0
  %v307 = vmax.f32 %v295, 0.0
  %v308 = vmax.f32 %v137, 0.0
  %v309 = vmax.f32 %v160, 0.0
  %v310 = vmax.f32 %v183, 0.0
  %v311 = vmax.f32 %v206, 0.0
  %v312 = vmax.f32 %v229, 0.0
  %v313 = vmax.f32 %v252, 0.0
  %v314 = vmax.f32 %v275, 0.0
  %v315 = vmax.f32 %v298, 0.0
  %s316 = scalar_lea.vmem %s0, 448
  %v317 = vld [vmem:[%s316] sm:$0xff]
  %v318 = vld [vmem:[%s316 + $0x8] sm:$0xff]
  %v319 = vld [vmem:[%s316 + $0x10] sm:$0xff]
  %v320 = vld [vmem:[%s316 + $0x18] sm:$0xff]
  %v321 = vld [vmem:[%s316 + $0x20] sm:$0xff]
  %v322 = vld [vmem:[%s316 + $0x28] sm:$0xff]
  %v323 = vld [vmem:[%s316 + $0x30] sm:$0xff]
  %v324 = vld [vmem:[%s316 + $0x38] sm:$0xff]
  %v325 = vld [vmem:[%s316 + $0x40] sm:$0xff]
  %v326 = vld [vmem:[%s316 + $0x48] sm:$0xff]
  %v327 = vld [vmem:[%s316 + $0x50] sm:$0xff]
  %v328 = vld [vmem:[%s316 + $0x58] sm:$0xff]
  %v329 = vld [vmem:[%s316 + $0x60] sm:$0xff]
  %v330 = vld [vmem:[%s316 + $0x68] sm:$0xff]
  %v331 = vld [vmem:[%s316 + $0x70] sm:$0xff]
  %v332 = vld [vmem:[%s316 + $0x78] sm:$0xff]
  %v333 = vld [vmem:[%s316 + $0x80] sm:$0xff]
  %v334 = vld [vmem:[%s316 + $0x88] sm:$0xff]
  %v335 = vld [vmem:[%s316 + $0x90] sm:$0xff]
  %v336 = vld [vmem:[%s316 + $0x98] sm:$0xff]
  %v337 = vld [vmem:[%s316 + $0xa0] sm:$0xff]
  %v338 = vld [vmem:[%s316 + $0xa8] sm:$0xff]
  %v339 = vld [vmem:[%s316 + $0xb0] sm:$0xff]
  %v340 = vld [vmem:[%s316 + $0xb8] sm:$0xff]
  %v341 = vld [vmem:[%s316 + $0xc0] sm:$0xff]
  %v342 = vld [vmem:[%s316 + $0xc8] sm:$0xff]
  %v343 = vld [vmem:[%s316 + $0xd0] sm:$0xff]
  %v344 = vld [vmem:[%s316 + $0xd8] sm:$0xff]
  %v345 = vld [vmem:[%s316 + $0xe0] sm:$0xff]
  %v346 = vld [vmem:[%s316 + $0xe8] sm:$0xff]
  %v347 = vld [vmem:[%s316 + $0xf0] sm:$0xff]
  %v348 = vld [vmem:[%s316 + $0xf8] sm:$0xff]
  %v349 = vld [vmem:[%s316 + $0x100] sm:$0xff]
  %v350 = vld [vmem:[%s316 + $0x108] sm:$0xff]
  %v351 = vld [vmem:[%s316 + $0x110] sm:$0xff]
  %v352 = vld [vmem:[%s316 + $0x118] sm:$0xff]
  %v353 = vld [vmem:[%s316 + $0x120] sm:$0xff]
  %v354 = vld [vmem:[%s316 + $0x128] sm:$0xff]
  %v355 = vld [vmem:[%s316 + $0x130] sm:$0xff]
  %v356 = vld [vmem:[%s316 + $0x138] sm:$0xff]
  %v357 = vld [vmem:[%s316 + $0x140] sm:$0xff]
  %v358 = vld [vmem:[%s316 + $0x148] sm:$0xff]
  %v359 = vld [vmem:[%s316 + $0x150] sm:$0xff]
  %v360 = vld [vmem:[%s316 + $0x158] sm:$0xff]
  %v361 = vld [vmem:[%s316 + $0x160] sm:$0xff]
  %v362 = vld [vmem:[%s316 + $0x168] sm:$0xff]
  %v363 = vld [vmem:[%s316 + $0x170] sm:$0xff]
  %v364 = vld [vmem:[%s316 + $0x178] sm:$0xff]
  %v365 = vld [vmem:[%s316 + $0x180] sm:$0x1]
  %v366 = vld [vmem:[%s316 + $0x188] sm:$0x1]
  %v367 = vld [vmem:[%s316 + $0x190] sm:$0x1]
  %v368 = vld [vmem:[%s316 + $0x198] sm:$0x1]
  %v369 = vld [vmem:[%s316 + $0x1a0] sm:$0x1]
  %v370 = vld [vmem:[%s316 + $0x1a8] sm:$0x1]
  %v371 = vld [vmem:[%s316 + $0x1b0] sm:$0x1]
  %v372 = vld [vmem:[%s316 + $0x1b8] sm:$0x1]
  %v374 = vsel %vm91, %v365, 0
  %v377 = vsel %vm91, %v366, 0
  %v380 = vsel %vm91, %v367, 0
  %v383 = vsel %vm91, %v368, 0
  %v386 = vsel %vm91, %v369, 0
  %v389 = vsel %vm91, %v370, 0
  %v392 = vsel %vm91, %v371, 0
  %v395 = vsel %vm91, %v372, 0
  %397 = vmatpush.msra.mxu0 0.0
  %398 = vmatpush.msra.mxu0 0.0
  %399 = vmatpush.msra.mxu0 0.0
  %400 = vmatpush.msra.mxu0 0.0
  %401 = vmatpush.msra.mxu0 0.0
  %402 = vmatpush.msra.mxu0 0.0
  %403 = vmatpush.msra.mxu0 0.0
  %404 = vmatpush.msra.mxu0 0.0
  %405 = vmatpush.msra.mxu0 0.0
  %406 = vmatpush.msra.mxu0 %v374
  %407 = vmatpush.msra.mxu0 %v357
  %408 = vmatpush.msra.mxu0 %v349
  %409 = vmatpush.msra.mxu0 %v341
  %410 = vmatpush.msra.mxu0 %v333
  %411 = vmatpush.msra.mxu0 %v325
  %412 = vmatpush.msra.mxu0 %v317
  %413 = vmatmul.f32.gmra.mxu0 %v86
  %v414 = vpop.f32.mrf.mxu0
  %v415 = vadd.f32 %v77, %v414
  %416 = vmatmul.f32.gmra.mxu0 %v89
  %v417 = vpop.f32.mrf.mxu0
  %v418 = vadd.f32 %v82, %v417
  %419 = vdwg.mxu0
  %420 = vmatpush.msra.mxu0 0.0
  %421 = vmatpush.msra.mxu0 0.0
  %422 = vmatpush.msra.mxu0 0.0
  %423 = vmatpush.msra.mxu0 0.0
  %424 = vmatpush.msra.mxu0 0.0
  %425 = vmatpush.msra.mxu0 0.0
  %426 = vmatpush.msra.mxu0 0.0
  %427 = vmatpush.msra.mxu0 0.0
  %428 = vmatpush.msra.mxu0 0.0
  %429 = vmatpush.msra.mxu0 %v377
  %430 = vmatpush.msra.mxu0 %v358
  %431 = vmatpush.msra.mxu0 %v350
  %432 = vmatpush.msra.mxu0 %v342
  %433 = vmatpush.msra.mxu0 %v334
  %434 = vmatpush.msra.mxu0 %v326
  %435 = vmatpush.msra.mxu0 %v318
  %436 = vmatmul.f32.gmra.mxu0 %v86
  %v437 = vpop.f32.mrf.mxu0
  %v438 = vadd.f32 %v77, %v437
  %439 = vmatmul.f32.gmra.mxu0 %v89
  %v440 = vpop.f32.mrf.mxu0
  %v441 = vadd.f32 %v82, %v440
  %442 = vdwg.mxu0
  %443 = vmatpush.msra.mxu0 0.0
  %444 = vmatpush.msra.mxu0 0.0
  %445 = vmatpush.msra.mxu0 0.0
  %446 = vmatpush.msra.mxu0 0.0
  %447 = vmatpush.msra.mxu0 0.0
  %448 = vmatpush.msra.mxu0 0.0
  %449 = vmatpush.msra.mxu0 0.0
  %450 = vmatpush.msra.mxu0 0.0
  %451 = vmatpush.msra.mxu0 0.0
  %452 = vmatpush.msra.mxu0 %v380
  %453 = vmatpush.msra.mxu0 %v359
  %454 = vmatpush.msra.mxu0 %v351
  %455 = vmatpush.msra.mxu0 %v343
  %456 = vmatpush.msra.mxu0 %v335
  %457 = vmatpush.msra.mxu0 %v327
  %458 = vmatpush.msra.mxu0 %v319
  %459 = vmatmul.f32.gmra.mxu0 %v86
  %v460 = vpop.f32.mrf.mxu0
  %v461 = vadd.f32 %v77, %v460
  %462 = vmatmul.f32.gmra.mxu0 %v89
  %v463 = vpop.f32.mrf.mxu0
  %v464 = vadd.f32 %v82, %v463
  %465 = vdwg.mxu0
  %466 = vmatpush.msra.mxu0 0.0
  %467 = vmatpush.msra.mxu0 0.0
  %468 = vmatpush.msra.mxu0 0.0
  %469 = vmatpush.msra.mxu0 0.0
  %470 = vmatpush.msra.mxu0 0.0
  %471 = vmatpush.msra.mxu0 0.0
  %472 = vmatpush.msra.mxu0 0.0
  %473 = vmatpush.msra.mxu0 0.0
  %474 = vmatpush.msra.mxu0 0.0
  %475 = vmatpush.msra.mxu0 %v383
  %476 = vmatpush.msra.mxu0 %v360
  %477 = vmatpush.msra.mxu0 %v352
  %478 = vmatpush.msra.mxu0 %v344
  %479 = vmatpush.msra.mxu0 %v336
  %480 = vmatpush.msra.mxu0 %v328
  %481 = vmatpush.msra.mxu0 %v320
  %482 = vmatmul.f32.gmra.mxu0 %v86
  %v483 = vpop.f32.mrf.mxu0
  %v484 = vadd.f32 %v77, %v483
  %485 = vmatmul.f32.gmra.mxu0 %v89
  %v486 = vpop.f32.mrf.mxu0
  %v487 = vadd.f32 %v82, %v486
  %488 = vdwg.mxu0
  %489 = vmatpush.msra.mxu0 0.0
  %490 = vmatpush.msra.mxu0 0.0
  %491 = vmatpush.msra.mxu0 0.0
  %492 = vmatpush.msra.mxu0 0.0
  %493 = vmatpush.msra.mxu0 0.0
  %494 = vmatpush.msra.mxu0 0.0
  %495 = vmatpush.msra.mxu0 0.0
  %496 = vmatpush.msra.mxu0 0.0
  %497 = vmatpush.msra.mxu0 0.0
  %498 = vmatpush.msra.mxu0 %v386
  %499 = vmatpush.msra.mxu0 %v361
  %500 = vmatpush.msra.mxu0 %v353
  %501 = vmatpush.msra.mxu0 %v345
  %502 = vmatpush.msra.mxu0 %v337
  %503 = vmatpush.msra.mxu0 %v329
  %504 = vmatpush.msra.mxu0 %v321
  %505 = vmatmul.f32.gmra.mxu0 %v86
  %v506 = vpop.f32.mrf.mxu0
  %v507 = vadd.f32 %v77, %v506
  %508 = vmatmul.f32.gmra.mxu0 %v89
  %v509 = vpop.f32.mrf.mxu0
  %v510 = vadd.f32 %v82, %v509
  %511 = vdwg.mxu0
  %512 = vmatpush.msra.mxu0 0.0
  %513 = vmatpush.msra.mxu0 0.0
  %514 = vmatpush.msra.mxu0 0.0
  %515 = vmatpush.msra.mxu0 0.0
  %516 = vmatpush.msra.mxu0 0.0
  %517 = vmatpush.msra.mxu0 0.0
  %518 = vmatpush.msra.mxu0 0.0
  %519 = vmatpush.msra.mxu0 0.0
  %520 = vmatpush.msra.mxu0 0.0
  %521 = vmatpush.msra.mxu0 %v389
  %522 = vmatpush.msra.mxu0 %v362
  %523 = vmatpush.msra.mxu0 %v354
  %524 = vmatpush.msra.mxu0 %v346
  %525 = vmatpush.msra.mxu0 %v338
  %526 = vmatpush.msra.mxu0 %v330
  %527 = vmatpush.msra.mxu0 %v322
  %528 = vmatmul.f32.gmra.mxu0 %v86
  %v529 = vpop.f32.mrf.mxu0
  %v530 = vadd.f32 %v77, %v529
  %531 = vmatmul.f32.gmra.mxu0 %v89
  %v532 = vpop.f32.mrf.mxu0
  %v533 = vadd.f32 %v82, %v532
  %534 = vdwg.mxu0
  %535 = vmatpush.msra.mxu0 0.0
  %536 = vmatpush.msra.mxu0 0.0
  %537 = vmatpush.msra.mxu0 0.0
  %538 = vmatpush.msra.mxu0 0.0
  %539 = vmatpush.msra.mxu0 0.0
  %540 = vmatpush.msra.mxu0 0.0
  %541 = vmatpush.msra.mxu0 0.0
  %542 = vmatpush.msra.mxu0 0.0
  %543 = vmatpush.msra.mxu0 0.0
  %544 = vmatpush.msra.mxu0 %v392
  %545 = vmatpush.msra.mxu0 %v363
  %546 = vmatpush.msra.mxu0 %v355
  %547 = vmatpush.msra.mxu0 %v347
  %548 = vmatpush.msra.mxu0 %v339
  %549 = vmatpush.msra.mxu0 %v331
  %550 = vmatpush.msra.mxu0 %v323
  %551 = vmatmul.f32.gmra.mxu0 %v86
  %v552 = vpop.f32.mrf.mxu0
  %v553 = vadd.f32 %v77, %v552
  %554 = vmatmul.f32.gmra.mxu0 %v89
  %v555 = vpop.f32.mrf.mxu0
  %v556 = vadd.f32 %v82, %v555
  %557 = vdwg.mxu0
  %558 = vmatpush.msra.mxu0 0.0
  %559 = vmatpush.msra.mxu0 0.0
  %560 = vmatpush.msra.mxu0 0.0
  %561 = vmatpush.msra.mxu0 0.0
  %562 = vmatpush.msra.mxu0 0.0
  %563 = vmatpush.msra.mxu0 0.0
  %564 = vmatpush.msra.mxu0 0.0
  %565 = vmatpush.msra.mxu0 0.0
  %566 = vmatpush.msra.mxu0 0.0
  %567 = vmatpush.msra.mxu0 %v395
  %568 = vmatpush.msra.mxu0 %v364
  %569 = vmatpush.msra.mxu0 %v356
  %570 = vmatpush.msra.mxu0 %v348
  %571 = vmatpush.msra.mxu0 %v340
  %572 = vmatpush.msra.mxu0 %v332
  %573 = vmatpush.msra.mxu0 %v324
  %574 = vmatmul.f32.gmra.mxu0 %v86
  %v575 = vpop.f32.mrf.mxu0
  %v576 = vadd.f32 %v77, %v575
  %577 = vmatmul.f32.gmra.mxu0 %v89
  %v578 = vpop.f32.mrf.mxu0
  %v579 = vadd.f32 %v82, %v578
  %580 = vdwg.mxu0
  %v581 = vmax.f32 %v415, 0.0
  %v582 = vmax.f32 %v438, 0.0
  %v583 = vmax.f32 %v461, 0.0
  %v584 = vmax.f32 %v484, 0.0
  %v585 = vmax.f32 %v507, 0.0
  %v586 = vmax.f32 %v530, 0.0
  %v587 = vmax.f32 %v553, 0.0
  %v588 = vmax.f32 %v576, 0.0
  %v589 = vmax.f32 %v418, 0.0
  %v590 = vmax.f32 %v441, 0.0
  %v591 = vmax.f32 %v464, 0.0
  %v592 = vmax.f32 %v487, 0.0
  %v593 = vmax.f32 %v510, 0.0
  %v594 = vmax.f32 %v533, 0.0
  %v595 = vmax.f32 %v556, 0.0
  %v596 = vmax.f32 %v579, 0.0
  %v597 = vmax.f32 %v300, %v581
  %v598 = vmax.f32 %v301, %v582
  %v599 = vmax.f32 %v302, %v583
  %v600 = vmax.f32 %v303, %v584
  %v601 = vmax.f32 %v304, %v585
  %v602 = vmax.f32 %v305, %v586
  %v603 = vmax.f32 %v306, %v587
  %v604 = vmax.f32 %v307, %v588
  %v605 = vmax.f32 %v308, %v589
  %v606 = vmax.f32 %v309, %v590
  %v607 = vmax.f32 %v310, %v591
  %v608 = vmax.f32 %v311, %v592
  %v609 = vmax.f32 %v312, %v593
  %v610 = vmax.f32 %v313, %v594
  %v611 = vmax.f32 %v314, %v595
  %v612 = vmax.f32 %v315, %v596
  %s613 = scalar_lea.vmem %s0, 896
  %v614 = vld [vmem:[%s613] sm:$0xff]
  %v615 = vld [vmem:[%s613 + $0x8] sm:$0xff]
  %v616 = vld [vmem:[%s613 + $0x10] sm:$0xff]
  %v617 = vld [vmem:[%s613 + $0x18] sm:$0xff]
  %v618 = vld [vmem:[%s613 + $0x20] sm:$0xff]
  %v619 = vld [vmem:[%s613 + $0x28] sm:$0xff]
  %v620 = vld [vmem:[%s613 + $0x30] sm:$0xff]
  %v621 = vld [vmem:[%s613 + $0x38] sm:$0xff]
  %v622 = vld [vmem:[%s613 + $0x40] sm:$0xff]
  %v623 = vld [vmem:[%s613 + $0x48] sm:$0xff]
  %v624 = vld [vmem:[%s613 + $0x50] sm:$0xff]
  %v625 = vld [vmem:[%s613 + $0x58] sm:$0xff]
  %v626 = vld [vmem:[%s613 + $0x60] sm:$0xff]
  %v627 = vld [vmem:[%s613 + $0x68] sm:$0xff]
  %v628 = vld [vmem:[%s613 + $0x70] sm:$0xff]
  %v629 = vld [vmem:[%s613 + $0x78] sm:$0xff]
  %v630 = vld [vmem:[%s613 + $0x80] sm:$0xff]
  %v631 = vld [vmem:[%s613 + $0x88] sm:$0xff]
  %v632 = vld [vmem:[%s613 + $0x90] sm:$0xff]
  %v633 = vld [vmem:[%s613 + $0x98] sm:$0xff]
  %v634 = vld [vmem:[%s613 + $0xa0] sm:$0xff]
  %v635 = vld [vmem:[%s613 + $0xa8] sm:$0xff]
  %v636 = vld [vmem:[%s613 + $0xb0] sm:$0xff]
  %v637 = vld [vmem:[%s613 + $0xb8] sm:$0xff]
  %v638 = vld [vmem:[%s613 + $0xc0] sm:$0xff]
  %v639 = vld [vmem:[%s613 + $0xc8] sm:$0xff]
  %v640 = vld [vmem:[%s613 + $0xd0] sm:$0xff]
  %v641 = vld [vmem:[%s613 + $0xd8] sm:$0xff]
  %v642 = vld [vmem:[%s613 + $0xe0] sm:$0xff]
  %v643 = vld [vmem:[%s613 + $0xe8] sm:$0xff]
  %v644 = vld [vmem:[%s613 + $0xf0] sm:$0xff]
  %v645 = vld [vmem:[%s613 + $0xf8] sm:$0xff]
  %v646 = vld [vmem:[%s613 + $0x100] sm:$0xff]
  %v647 = vld [vmem:[%s613 + $0x108] sm:$0xff]
  %v648 = vld [vmem:[%s613 + $0x110] sm:$0xff]
  %v649 = vld [vmem:[%s613 + $0x118] sm:$0xff]
  %v650 = vld [vmem:[%s613 + $0x120] sm:$0xff]
  %v651 = vld [vmem:[%s613 + $0x128] sm:$0xff]
  %v652 = vld [vmem:[%s613 + $0x130] sm:$0xff]
  %v653 = vld [vmem:[%s613 + $0x138] sm:$0xff]
  %v654 = vld [vmem:[%s613 + $0x140] sm:$0xff]
  %v655 = vld [vmem:[%s613 + $0x148] sm:$0xff]
  %v656 = vld [vmem:[%s613 + $0x150] sm:$0xff]
  %v657 = vld [vmem:[%s613 + $0x158] sm:$0xff]
  %v658 = vld [vmem:[%s613 + $0x160] sm:$0xff]
  %v659 = vld [vmem:[%s613 + $0x168] sm:$0xff]
  %v660 = vld [vmem:[%s613 + $0x170] sm:$0xff]
  %v661 = vld [vmem:[%s613 + $0x178] sm:$0xff]
  %v662 = vld [vmem:[%s613 + $0x180] sm:$0x1]
  %v663 = vld [vmem:[%s613 + $0x188] sm:$0x1]
  %v664 = vld [vmem:[%s613 + $0x190] sm:$0x1]
  %v665 = vld [vmem:[%s613 + $0x198] sm:$0x1]
  %v666 = vld [vmem:[%s613 + $0x1a0] sm:$0x1]
  %v667 = vld [vmem:[%s613 + $0x1a8] sm:$0x1]
  %v668 = vld [vmem:[%s613 + $0x1b0] sm:$0x1]
  %v669 = vld [vmem:[%s613 + $0x1b8] sm:$0x1]
  %v671 = vsel %vm91, %v662, 0
  %v674 = vsel %vm91, %v663, 0
  %v677 = vsel %vm91, %v664, 0
  %v680 = vsel %vm91, %v665, 0
  %v683 = vsel %vm91, %v666, 0
  %v686 = vsel %vm91, %v667, 0
  %v689 = vsel %vm91, %v668, 0
  %v692 = vsel %vm91, %v669, 0
  %694 = vmatpush.msra.mxu0 0.0
  %695 = vmatpush.msra.mxu0 0.0
  %696 = vmatpush.msra.mxu0 0.0
  %697 = vmatpush.msra.mxu0 0.0
  %698 = vmatpush.msra.mxu0 0.0
  %699 = vmatpush.msra.mxu0 0.0
  %700 = vmatpush.msra.mxu0 0.0
  %701 = vmatpush.msra.mxu0 0.0
  %702 = vmatpush.msra.mxu0 0.0
  %703 = vmatpush.msra.mxu0 %v671
  %704 = vmatpush.msra.mxu0 %v654
  %705 = vmatpush.msra.mxu0 %v646
  %706 = vmatpush.msra.mxu0 %v638
  %707 = vmatpush.msra.mxu0 %v630
  %708 = vmatpush.msra.mxu0 %v622
  %709 = vmatpush.msra.mxu0 %v614
  %710 = vmatmul.f32.gmra.mxu0 %v86
  %v711 = vpop.f32.mrf.mxu0
  %v712 = vadd.f32 %v77, %v711
  %713 = vmatmul.f32.gmra.mxu0 %v89
  %v714 = vpop.f32.mrf.mxu0
  %v715 = vadd.f32 %v82, %v714
  %716 = vdwg.mxu0
  %717 = vmatpush.msra.mxu0 0.0
  %718 = vmatpush.msra.mxu0 0.0
  %719 = vmatpush.msra.mxu0 0.0
  %720 = vmatpush.msra.mxu0 0.0
  %721 = vmatpush.msra.mxu0 0.0
  %722 = vmatpush.msra.mxu0 0.0
  %723 = vmatpush.msra.mxu0 0.0
  %724 = vmatpush.msra.mxu0 0.0
  %725 = vmatpush.msra.mxu0 0.0
  %726 = vmatpush.msra.mxu0 %v674
  %727 = vmatpush.msra.mxu0 %v655
  %728 = vmatpush.msra.mxu0 %v647
  %729 = vmatpush.msra.mxu0 %v639
  %730 = vmatpush.msra.mxu0 %v631
  %731 = vmatpush.msra.mxu0 %v623
  %732 = vmatpush.msra.mxu0 %v615
  %733 = vmatmul.f32.gmra.mxu0 %v86
  %v734 = vpop.f32.mrf.mxu0
  %v735 = vadd.f32 %v77, %v734
  %736 = vmatmul.f32.gmra.mxu0 %v89
  %v737 = vpop.f32.mrf.mxu0
  %v738 = vadd.f32 %v82, %v737
  %739 = vdwg.mxu0
  %740 = vmatpush.msra.mxu0 0.0
  %741 = vmatpush.msra.mxu0 0.0
  %742 = vmatpush.msra.mxu0 0.0
  %743 = vmatpush.msra.mxu0 0.0
  %744 = vmatpush.msra.mxu0 0.0
  %745 = vmatpush.msra.mxu0 0.0
  %746 = vmatpush.msra.mxu0 0.0
  %747 = vmatpush.msra.mxu0 0.0
  %748 = vmatpush.msra.mxu0 0.0
  %749 = vmatpush.msra.mxu0 %v677
  %750 = vmatpush.msra.mxu0 %v656
  %751 = vmatpush.msra.mxu0 %v648
  %752 = vmatpush.msra.mxu0 %v640
  %753 = vmatpush.msra.mxu0 %v632
  %754 = vmatpush.msra.mxu0 %v624
  %755 = vmatpush.msra.mxu0 %v616
  %756 = vmatmul.f32.gmra.mxu0 %v86
  %v757 = vpop.f32.mrf.mxu0
  %v758 = vadd.f32 %v77, %v757
  %759 = vmatmul.f32.gmra.mxu0 %v89
  %v760 = vpop.f32.mrf.mxu0
  %v761 = vadd.f32 %v82, %v760
  %762 = vdwg.mxu0
  %763 = vmatpush.msra.mxu0 0.0
  %764 = vmatpush.msra.mxu0 0.0
  %765 = vmatpush.msra.mxu0 0.0
  %766 = vmatpush.msra.mxu0 0.0
  %767 = vmatpush.msra.mxu0 0.0
  %768 = vmatpush.msra.mxu0 0.0
  %769 = vmatpush.msra.mxu0 0.0
  %770 = vmatpush.msra.mxu0 0.0
  %771 = vmatpush.msra.mxu0 0.0
  %772 = vmatpush.msra.mxu0 %v680
  %773 = vmatpush.msra.mxu0 %v657
  %774 = vmatpush.msra.mxu0 %v649
  %775 = vmatpush.msra.mxu0 %v641
  %776 = vmatpush.msra.mxu0 %v633
  %777 = vmatpush.msra.mxu0 %v625
  %778 = vmatpush.msra.mxu0 %v617
  %779 = vmatmul.f32.gmra.mxu0 %v86
  %v780 = vpop.f32.mrf.mxu0
  %v781 = vadd.f32 %v77, %v780
  %782 = vmatmul.f32.gmra.mxu0 %v89
  %v783 = vpop.f32.mrf.mxu0
  %v784 = vadd.f32 %v82, %v783
  %785 = vdwg.mxu0
  %786 = vmatpush.msra.mxu0 0.0
  %787 = vmatpush.msra.mxu0 0.0
  %788 = vmatpush.msra.mxu0 0.0
  %789 = vmatpush.msra.mxu0 0.0
  %790 = vmatpush.msra.mxu0 0.0
  %791 = vmatpush.msra.mxu0 0.0
  %792 = vmatpush.msra.mxu0 0.0
  %793 = vmatpush.msra.mxu0 0.0
  %794 = vmatpush.msra.mxu0 0.0
  %795 = vmatpush.msra.mxu0 %v683
  %796 = vmatpush.msra.mxu0 %v658
  %797 = vmatpush.msra.mxu0 %v650
  %798 = vmatpush.msra.mxu0 %v642
  %799 = vmatpush.msra.mxu0 %v634
  %800 = vmatpush.msra.mxu0 %v626
  %801 = vmatpush.msra.mxu0 %v618
  %802 = vmatmul.f32.gmra.mxu0 %v86
  %v803 = vpop.f32.mrf.mxu0
  %v804 = vadd.f32 %v77, %v803
  %805 = vmatmul.f32.gmra.mxu0 %v89
  %v806 = vpop.f32.mrf.mxu0
  %v807 = vadd.f32 %v82, %v806
  %808 = vdwg.mxu0
  %809 = vmatpush.msra.mxu0 0.0
  %810 = vmatpush.msra.mxu0 0.0
  %811 = vmatpush.msra.mxu0 0.0
  %812 = vmatpush.msra.mxu0 0.0
  %813 = vmatpush.msra.mxu0 0.0
  %814 = vmatpush.msra.mxu0 0.0
  %815 = vmatpush.msra.mxu0 0.0
  %816 = vmatpush.msra.mxu0 0.0
  %817 = vmatpush.msra.mxu0 0.0
  %818 = vmatpush.msra.mxu0 %v686
  %819 = vmatpush.msra.mxu0 %v659
  %820 = vmatpush.msra.mxu0 %v651
  %821 = vmatpush.msra.mxu0 %v643
  %822 = vmatpush.msra.mxu0 %v635
  %823 = vmatpush.msra.mxu0 %v627
  %824 = vmatpush.msra.mxu0 %v619
  %825 = vmatmul.f32.gmra.mxu0 %v86
  %v826 = vpop.f32.mrf.mxu0
  %v827 = vadd.f32 %v77, %v826
  %828 = vmatmul.f32.gmra.mxu0 %v89
  %v829 = vpop.f32.mrf.mxu0
  %v830 = vadd.f32 %v82, %v829
  %831 = vdwg.mxu0
  %832 = vmatpush.msra.mxu0 0.0
  %833 = vmatpush.msra.mxu0 0.0
  %834 = vmatpush.msra.mxu0 0.0
  %835 = vmatpush.msra.mxu0 0.0
  %836 = vmatpush.msra.mxu0 0.0
  %837 = vmatpush.msra.mxu0 0.0
  %838 = vmatpush.msra.mxu0 0.0
  %839 = vmatpush.msra.mxu0 0.0
  %840 = vmatpush.msra.mxu0 0.0
  %841 = vmatpush.msra.mxu0 %v689
  %842 = vmatpush.msra.mxu0 %v660
  %843 = vmatpush.msra.mxu0 %v652
  %844 = vmatpush.msra.mxu0 %v644
  %845 = vmatpush.msra.mxu0 %v636
  %846 = vmatpush.msra.mxu0 %v628
  %847 = vmatpush.msra.mxu0 %v620
  %848 = vmatmul.f32.gmra.mxu0 %v86
  %v849 = vpop.f32.mrf.mxu0
  %v850 = vadd.f32 %v77, %v849
  %851 = vmatmul.f32.gmra.mxu0 %v89
  %v852 = vpop.f32.mrf.mxu0
  %v853 = vadd.f32 %v82, %v852
  %854 = vdwg.mxu0
  %855 = vmatpush.msra.mxu0 0.0
  %856 = vmatpush.msra.mxu0 0.0
  %857 = vmatpush.msra.mxu0 0.0
  %858 = vmatpush.msra.mxu0 0.0
  %859 = vmatpush.msra.mxu0 0.0
  %860 = vmatpush.msra.mxu0 0.0
  %861 = vmatpush.msra.mxu0 0.0
  %862 = vmatpush.msra.mxu0 0.0
  %863 = vmatpush.msra.mxu0 0.0
  %864 = vmatpush.msra.mxu0 %v692
  %865 = vmatpush.msra.mxu0 %v661
  %866 = vmatpush.msra.mxu0 %v653
  %867 = vmatpush.msra.mxu0 %v645
  %868 = vmatpush.msra.mxu0 %v637
  %869 = vmatpush.msra.mxu0 %v629
  %870 = vmatpush.msra.mxu0 %v621
  %871 = vmatmul.f32.gmra.mxu0 %v86
  %v872 = vpop.f32.mrf.mxu0
  %v873 = vadd.f32 %v77, %v872
  %874 = vmatmul.f32.gmra.mxu0 %v89
  %v875 = vpop.f32.mrf.mxu0
  %v876 = vadd.f32 %v82, %v875
  %877 = vdwg.mxu0
  %v878 = vmax.f32 %v712, 0.0
  %v879 = vmax.f32 %v735, 0.0
  %v880 = vmax.f32 %v758, 0.0
  %v881 = vmax.f32 %v781, 0.0
  %v882 = vmax.f32 %v804, 0.0
  %v883 = vmax.f32 %v827, 0.0
  %v884 = vmax.f32 %v850, 0.0
  %v885 = vmax.f32 %v873, 0.0
  %v886 = vmax.f32 %v715, 0.0
  %v887 = vmax.f32 %v738, 0.0
  %v888 = vmax.f32 %v761, 0.0
  %v889 = vmax.f32 %v784, 0.0
  %v890 = vmax.f32 %v807, 0.0
  %v891 = vmax.f32 %v830, 0.0
  %v892 = vmax.f32 %v853, 0.0
  %v893 = vmax.f32 %v876, 0.0
  %v894 = vmax.f32 %v597, %v878
  %v895 = vmax.f32 %v598, %v879
  %v896 = vmax.f32 %v599, %v880
  %v897 = vmax.f32 %v600, %v881
  %v898 = vmax.f32 %v601, %v882
  %v899 = vmax.f32 %v602, %v883
  %v900 = vmax.f32 %v603, %v884
  %v901 = vmax.f32 %v604, %v885
  %v902 = vmax.f32 %v605, %v886
  %v903 = vmax.f32 %v606, %v887
  %v904 = vmax.f32 %v607, %v888
  %v905 = vmax.f32 %v608, %v889
  %v906 = vmax.f32 %v609, %v890
  %v907 = vmax.f32 %v610, %v891
  %v908 = vmax.f32 %v611, %v892
  %v909 = vmax.f32 %v612, %v893
  %s910 = scalar_lea.vmem %s0, 1344
  %v911 = vld [vmem:[%s910] sm:$0xff]
  %v912 = vld [vmem:[%s910 + $0x8] sm:$0xff]
  %v913 = vld [vmem:[%s910 + $0x10] sm:$0xff]
  %v914 = vld [vmem:[%s910 + $0x18] sm:$0xff]
  %v915 = vld [vmem:[%s910 + $0x20] sm:$0xff]
  %v916 = vld [vmem:[%s910 + $0x28] sm:$0xff]
  %v917 = vld [vmem:[%s910 + $0x30] sm:$0xff]
  %v918 = vld [vmem:[%s910 + $0x38] sm:$0xff]
  %v919 = vld [vmem:[%s910 + $0x40] sm:$0xff]
  %v920 = vld [vmem:[%s910 + $0x48] sm:$0xff]
  %v921 = vld [vmem:[%s910 + $0x50] sm:$0xff]
  %v922 = vld [vmem:[%s910 + $0x58] sm:$0xff]
  %v923 = vld [vmem:[%s910 + $0x60] sm:$0xff]
  %v924 = vld [vmem:[%s910 + $0x68] sm:$0xff]
  %v925 = vld [vmem:[%s910 + $0x70] sm:$0xff]
  %v926 = vld [vmem:[%s910 + $0x78] sm:$0xff]
  %v927 = vld [vmem:[%s910 + $0x80] sm:$0xff]
  %v928 = vld [vmem:[%s910 + $0x88] sm:$0xff]
  %v929 = vld [vmem:[%s910 + $0x90] sm:$0xff]
  %v930 = vld [vmem:[%s910 + $0x98] sm:$0xff]
  %v931 = vld [vmem:[%s910 + $0xa0] sm:$0xff]
  %v932 = vld [vmem:[%s910 + $0xa8] sm:$0xff]
  %v933 = vld [vmem:[%s910 + $0xb0] sm:$0xff]
  %v934 = vld [vmem:[%s910 + $0xb8] sm:$0xff]
  %v935 = vld [vmem:[%s910 + $0xc0] sm:$0xff]
  %v936 = vld [vmem:[%s910 + $0xc8] sm:$0xff]
  %v937 = vld [vmem:[%s910 + $0xd0] sm:$0xff]
  %v938 = vld [vmem:[%s910 + $0xd8] sm:$0xff]
  %v939 = vld [vmem:[%s910 + $0xe0] sm:$0xff]
  %v940 = vld [vmem:[%s910 + $0xe8] sm:$0xff]
  %v941 = vld [vmem:[%s910 + $0xf0] sm:$0xff]
  %v942 = vld [vmem:[%s910 + $0xf8] sm:$0xff]
  %v943 = vld [vmem:[%s910 + $0x100] sm:$0xff]
  %v944 = vld [vmem:[%s910 + $0x108] sm:$0xff]
  %v945 = vld [vmem:[%s910 + $0x110] sm:$0xff]
  %v946 = vld [vmem:[%s910 + $0x118] sm:$0xff]
  %v947 = vld [vmem:[%s910 + $0x120] sm:$0xff]
  %v948 = vld [vmem:[%s910 + $0x128] sm:$0xff]
  %v949 = vld [vmem:[%s910 + $0x130] sm:$0xff]
  %v950 = vld [vmem:[%s910 + $0x138] sm:$0xff]
  %v951 = vld [vmem:[%s910 + $0x140] sm:$0xff]
  %v952 = vld [vmem:[%s910 + $0x148] sm:$0xff]
  %v953 = vld [vmem:[%s910 + $0x150] sm:$0xff]
  %v954 = vld [vmem:[%s910 + $0x158] sm:$0xff]
  %v955 = vld [vmem:[%s910 + $0x160] sm:$0xff]
  %v956 = vld [vmem:[%s910 + $0x168] sm:$0xff]
  %v957 = vld [vmem:[%s910 + $0x170] sm:$0xff]
  %v958 = vld [vmem:[%s910 + $0x178] sm:$0xff]
  %v959 = vld [vmem:[%s910 + $0x180] sm:$0x1]
  %v960 = vld [vmem:[%s910 + $0x188] sm:$0x1]
  %v961 = vld [vmem:[%s910 + $0x190] sm:$0x1]
  %v962 = vld [vmem:[%s910 + $0x198] sm:$0x1]
  %v963 = vld [vmem:[%s910 + $0x1a0] sm:$0x1]
  %v964 = vld [vmem:[%s910 + $0x1a8] sm:$0x1]
  %v965 = vld [vmem:[%s910 + $0x1b0] sm:$0x1]
  %v966 = vld [vmem:[%s910 + $0x1b8] sm:$0x1]
  %v968 = vsel %vm91, %v959, 0
  %v971 = vsel %vm91, %v960, 0
  %v974 = vsel %vm91, %v961, 0
  %v977 = vsel %vm91, %v962, 0
  %v980 = vsel %vm91, %v963, 0
  %v983 = vsel %vm91, %v964, 0
  %v986 = vsel %vm91, %v965, 0
  %v989 = vsel %vm91, %v966, 0
  %991 = vmatpush.msra.mxu0 0.0
  %992 = vmatpush.msra.mxu0 0.0
  %993 = vmatpush.msra.mxu0 0.0
  %994 = vmatpush.msra.mxu0 0.0
  %995 = vmatpush.msra.mxu0 0.0
  %996 = vmatpush.msra.mxu0 0.0
  %997 = vmatpush.msra.mxu0 0.0
  %998 = vmatpush.msra.mxu0 0.0
  %999 = vmatpush.msra.mxu0 0.0
  %1000 = vmatpush.msra.mxu0 %v968
  %1001 = vmatpush.msra.mxu0 %v951
  %1002 = vmatpush.msra.mxu0 %v943
  %1003 = vmatpush.msra.mxu0 %v935
  %1004 = vmatpush.msra.mxu0 %v927
  %1005 = vmatpush.msra.mxu0 %v919
  %1006 = vmatpush.msra.mxu0 %v911
  %1007 = vmatmul.f32.gmra.mxu0 %v86
  %v1008 = vpop.f32.mrf.mxu0
  %v1009 = vadd.f32 %v77, %v1008
  %1010 = vmatmul.f32.gmra.mxu0 %v89
  %v1011 = vpop.f32.mrf.mxu0
  %v1012 = vadd.f32 %v82, %v1011
  %1013 = vdwg.mxu0
  %1014 = vmatpush.msra.mxu0 0.0
  %1015 = vmatpush.msra.mxu0 0.0
  %1016 = vmatpush.msra.mxu0 0.0
  %1017 = vmatpush.msra.mxu0 0.0
  %1018 = vmatpush.msra.mxu0 0.0
  %1019 = vmatpush.msra.mxu0 0.0
  %1020 = vmatpush.msra.mxu0 0.0
  %1021 = vmatpush.msra.mxu0 0.0
  %1022 = vmatpush.msra.mxu0 0.0
  %1023 = vmatpush.msra.mxu0 %v971
  %1024 = vmatpush.msra.mxu0 %v952
  %1025 = vmatpush.msra.mxu0 %v944
  %1026 = vmatpush.msra.mxu0 %v936
  %1027 = vmatpush.msra.mxu0 %v928
  %1028 = vmatpush.msra.mxu0 %v920
  %1029 = vmatpush.msra.mxu0 %v912
  %1030 = vmatmul.f32.gmra.mxu0 %v86
  %v1031 = vpop.f32.mrf.mxu0
  %v1032 = vadd.f32 %v77, %v1031
  %1033 = vmatmul.f32.gmra.mxu0 %v89
  %v1034 = vpop.f32.mrf.mxu0
  %v1035 = vadd.f32 %v82, %v1034
  %1036 = vdwg.mxu0
  %1037 = vmatpush.msra.mxu0 0.0
  %1038 = vmatpush.msra.mxu0 0.0
  %1039 = vmatpush.msra.mxu0 0.0
  %1040 = vmatpush.msra.mxu0 0.0
  %1041 = vmatpush.msra.mxu0 0.0
  %1042 = vmatpush.msra.mxu0 0.0
  %1043 = vmatpush.msra.mxu0 0.0
  %1044 = vmatpush.msra.mxu0 0.0
  %1045 = vmatpush.msra.mxu0 0.0
  %1046 = vmatpush.msra.mxu0 %v974
  %1047 = vmatpush.msra.mxu0 %v953
  %1048 = vmatpush.msra.mxu0 %v945
  %1049 = vmatpush.msra.mxu0 %v937
  %1050 = vmatpush.msra.mxu0 %v929
  %1051 = vmatpush.msra.mxu0 %v921
  %1052 = vmatpush.msra.mxu0 %v913
  %1053 = vmatmul.f32.gmra.mxu0 %v86
  %v1054 = vpop.f32.mrf.mxu0
  %v1055 = vadd.f32 %v77, %v1054
  %1056 = vmatmul.f32.gmra.mxu0 %v89
  %v1057 = vpop.f32.mrf.mxu0
  %v1058 = vadd.f32 %v82, %v1057
  %1059 = vdwg.mxu0
  %1060 = vmatpush.msra.mxu0 0.0
  %1061 = vmatpush.msra.mxu0 0.0
  %1062 = vmatpush.msra.mxu0 0.0
  %1063 = vmatpush.msra.mxu0 0.0
  %1064 = vmatpush.msra.mxu0 0.0
  %1065 = vmatpush.msra.mxu0 0.0
  %1066 = vmatpush.msra.mxu0 0.0
  %1067 = vmatpush.msra.mxu0 0.0
  %1068 = vmatpush.msra.mxu0 0.0
  %1069 = vmatpush.msra.mxu0 %v977
  %1070 = vmatpush.msra.mxu0 %v954
  %1071 = vmatpush.msra.mxu0 %v946
  %1072 = vmatpush.msra.mxu0 %v938
  %1073 = vmatpush.msra.mxu0 %v930
  %1074 = vmatpush.msra.mxu0 %v922
  %1075 = vmatpush.msra.mxu0 %v914
  %1076 = vmatmul.f32.gmra.mxu0 %v86
  %v1077 = vpop.f32.mrf.mxu0
  %v1078 = vadd.f32 %v77, %v1077
  %1079 = vmatmul.f32.gmra.mxu0 %v89
  %v1080 = vpop.f32.mrf.mxu0
  %v1081 = vadd.f32 %v82, %v1080
  %1082 = vdwg.mxu0
  %1083 = vmatpush.msra.mxu0 0.0
  %1084 = vmatpush.msra.mxu0 0.0
  %1085 = vmatpush.msra.mxu0 0.0
  %1086 = vmatpush.msra.mxu0 0.0
  %1087 = vmatpush.msra.mxu0 0.0
  %1088 = vmatpush.msra.mxu0 0.0
  %1089 = vmatpush.msra.mxu0 0.0
  %1090 = vmatpush.msra.mxu0 0.0
  %1091 = vmatpush.msra.mxu0 0.0
  %1092 = vmatpush.msra.mxu0 %v980
  %1093 = vmatpush.msra.mxu0 %v955
  %1094 = vmatpush.msra.mxu0 %v947
  %1095 = vmatpush.msra.mxu0 %v939
  %1096 = vmatpush.msra.mxu0 %v931
  %1097 = vmatpush.msra.mxu0 %v923
  %1098 = vmatpush.msra.mxu0 %v915
  %1099 = vmatmul.f32.gmra.mxu0 %v86
  %v1100 = vpop.f32.mrf.mxu0
  %v1101 = vadd.f32 %v77, %v1100
  %1102 = vmatmul.f32.gmra.mxu0 %v89
  %v1103 = vpop.f32.mrf.mxu0
  %v1104 = vadd.f32 %v82, %v1103
  %1105 = vdwg.mxu0
  %1106 = vmatpush.msra.mxu0 0.0
  %1107 = vmatpush.msra.mxu0 0.0
  %1108 = vmatpush.msra.mxu0 0.0
  %1109 = vmatpush.msra.mxu0 0.0
  %1110 = vmatpush.msra.mxu0 0.0
  %1111 = vmatpush.msra.mxu0 0.0
  %1112 = vmatpush.msra.mxu0 0.0
  %1113 = vmatpush.msra.mxu0 0.0
  %1114 = vmatpush.msra.mxu0 0.0
  %1115 = vmatpush.msra.mxu0 %v983
  %1116 = vmatpush.msra.mxu0 %v956
  %1117 = vmatpush.msra.mxu0 %v948
  %1118 = vmatpush.msra.mxu0 %v940
  %1119 = vmatpush.msra.mxu0 %v932
  %1120 = vmatpush.msra.mxu0 %v924
  %1121 = vmatpush.msra.mxu0 %v916
  %1122 = vmatmul.f32.gmra.mxu0 %v86
  %v1123 = vpop.f32.mrf.mxu0
  %v1124 = vadd.f32 %v77, %v1123
  %1125 = vmatmul.f32.gmra.mxu0 %v89
  %v1126 = vpop.f32.mrf.mxu0
  %v1127 = vadd.f32 %v82, %v1126
  %1128 = vdwg.mxu0
  %1129 = vmatpush.msra.mxu0 0.0
  %1130 = vmatpush.msra.mxu0 0.0
  %1131 = vmatpush.msra.mxu0 0.0
  %1132 = vmatpush.msra.mxu0 0.0
  %1133 = vmatpush.msra.mxu0 0.0
  %1134 = vmatpush.msra.mxu0 0.0
  %1135 = vmatpush.msra.mxu0 0.0
  %1136 = vmatpush.msra.mxu0 0.0
  %1137 = vmatpush.msra.mxu0 0.0
  %1138 = vmatpush.msra.mxu0 %v986
  %1139 = vmatpush.msra.mxu0 %v957
  %1140 = vmatpush.msra.mxu0 %v949
  %1141 = vmatpush.msra.mxu0 %v941
  %1142 = vmatpush.msra.mxu0 %v933
  %1143 = vmatpush.msra.mxu0 %v925
  %1144 = vmatpush.msra.mxu0 %v917
  %1145 = vmatmul.f32.gmra.mxu0 %v86
  %v1146 = vpop.f32.mrf.mxu0
  %v1147 = vadd.f32 %v77, %v1146
  %1148 = vmatmul.f32.gmra.mxu0 %v89
  %v1149 = vpop.f32.mrf.mxu0
  %v1150 = vadd.f32 %v82, %v1149
  %1151 = vdwg.mxu0
  %1152 = vmatpush.msra.mxu0 0.0
  %1153 = vmatpush.msra.mxu0 0.0
  %1154 = vmatpush.msra.mxu0 0.0
  %1155 = vmatpush.msra.mxu0 0.0
  %1156 = vmatpush.msra.mxu0 0.0
  %1157 = vmatpush.msra.mxu0 0.0
  %1158 = vmatpush.msra.mxu0 0.0
  %1159 = vmatpush.msra.mxu0 0.0
  %1160 = vmatpush.msra.mxu0 0.0
  %1161 = vmatpush.msra.mxu0 %v989
  %1162 = vmatpush.msra.mxu0 %v958
  %1163 = vmatpush.msra.mxu0 %v950
  %1164 = vmatpush.msra.mxu0 %v942
  %1165 = vmatpush.msra.mxu0 %v934
  %1166 = vmatpush.msra.mxu0 %v926
  %1167 = vmatpush.msra.mxu0 %v918
  %1168 = vmatmul.f32.gmra.mxu0 %v86
  %v1169 = vpop.f32.mrf.mxu0
  %v1170 = vadd.f32 %v77, %v1169
  %1171 = vmatmul.f32.gmra.mxu0 %v89
  %v1172 = vpop.f32.mrf.mxu0
  %v1173 = vadd.f32 %v82, %v1172
  %1174 = vdwg.mxu0
  %v1175 = vmax.f32 %v1009, 0.0
  %v1176 = vmax.f32 %v1032, 0.0
  %v1177 = vmax.f32 %v1055, 0.0
  %v1178 = vmax.f32 %v1078, 0.0
  %v1179 = vmax.f32 %v1101, 0.0
  %v1180 = vmax.f32 %v1124, 0.0
  %v1181 = vmax.f32 %v1147, 0.0
  %v1182 = vmax.f32 %v1170, 0.0
  %v1183 = vmax.f32 %v1012, 0.0
  %v1184 = vmax.f32 %v1035, 0.0
  %v1185 = vmax.f32 %v1058, 0.0
  %v1186 = vmax.f32 %v1081, 0.0
  %v1187 = vmax.f32 %v1104, 0.0
  %v1188 = vmax.f32 %v1127, 0.0
  %v1189 = vmax.f32 %v1150, 0.0
  %v1190 = vmax.f32 %v1173, 0.0
  %v1191 = vmax.f32 %v894, %v1175
  %v1192 = vmax.f32 %v895, %v1176
  %v1193 = vmax.f32 %v896, %v1177
  %v1194 = vmax.f32 %v897, %v1178
  %v1195 = vmax.f32 %v898, %v1179
  %v1196 = vmax.f32 %v899, %v1180
  %v1197 = vmax.f32 %v900, %v1181
  %v1198 = vmax.f32 %v901, %v1182
  %v1199 = vmax.f32 %v902, %v1183
  %v1200 = vmax.f32 %v903, %v1184
  %v1201 = vmax.f32 %v904, %v1185
  %v1202 = vmax.f32 %v905, %v1186
  %v1203 = vmax.f32 %v906, %v1187
  %v1204 = vmax.f32 %v907, %v1188
  %v1205 = vmax.f32 %v908, %v1189
  %v1206 = vmax.f32 %v909, %v1190
  %1207 = vst [vmem:[%s3] sm:$0xff] %v1191
  %1208 = vst [vmem:[%s3 + $0x8] sm:$0xff] %v1192
  %1209 = vst [vmem:[%s3 + $0x10] sm:$0xff] %v1193
  %1210 = vst [vmem:[%s3 + $0x18] sm:$0xff] %v1194
  %1211 = vst [vmem:[%s3 + $0x20] sm:$0xff] %v1195
  %1212 = vst [vmem:[%s3 + $0x28] sm:$0xff] %v1196
  %1213 = vst [vmem:[%s3 + $0x30] sm:$0xff] %v1197
  %1214 = vst [vmem:[%s3 + $0x38] sm:$0xff] %v1198
  %1215 = vst [vmem:[%s3 + $0x40] sm:$0xff] %v1199
  %1216 = vst [vmem:[%s3 + $0x48] sm:$0xff] %v1200
  %1217 = vst [vmem:[%s3 + $0x50] sm:$0xff] %v1201
  %1218 = vst [vmem:[%s3 + $0x58] sm:$0xff] %v1202
  %1219 = vst [vmem:[%s3 + $0x60] sm:$0xff] %v1203
  %1220 = vst [vmem:[%s3 + $0x68] sm:$0xff] %v1204
  %1221 = vst [vmem:[%s3 + $0x70] sm:$0xff] %v1205
  %1222 = vst [vmem:[%s3 + $0x78] sm:$0xff] %v1206
  // Predicated region
  $region14: #{gabor_backbone_forward.2} parent=0 // pred_check
    _
  $region15: #{gabor_backbone_forward.2} parent=0 // pred_check_branch
    %1224 = sbr.rel (0) target = $region17
  $region16: #{gabor_backbone_forward.2} parent=0 // pred_region
    _
  $region17: #{gabor_backbone_forward.2} parent=0 // pred_fallthru
    _
  // Predicated region
  $region18: #{gabor_backbone_forward.2} parent=0 // pred_check
    _
  $region19: #{gabor_backbone_forward.2} parent=0 // pred_check_branch
    %1226 = sbr.rel (0) target = $region21
  $region20: #{gabor_backbone_forward.2} parent=0 // pred_region
    _
  $region21: #{gabor_backbone_forward.2} parent=0 // pred_fallthru
    _

// kernel: gabor_backbone_forward.3
$region0: #{gabor_backbone_forward.3}
  #allocation0 [shape = 'u32[]', space=smem, size = 0x4, offset = 0x4, fixed_abs, tag = 'smem constant byte address 0x4 - core index']
  #allocation1 [shape = 'u32[72,128]{1,0:T(1,128)}', space=vmem, size = 0x9000, scoped, tag = 'internal scratch']
  %s0 = inlined_call_operand.vmem [shape: f32[4,16,8,144], index: 0, kind: input, shape index: {}]
  %s1 = inlined_call_operand.vmem [shape: f32[144,32], index: 1, kind: input, shape index: {}]
  %s2 = inlined_call_operand.vmem [shape: f32[1,32], index: 2, kind: input, shape index: {}]
  %s3 = inlined_call_operand.vmem [shape: f32[16,32,128], index: 3, kind: input, shape index: {}]
  %s4 = inlined_call_operand.vmem [shape: f32[1,128], index: 4, kind: input, shape index: {}]
  %s5 = inlined_call_operand.vmem [shape: f32[8,128], index: 5, kind: output, shape index: {}]
  %s6 = sld [smem:[#allocation0]]
  $region30: #{gabor_backbone_forward.3} parent=0
    _
  %s8 = ssub.s32 1, %s6
  %s9 = scalar_select 0, %s8, %s6
  // Predicated region
  $region2: #{gabor_backbone_forward.3} parent=0 // pred_check
    _
  $region3: #{gabor_backbone_forward.3} parent=0 // pred_check_branch
    %11 = sbr.rel (0) target = $region5
  $region4: #{gabor_backbone_forward.3} parent=0 // pred_region
    _
  $region5: #{gabor_backbone_forward.3} parent=0 // pred_fallthru
    _
  // Predicated region
  $region6: #{gabor_backbone_forward.3} parent=0 // pred_check
    _
  $region7: #{gabor_backbone_forward.3} parent=0 // pred_check_branch
    %13 = sbr.rel (0) target = $region9
  $region8: #{gabor_backbone_forward.3} parent=0 // pred_region
    _
  $region9: #{gabor_backbone_forward.3} parent=0 // pred_fallthru
    _
  // Predicated region
  $region10: #{gabor_backbone_forward.3} parent=0 // pred_check
    _
  $region11: #{gabor_backbone_forward.3} parent=0 // pred_check_branch
    %15 = sbr.rel (0) target = $region13
  $region12: #{gabor_backbone_forward.3} parent=0 // pred_region
    _
  $region13: #{gabor_backbone_forward.3} parent=0 // pred_fallthru
    _
  // Predicated region
  $region14: #{gabor_backbone_forward.3} parent=0 // pred_check
    _
  $region15: #{gabor_backbone_forward.3} parent=0 // pred_check_branch
    %17 = sbr.rel (0) target = $region17
  $region16: #{gabor_backbone_forward.3} parent=0 // pred_region
    _
  $region17: #{gabor_backbone_forward.3} parent=0 // pred_fallthru
    _
  // Predicated region
  $region18: #{gabor_backbone_forward.3} parent=0 // pred_check
    _
  $region19: #{gabor_backbone_forward.3} parent=0 // pred_check_branch
    %19 = sbr.rel (0) target = $region21
  $region20: #{gabor_backbone_forward.3} parent=0 // pred_region
    _
  $region21: #{gabor_backbone_forward.3} parent=0 // pred_fallthru
    _
  %v20 = vld [vmem:[%s1] sm:$0xff]
  %v21 = vld [vmem:[%s1 + $0x8] sm:$0xff]
  %v22 = vld [vmem:[%s1 + $0x10] sm:$0xff]
  %v23 = vld [vmem:[%s1 + $0x18] sm:$0xff]
  %v24 = vld [vmem:[%s1 + $0x20] sm:$0xff]
  %v25 = vld [vmem:[%s1 + $0x28] sm:$0xff]
  %v26 = vld [vmem:[%s1 + $0x30] sm:$0xff]
  %v27 = vld [vmem:[%s1 + $0x38] sm:$0xff]
  %v28 = vld [vmem:[%s1 + $0x40] sm:$0xff]
  %v29 = vld [vmem:[%s1 + $0x48] sm:$0xff]
  %v30 = vld [vmem:[%s1 + $0x50] sm:$0xff]
  %v31 = vld [vmem:[%s1 + $0x58] sm:$0xff]
  %v32 = vld [vmem:[%s1 + $0x60] sm:$0xff]
  %v33 = vld [vmem:[%s1 + $0x68] sm:$0xff]
  %v34 = vld [vmem:[%s1 + $0x70] sm:$0xff]
  %v35 = vld [vmem:[%s1 + $0x78] sm:$0xff]
  %v36 = vld [vmem:[%s1 + $0x80] sm:$0xff]
  %v37 = vld [vmem:[%s1 + $0x88] sm:$0xff]
  %v38 = vld [vmem:[%s2] sm:$0x1]
  %v39 = vld [vmem:[%s0] sm:$0xff]
  %v40 = vld [vmem:[%s0 + $0x8] sm:$0xff]
  %v42 = vperm.slane %v38, 0
  %vm44 = vcmask 130048
  %v46 = vsel %vm44, %v40, 0
  %48 = vmatpush.msra.mxu0 %v35
  %49 = vmatpush.msra.mxu0 %v34
  %50 = vmatpush.msra.mxu0 %v33
  %51 = vmatpush.msra.mxu0 %v32
  %52 = vmatpush.msra.mxu0 %v31
  %53 = vmatpush.msra.mxu0 %v30
  %54 = vmatpush.msra.mxu0 %v29
  %55 = vmatpush.msra.mxu0 %v28
  %56 = vmatpush.msra.mxu0 %v27
  %57 = vmatpush.msra.mxu0 %v26
  %58 = vmatpush.msra.mxu0 %v25
  %59 = vmatpush.msra.mxu0 %v24
  %60 = vmatpush.msra.mxu0 %v23
  %61 = vmatpush.msra.mxu0 %v22
  %62 = vmatpush.msra.mxu0 %v21
  %63 = vmatpush.msra.mxu0 %v20
  %64 = vmatmul.f32.gmra.mxu0 %v39
  %v65 = vpop.f32.mrf.mxu0
  %v66 = vadd.f32 %v42, %v65
  %67 = vdwg.mxu0
  %68 = vmatpush.msra.mxu0 0.0
  %69 = vmatpush.msra.mxu0 0.0
  %70 = vmatpush.msra.mxu0 0.0
  %71 = vmatpush.msra.mxu0 0.0
  %72 = vmatpush.msra.mxu0 0.0
  %73 = vmatpush.msra.mxu0 0.0
  %74 = vmatpush.msra.mxu0 0.0
  %75 = vmatpush.msra.mxu0 0.0
  %76 = vmatpush.msra.mxu0 0.0
  %77 = vmatpush.msra.mxu0 0.0
  %78 = vmatpush.msra.mxu0 0.0
  %79 = vmatpush.msra.mxu0 0.0
  %80 = vmatpush.msra.mxu0 0.0
  %81 = vmatpush.msra.mxu0 0.0
  %82 = vmatpush.msra.mxu0 %v37
  %83 = vmatpush.msra.mxu0 %v36
  %84 = vmatmul.f32.gmra.mxu0 %v46
  %v85 = vpop.f32.mrf.mxu0
  %v86 = vadd.f32 %v66, %v85
  %87 = vdwg.mxu0
  %v88 = vmax.f32 %v86, 0.0
  %s89 = scalar_lea.vmem %s0, 256
  %v90 = vld [vmem:[%s89] sm:$0xff]
  %v91 = vld [vmem:[%s89 + $0x8] sm:$0xff]
  %v93 = vsel %vm44, %v91, 0
  %95 = vmatpush.msra.mxu0 %v35
  %96 = vmatpush.msra.mxu0 %v34
  %97 = vmatpush.msra.mxu0 %v33
  %98 = vmatpush.msra.mxu0 %v32
  %99 = vmatpush.msra.mxu0 %v31
  %100 = vmatpush.msra.mxu0 %v30
  %101 = vmatpush.msra.mxu0 %v29
  %102 = vmatpush.msra.mxu0 %v28
  %103 = vmatpush.msra.mxu0 %v27
  %104 = vmatpush.msra.mxu0 %v26
  %105 = vmatpush.msra.mxu0 %v25
  %106 = vmatpush.msra.mxu0 %v24
  %107 = vmatpush.msra.mxu0 %v23
  %108 = vmatpush.msra.mxu0 %v22
  %109 = vmatpush.msra.mxu0 %v21
  %110 = vmatpush.msra.mxu0 %v20
  %111 = vmatmul.f32.gmra.mxu0 %v90
  %v112 = vpop.f32.mrf.mxu0
  %v113 = vadd.f32 %v42, %v112
  %114 = vdwg.mxu0
  %115 = vmatpush.msra.mxu0 0.0
  %116 = vmatpush.msra.mxu0 0.0
  %117 = vmatpush.msra.mxu0 0.0
  %118 = vmatpush.msra.mxu0 0.0
  %119 = vmatpush.msra.mxu0 0.0
  %120 = vmatpush.msra.mxu0 0.0
  %121 = vmatpush.msra.mxu0 0.0
  %122 = vmatpush.msra.mxu0 0.0
  %123 = vmatpush.msra.mxu0 0.0
  %124 = vmatpush.msra.mxu0 0.0
  %125 = vmatpush.msra.mxu0 0.0
  %126 = vmatpush.msra.mxu0 0.0
  %127 = vmatpush.msra.mxu0 0.0
  %128 = vmatpush.msra.mxu0 0.0
  %129 = vmatpush.msra.mxu0 %v37
  %130 = vmatpush.msra.mxu0 %v36
  %131 = vmatmul.f32.gmra.mxu0 %v93
  %v132 = vpop.f32.mrf.mxu0
  %v133 = vadd.f32 %v113, %v132
  %134 = vdwg.mxu0
  %v135 = vmax.f32 %v133, 0.0
  %v136 = vmax.f32 %v88, %v135
  %s137 = scalar_lea.vmem %s0, 512
  %v138 = vld [vmem:[%s137] sm:$0xff]
  %v139 = vld [vmem:[%s137 + $0x8] sm:$0xff]
  %v141 = vsel %vm44, %v139, 0
  %143 = vmatpush.msra.mxu0 %v35
  %144 = vmatpush.msra.mxu0 %v34
  %145 = vmatpush.msra.mxu0 %v33
  %146 = vmatpush.msra.mxu0 %v32
  %147 = vmatpush.msra.mxu0 %v31
  %148 = vmatpush.msra.mxu0 %v30
  %149 = vmatpush.msra.mxu0 %v29
  %150 = vmatpush.msra.mxu0 %v28
  %151 = vmatpush.msra.mxu0 %v27
  %152 = vmatpush.msra.mxu0 %v26
  %153 = vmatpush.msra.mxu0 %v25
  %154 = vmatpush.msra.mxu0 %v24
  %155 = vmatpush.msra.mxu0 %v23
  %156 = vmatpush.msra.mxu0 %v22
  %157 = vmatpush.msra.mxu0 %v21
  %158 = vmatpush.msra.mxu0 %v20
  %159 = vmatmul.f32.gmra.mxu0 %v138
  %v160 = vpop.f32.mrf.mxu0
  %v161 = vadd.f32 %v42, %v160
  %162 = vdwg.mxu0
  %163 = vmatpush.msra.mxu0 0.0
  %164 = vmatpush.msra.mxu0 0.0
  %165 = vmatpush.msra.mxu0 0.0
  %166 = vmatpush.msra.mxu0 0.0
  %167 = vmatpush.msra.mxu0 0.0
  %168 = vmatpush.msra.mxu0 0.0
  %169 = vmatpush.msra.mxu0 0.0
  %170 = vmatpush.msra.mxu0 0.0
  %171 = vmatpush.msra.mxu0 0.0
  %172 = vmatpush.msra.mxu0 0.0
  %173 = vmatpush.msra.mxu0 0.0
  %174 = vmatpush.msra.mxu0 0.0
  %175 = vmatpush.msra.mxu0 0.0
  %176 = vmatpush.msra.mxu0 0.0
  %177 = vmatpush.msra.mxu0 %v37
  %178 = vmatpush.msra.mxu0 %v36
  %179 = vmatmul.f32.gmra.mxu0 %v141
  %v180 = vpop.f32.mrf.mxu0
  %v181 = vadd.f32 %v161, %v180
  %182 = vdwg.mxu0
  %v183 = vmax.f32 %v181, 0.0
  %v184 = vmax.f32 %v136, %v183
  %s185 = scalar_lea.vmem %s0, 768
  %v186 = vld [vmem:[%s185] sm:$0xff]
  %v187 = vld [vmem:[%s185 + $0x8] sm:$0xff]
  %v189 = vsel %vm44, %v187, 0
  %191 = vmatpush.msra.mxu0 %v35
  %192 = vmatpush.msra.mxu0 %v34
  %193 = vmatpush.msra.mxu0 %v33
  %194 = vmatpush.msra.mxu0 %v32
  %195 = vmatpush.msra.mxu0 %v31
  %196 = vmatpush.msra.mxu0 %v30
  %197 = vmatpush.msra.mxu0 %v29
  %198 = vmatpush.msra.mxu0 %v28
  %199 = vmatpush.msra.mxu0 %v27
  %200 = vmatpush.msra.mxu0 %v26
  %201 = vmatpush.msra.mxu0 %v25
  %202 = vmatpush.msra.mxu0 %v24
  %203 = vmatpush.msra.mxu0 %v23
  %204 = vmatpush.msra.mxu0 %v22
  %205 = vmatpush.msra.mxu0 %v21
  %206 = vmatpush.msra.mxu0 %v20
  %207 = vmatmul.f32.gmra.mxu0 %v186
  %v208 = vpop.f32.mrf.mxu0
  %v209 = vadd.f32 %v42, %v208
  %210 = vdwg.mxu0
  %211 = vmatpush.msra.mxu0 0.0
  %212 = vmatpush.msra.mxu0 0.0
  %213 = vmatpush.msra.mxu0 0.0
  %214 = vmatpush.msra.mxu0 0.0
  %215 = vmatpush.msra.mxu0 0.0
  %216 = vmatpush.msra.mxu0 0.0
  %217 = vmatpush.msra.mxu0 0.0
  %218 = vmatpush.msra.mxu0 0.0
  %219 = vmatpush.msra.mxu0 0.0
  %220 = vmatpush.msra.mxu0 0.0
  %221 = vmatpush.msra.mxu0 0.0
  %222 = vmatpush.msra.mxu0 0.0
  %223 = vmatpush.msra.mxu0 0.0
  %224 = vmatpush.msra.mxu0 0.0
  %225 = vmatpush.msra.mxu0 %v37
  %226 = vmatpush.msra.mxu0 %v36
  %227 = vmatmul.f32.gmra.mxu0 %v189
  %v228 = vpop.f32.mrf.mxu0
  %v229 = vadd.f32 %v209, %v228
  %230 = vdwg.mxu0
  %v231 = vmax.f32 %v229, 0.0
  %v232 = vmax.f32 %v184, %v231
  %v233 = vld [vmem:[%s3] sm:$0xff]
  %v234 = vld [vmem:[%s3 + $0x8] sm:$0xff]
  %v235 = vld [vmem:[%s3 + $0x10] sm:$0xff]
  %v236 = vld [vmem:[%s3 + $0x18] sm:$0xff]
  %s237 = scalar_lea.vmem %s0, 16
  %v238 = vld [vmem:[%s237] sm:$0xff]
  %v239 = vld [vmem:[%s237 + $0x8] sm:$0xff]
  %v241 = vsel %vm44, %v239, 0
  %243 = vmatpush.msra.mxu0 %v35
  %244 = vmatpush.msra.mxu0 %v34
  %245 = vmatpush.msra.mxu0 %v33
  %246 = vmatpush.msra.mxu0 %v32
  %247 = vmatpush.msra.mxu0 %v31
  %248 = vmatpush.msra.mxu0 %v30
  %249 = vmatpush.msra.mxu0 %v29
  %250 = vmatpush.msra.mxu0 %v28
  %251 = vmatpush.msra.mxu0 %v27
  %252 = vmatpush.msra.mxu0 %v26
  %253 = vmatpush.msra.mxu0 %v25
  %254 = vmatpush.msra.mxu0 %v24
  %255 = vmatpush.msra.mxu0 %v23
  %256 = vmatpush.msra.mxu0 %v22
  %257 = vmatpush.msra.mxu0 %v21
  %258 = vmatpush.msra.mxu0 %v20
  %259 = vmatmul.f32.gmra.mxu0 %v238
  %v260 = vpop.f32.mrf.mxu0
  %v261 = vadd.f32 %v42, %v260
  %262 = vdwg.mxu0
  %263 = vmatpush.msra.mxu0 0.0
  %264 = vmatpush.msra.mxu0 0.0
  %265 = vmatpush.msra.mxu0 0.0
  %266 = vmatpush.msra.mxu0 0.0
  %267 = vmatpush.msra.mxu0 0.0
  %268 = vmatpush.msra.mxu0 0.0
  %269 = vmatpush.msra.mxu0 0.0
  %270 = vmatpush.msra.mxu0 0.0
  %271 = vmatpush.msra.mxu0 0.0
  %272 = vmatpush.msra.mxu0 0.0
  %273 = vmatpush.msra.mxu0 0.0
  %274 = vmatpush.msra.mxu0 0.0
  %275 = vmatpush.msra.mxu0 0.0
  %276 = vmatpush.msra.mxu0 0.0
  %277 = vmatpush.msra.mxu0 %v37
  %278 = vmatpush.msra.mxu0 %v36
  %279 = vmatmul.f32.gmra.mxu0 %v241
  %v280 = vpop.f32.mrf.mxu0
  %v281 = vadd.f32 %v261, %v280
  %282 = vdwg.mxu0
  %v283 = vmax.f32 %v281, 0.0
  %s284 = scalar_lea.vmem %s0, 272
  %v285 = vld [vmem:[%s284] sm:$0xff]
  %v286 = vld [vmem:[%s284 + $0x8] sm:$0xff]
  %v288 = vsel %vm44, %v286, 0
  %290 = vmatpush.msra.mxu0 %v35
  %291 = vmatpush.msra.mxu0 %v34
  %292 = vmatpush.msra.mxu0 %v33
  %293 = vmatpush.msra.mxu0 %v32
  %294 = vmatpush.msra.mxu0 %v31
  %295 = vmatpush.msra.mxu0 %v30
  %296 = vmatpush.msra.mxu0 %v29
  %297 = vmatpush.msra.mxu0 %v28
  %298 = vmatpush.msra.mxu0 %v27
  %299 = vmatpush.msra.mxu0 %v26
  %300 = vmatpush.msra.mxu0 %v25
  %301 = vmatpush.msra.mxu0 %v24
  %302 = vmatpush.msra.mxu0 %v23
  %303 = vmatpush.msra.mxu0 %v22
  %304 = vmatpush.msra.mxu0 %v21
  %305 = vmatpush.msra.mxu0 %v20
  %306 = vmatmul.f32.gmra.mxu0 %v285
  %v307 = vpop.f32.mrf.mxu0
  %v308 = vadd.f32 %v42, %v307
  %309 = vdwg.mxu0
  %310 = vmatpush.msra.mxu0 0.0
  %311 = vmatpush.msra.mxu0 0.0
  %312 = vmatpush.msra.mxu0 0.0
  %313 = vmatpush.msra.mxu0 0.0
  %314 = vmatpush.msra.mxu0 0.0
  %315 = vmatpush.msra.mxu0 0.0
  %316 = vmatpush.msra.mxu0 0.0
  %317 = vmatpush.msra.mxu0 0.0
  %318 = vmatpush.msra.mxu0 0.0
  %319 = vmatpush.msra.mxu0 0.0
  %320 = vmatpush.msra.mxu0 0.0
  %321 = vmatpush.msra.mxu0 0.0
  %322 = vmatpush.msra.mxu0 0.0
  %323 = vmatpush.msra.mxu0 0.0
  %324 = vmatpush.msra.mxu0 %v37
  %325 = vmatpush.msra.mxu0 %v36
  %326 = vmatmul.f32.gmra.mxu0 %v288
  %v327 = vpop.f32.mrf.mxu0
  %v328 = vadd.f32 %v308, %v327
  %329 = vdwg.mxu0
  %v330 = vmax.f32 %v328, 0.0
  %v331 = vmax.f32 %v283, %v330
  %s332 = scalar_lea.vmem %s0, 528
  %v333 = vld [vmem:[%s332] sm:$0xff]
  %v334 = vld [vmem:[%s332 + $0x8] sm:$0xff]
  %v336 = vsel %vm44, %v334, 0
  %338 = vmatpush.msra.mxu0 %v35
  %339 = vmatpush.msra.mxu0 %v34
  %340 = vmatpush.msra.mxu0 %v33
  %341 = vmatpush.msra.mxu0 %v32
  %342 = vmatpush.msra.mxu0 %v31
  %343 = vmatpush.msra.mxu0 %v30
  %344 = vmatpush.msra.mxu0 %v29
  %345 = vmatpush.msra.mxu0 %v28
  %346 = vmatpush.msra.mxu0 %v27
  %347 = vmatpush.msra.mxu0 %v26
  %348 = vmatpush.msra.mxu0 %v25
  %349 = vmatpush.msra.mxu0 %v24
  %350 = vmatpush.msra.mxu0 %v23
  %351 = vmatpush.msra.mxu0 %v22
  %352 = vmatpush.msra.mxu0 %v21
  %353 = vmatpush.msra.mxu0 %v20
  %354 = vmatmul.f32.gmra.mxu0 %v333
  %v355 = vpop.f32.mrf.mxu0
  %v356 = vadd.f32 %v42, %v355
  %357 = vdwg.mxu0
  %358 = vmatpush.msra.mxu0 0.0
  %359 = vmatpush.msra.mxu0 0.0
  %360 = vmatpush.msra.mxu0 0.0
  %361 = vmatpush.msra.mxu0 0.0
  %362 = vmatpush.msra.mxu0 0.0
  %363 = vmatpush.msra.mxu0 0.0
  %364 = vmatpush.msra.mxu0 0.0
  %365 = vmatpush.msra.mxu0 0.0
  %366 = vmatpush.msra.mxu0 0.0
  %367 = vmatpush.msra.mxu0 0.0
  %368 = vmatpush.msra.mxu0 0.0
  %369 = vmatpush.msra.mxu0 0.0
  %370 = vmatpush.msra.mxu0 0.0
  %371 = vmatpush.msra.mxu0 0.0
  %372 = vmatpush.msra.mxu0 %v37
  %373 = vmatpush.msra.mxu0 %v36
  %374 = vmatmul.f32.gmra.mxu0 %v336
  %v375 = vpop.f32.mrf.mxu0
  %v376 = vadd.f32 %v356, %v375
  %377 = vdwg.mxu0
  %v378 = vmax.f32 %v376, 0.0
  %v379 = vmax.f32 %v331, %v378
  %s380 = scalar_lea.vmem %s0, 784
  %v381 = vld [vmem:[%s380] sm:$0xff]
  %v382 = vld [vmem:[%s380 + $0x8] sm:$0xff]
  %v384 = vsel %vm44, %v382, 0
  %386 = vmatpush.msra.mxu0 %v35
  %387 = vmatpush.msra.mxu0 %v34
  %388 = vmatpush.msra.mxu0 %v33
  %389 = vmatpush.msra.mxu0 %v32
  %390 = vmatpush.msra.mxu0 %v31
  %391 = vmatpush.msra.mxu0 %v30
  %392 = vmatpush.msra.mxu0 %v29
  %393 = vmatpush.msra.mxu0 %v28
  %394 = vmatpush.msra.mxu0 %v27
  %395 = vmatpush.msra.mxu0 %v26
  %396 = vmatpush.msra.mxu0 %v25
  %397 = vmatpush.msra.mxu0 %v24
  %398 = vmatpush.msra.mxu0 %v23
  %399 = vmatpush.msra.mxu0 %v22
  %400 = vmatpush.msra.mxu0 %v21
  %401 = vmatpush.msra.mxu0 %v20
  %402 = vmatmul.f32.gmra.mxu0 %v381
  %v403 = vpop.f32.mrf.mxu0
  %v404 = vadd.f32 %v42, %v403
  %405 = vdwg.mxu0
  %406 = vmatpush.msra.mxu0 0.0
  %407 = vmatpush.msra.mxu0 0.0
  %408 = vmatpush.msra.mxu0 0.0
  %409 = vmatpush.msra.mxu0 0.0
  %410 = vmatpush.msra.mxu0 0.0
  %411 = vmatpush.msra.mxu0 0.0
  %412 = vmatpush.msra.mxu0 0.0
  %413 = vmatpush.msra.mxu0 0.0
  %414 = vmatpush.msra.mxu0 0.0
  %415 = vmatpush.msra.mxu0 0.0
  %416 = vmatpush.msra.mxu0 0.0
  %417 = vmatpush.msra.mxu0 0.0
  %418 = vmatpush.msra.mxu0 0.0
  %419 = vmatpush.msra.mxu0 0.0
  %420 = vmatpush.msra.mxu0 %v37
  %421 = vmatpush.msra.mxu0 %v36
  %422 = vmatmul.f32.gmra.mxu0 %v384
  %v423 = vpop.f32.mrf.mxu0
  %v424 = vadd.f32 %v404, %v423
  %425 = vdwg.mxu0
  %v426 = vmax.f32 %v424, 0.0
  %v427 = vmax.f32 %v379, %v426
  %s428 = scalar_lea.vmem %s3, 32
  %v429 = vld [vmem:[%s428] sm:$0xff]
  %v430 = vld [vmem:[%s428 + $0x8] sm:$0xff]
  %v431 = vld [vmem:[%s428 + $0x10] sm:$0xff]
  %v432 = vld [vmem:[%s428 + $0x18] sm:$0xff]
  %vm433 = vcmask 261120
  %v435 = vsel %vm433, %v427, 0
  %437 = vmatpush.msra.mxu0 0.0
  %438 = vmatpush.msra.mxu0 0.0
  %439 = vmatpush.msra.mxu0 0.0
  %440 = vmatpush.msra.mxu0 0.0
  %441 = vmatpush.msra.mxu0 0.0
  %442 = vmatpush.msra.mxu0 0.0
  %443 = vmatpush.msra.mxu0 0.0
  %444 = vmatpush.msra.mxu0 0.0
  %445 = vmatpush.msra.mxu0 0.0
  %446 = vmatpush.msra.mxu0 0.0
  %447 = vmatpush.msra.mxu0 0.0
  %448 = vmatpush.msra.mxu0 0.0
  %449 = vmatpush.msra.mxu0 %v432
  %450 = vmatpush.msra.mxu0 %v431
  %451 = vmatpush.msra.mxu0 %v430
  %452 = vmatpush.msra.mxu0 %v429
  %453 = vmatmul.f32.gmra.mxu0 %v435
  %v454 = vpop.f32.mrf.mxu0
  %v455 = vadd.f32 0.0, %v454
  %456 = vdwg.mxu0
  %v458 = vsel %vm433, %v232, 0
  %460 = vmatpush.msra.mxu0 0.0
  %461 = vmatpush.msra.mxu0 0.0
  %462 = vmatpush.msra.mxu0 0.0
  %463 = vmatpush.msra.mxu0 0.0
  %464 = vmatpush.msra.mxu0 0.0
  %465 = vmatpush.msra.mxu0 0.0
  %466 = vmatpush.msra.mxu0 0.0
  %467 = vmatpush.msra.mxu0 0.0
  %468 = vmatpush.msra.mxu0 0.0
  %469 = vmatpush.msra.mxu0 0.0
  %470 = vmatpush.msra.mxu0 0.0
  %471 = vmatpush.msra.mxu0 0.0
  %472 = vmatpush.msra.mxu0 %v236
  %473 = vmatpush.msra.mxu0 %v235
  %474 = vmatpush.msra.mxu0 %v234
  %475 = vmatpush.msra.mxu0 %v233
  %476 = vmatmul.f32.gmra.mxu0 %v458
  %v477 = vpop.f32.mrf.mxu0
  %v478 = vadd.f32 %v455, %v477
  %479 = vdwg.mxu0
  %s480 = scalar_lea.vmem %s0, 32
  %v481 = vld [vmem:[%s480] sm:$0xff]
  %v482 = vld [vmem:[%s480 + $0x8] sm:$0xff]
  %v484 = vsel %vm44, %v482, 0
  %486 = vmatpush.msra.mxu0 %v35
  %487 = vmatpush.msra.mxu0 %v34
  %488 = vmatpush.msra.mxu0 %v33
  %489 = vmatpush.msra.mxu0 %v32
  %490 = vmatpush.msra.mxu0 %v31
  %491 = vmatpush.msra.mxu0 %v30
  %492 = vmatpush.msra.mxu0 %v29
  %493 = vmatpush.msra.mxu0 %v28
  %494 = vmatpush.msra.mxu0 %v27
  %495 = vmatpush.msra.mxu0 %v26
  %496 = vmatpush.msra.mxu0 %v25
  %497 = vmatpush.msra.mxu0 %v24
  %498 = vmatpush.msra.mxu0 %v23
  %499 = vmatpush.msra.mxu0 %v22
  %500 = vmatpush.msra.mxu0 %v21
  %501 = vmatpush.msra.mxu0 %v20
  %502 = vmatmul.f32.gmra.mxu0 %v481
  %v503 = vpop.f32.mrf.mxu0
  %v504 = vadd.f32 %v42, %v503
  %505 = vdwg.mxu0
  %506 = vmatpush.msra.mxu0 0.0
  %507 = vmatpush.msra.mxu0 0.0
  %508 = vmatpush.msra.mxu0 0.0
  %509 = vmatpush.msra.mxu0 0.0
  %510 = vmatpush.msra.mxu0 0.0
  %511 = vmatpush.msra.mxu0 0.0
  %512 = vmatpush.msra.mxu0 0.0
  %513 = vmatpush.msra.mxu0 0.0
  %514 = vmatpush.msra.mxu0 0.0
  %515 = vmatpush.msra.mxu0 0.0
  %516 = vmatpush.msra.mxu0 0.0
  %517 = vmatpush.msra.mxu0 0.0
  %518 = vmatpush.msra.mxu0 0.0
  %519 = vmatpush.msra.mxu0 0.0
  %520 = vmatpush.msra.mxu0 %v37
  %521 = vmatpush.msra.mxu0 %v36
  %522 = vmatmul.f32.gmra.mxu0 %v484
  %v523 = vpop.f32.mrf.mxu0
  %v524 = vadd.f32 %v504, %v523
  %525 = vdwg.mxu0
  %v526 = vmax.f32 %v524, 0.0
  %s527 = scalar_lea.vmem %s0, 288
  %v528 = vld [vmem:[%s527] sm:$0xff]
  %v529 = vld [vmem:[%s527 + $0x8] sm:$0xff]
  %v531 = vsel %vm44, %v529, 0
  %533 = vmatpush.msra.mxu0 %v35
  %534 = vmatpush.msra.mxu0 %v34
  %535 = vmatpush.msra.mxu0 %v33
  %536 = vmatpush.msra.mxu0 %v32
  %537 = vmatpush.msra.mxu0 %v31
  %538 = vmatpush.msra.mxu0 %v30
  %539 = vmatpush.msra.mxu0 %v29
  %540 = vmatpush.msra.mxu0 %v28
  %541 = vmatpush.msra.mxu0 %v27
  %542 = vmatpush.msra.mxu0 %v26
  %543 = vmatpush.msra.mxu0 %v25
  %544 = vmatpush.msra.mxu0 %v24
  %545 = vmatpush.msra.mxu0 %v23
  %546 = vmatpush.msra.mxu0 %v22
  %547 = vmatpush.msra.mxu0 %v21
  %548 = vmatpush.msra.mxu0 %v20
  %549 = vmatmul.f32.gmra.mxu0 %v528
  %v550 = vpop.f32.mrf.mxu0
  %v551 = vadd.f32 %v42, %v550
  %552 = vdwg.mxu0
  %553 = vmatpush.msra.mxu0 0.0
  %554 = vmatpush.msra.mxu0 0.0
  %555 = vmatpush.msra.mxu0 0.0
  %556 = vmatpush.msra.mxu0 0.0
  %557 = vmatpush.msra.mxu0 0.0
  %558 = vmatpush.msra.mxu0 0.0
  %559 = vmatpush.msra.mxu0 0.0
  %560 = vmatpush.msra.mxu0 0.0
  %561 = vmatpush.msra.mxu0 0.0
  %562 = vmatpush.msra.mxu0 0.0
  %563 = vmatpush.msra.mxu0 0.0
  %564 = vmatpush.msra.mxu0 0.0
  %565 = vmatpush.msra.mxu0 0.0
  %566 = vmatpush.msra.mxu0 0.0
  %567 = vmatpush.msra.mxu0 %v37
  %568 = vmatpush.msra.mxu0 %v36
  %569 = vmatmul.f32.gmra.mxu0 %v531
  %v570 = vpop.f32.mrf.mxu0
  %v571 = vadd.f32 %v551, %v570
  %572 = vdwg.mxu0
  %v573 = vmax.f32 %v571, 0.0
  %v574 = vmax.f32 %v526, %v573
  %s575 = scalar_lea.vmem %s0, 544
  %v576 = vld [vmem:[%s575] sm:$0xff]
  %v577 = vld [vmem:[%s575 + $0x8] sm:$0xff]
  %v579 = vsel %vm44, %v577, 0
  %581 = vmatpush.msra.mxu0 %v35
  %582 = vmatpush.msra.mxu0 %v34
  %583 = vmatpush.msra.mxu0 %v33
  %584 = vmatpush.msra.mxu0 %v32
  %585 = vmatpush.msra.mxu0 %v31
  %586 = vmatpush.msra.mxu0 %v30
  %587 = vmatpush.msra.mxu0 %v29
  %588 = vmatpush.msra.mxu0 %v28
  %589 = vmatpush.msra.mxu0 %v27
  %590 = vmatpush.msra.mxu0 %v26
  %591 = vmatpush.msra.mxu0 %v25
  %592 = vmatpush.msra.mxu0 %v24
  %593 = vmatpush.msra.mxu0 %v23
  %594 = vmatpush.msra.mxu0 %v22
  %595 = vmatpush.msra.mxu0 %v21
  %596 = vmatpush.msra.mxu0 %v20
  %597 = vmatmul.f32.gmra.mxu0 %v576
  %v598 = vpop.f32.mrf.mxu0
  %v599 = vadd.f32 %v42, %v598
  %600 = vdwg.mxu0
  %601 = vmatpush.msra.mxu0 0.0
  %602 = vmatpush.msra.mxu0 0.0
  %603 = vmatpush.msra.mxu0 0.0
  %604 = vmatpush.msra.mxu0 0.0
  %605 = vmatpush.msra.mxu0 0.0
  %606 = vmatpush.msra.mxu0 0.0
  %607 = vmatpush.msra.mxu0 0.0
  %608 = vmatpush.msra.mxu0 0.0
  %609 = vmatpush.msra.mxu0 0.0
  %610 = vmatpush.msra.mxu0 0.0
  %611 = vmatpush.msra.mxu0 0.0
  %612 = vmatpush.msra.mxu0 0.0
  %613 = vmatpush.msra.mxu0 0.0
  %614 = vmatpush.msra.mxu0 0.0
  %615 = vmatpush.msra.mxu0 %v37
  %616 = vmatpush.msra.mxu0 %v36
  %617 = vmatmul.f32.gmra.mxu0 %v579
  %v618 = vpop.f32.mrf.mxu0
  %v619 = vadd.f32 %v599, %v618
  %620 = vdwg.mxu0
  %v621 = vmax.f32 %v619, 0.0
  %v622 = vmax.f32 %v574, %v621
  %s623 = scalar_lea.vmem %s0, 800
  %v624 = vld [vmem:[%s623] sm:$0xff]
  %v625 = vld [vmem:[%s623 + $0x8] sm:$0xff]
  %v627 = vsel %vm44, %v625, 0
  %629 = vmatpush.msra.mxu0 %v35
  %630 = vmatpush.msra.mxu0 %v34
  %631 = vmatpush.msra.mxu0 %v33
  %632 = vmatpush.msra.mxu0 %v32
  %633 = vmatpush.msra.mxu0 %v31
  %634 = vmatpush.msra.mxu0 %v30
  %635 = vmatpush.msra.mxu0 %v29
  %636 = vmatpush.msra.mxu0 %v28
  %637 = vmatpush.msra.mxu0 %v27
  %638 = vmatpush.msra.mxu0 %v26
  %639 = vmatpush.msra.mxu0 %v25
  %640 = vmatpush.msra.mxu0 %v24
  %641 = vmatpush.msra.mxu0 %v23
  %642 = vmatpush.msra.mxu0 %v22
  %643 = vmatpush.msra.mxu0 %v21
  %644 = vmatpush.msra.mxu0 %v20
  %645 = vmatmul.f32.gmra.mxu0 %v624
  %v646 = vpop.f32.mrf.mxu0
  %v647 = vadd.f32 %v42, %v646
  %648 = vdwg.mxu0
  %649 = vmatpush.msra.mxu0 0.0
  %650 = vmatpush.msra.mxu0 0.0
  %651 = vmatpush.msra.mxu0 0.0
  %652 = vmatpush.msra.mxu0 0.0
  %653 = vmatpush.msra.mxu0 0.0
  %654 = vmatpush.msra.mxu0 0.0
  %655 = vmatpush.msra.mxu0 0.0
  %656 = vmatpush.msra.mxu0 0.0
  %657 = vmatpush.msra.mxu0 0.0
  %658 = vmatpush.msra.mxu0 0.0
  %659 = vmatpush.msra.mxu0 0.0
  %660 = vmatpush.msra.mxu0 0.0
  %661 = vmatpush.msra.mxu0 0.0
  %662 = vmatpush.msra.mxu0 0.0
  %663 = vmatpush.msra.mxu0 %v37
  %664 = vmatpush.msra.mxu0 %v36
  %665 = vmatmul.f32.gmra.mxu0 %v627
  %v666 = vpop.f32.mrf.mxu0
  %v667 = vadd.f32 %v647, %v666
  %668 = vdwg.mxu0
  %v669 = vmax.f32 %v667, 0.0
  %v670 = vmax.f32 %v622, %v669
  %s671 = scalar_lea.vmem %s3, 64
  %v672 = vld [vmem:[%s671] sm:$0xff]
  %v673 = vld [vmem:[%s671 + $0x8] sm:$0xff]
  %v674 = vld [vmem:[%s671 + $0x10] sm:$0xff]
  %v675 = vld [vmem:[%s671 + $0x18] sm:$0xff]
  %v677 = vsel %vm433, %v670, 0
  %679 = vmatpush.msra.mxu0 0.0
  %680 = vmatpush.msra.mxu0 0.0
  %681 = vmatpush.msra.mxu0 0.0
  %682 = vmatpush.msra.mxu0 0.0
  %683 = vmatpush.msra.mxu0 0.0
  %684 = vmatpush.msra.mxu0 0.0
  %685 = vmatpush.msra.mxu0 0.0
  %686 = vmatpush.msra.mxu0 0.0
  %687 = vmatpush.msra.mxu0 0.0
  %688 = vmatpush.msra.mxu0 0.0
  %689 = vmatpush.msra.mxu0 0.0
  %690 = vmatpush.msra.mxu0 0.0
  %691 = vmatpush.msra.mxu0 %v675
  %692 = vmatpush.msra.mxu0 %v674
  %693 = vmatpush.msra.mxu0 %v673
  %694 = vmatpush.msra.mxu0 %v672
  %695 = vmatmul.f32.gmra.mxu0 %v677
  %v696 = vpop.f32.mrf.mxu0
  %v697 = vadd.f32 0.0, %v696
  %698 = vdwg.mxu0
  %v699 = vadd.f32 %v478, %v697
  %s700 = scalar_lea.vmem %s0, 48
  %v701 = vld [vmem:[%s700] sm:$0xff]
  %v702 = vld [vmem:[%s700 + $0x8] sm:$0xff]
  %v704 = vsel %vm44, %v702, 0
  %706 = vmatpush.msra.mxu0 %v35
  %707 = vmatpush.msra.mxu0 %v34
  %708 = vmatpush.msra.mxu0 %v33
  %709 = vmatpush.msra.mxu0 %v32
  %710 = vmatpush.msra.mxu0 %v31
  %711 = vmatpush.msra.mxu0 %v30
  %712 = vmatpush.msra.mxu0 %v29
  %713 = vmatpush.msra.mxu0 %v28
  %714 = vmatpush.msra.mxu0 %v27
  %715 = vmatpush.msra.mxu0 %v26
  %716 = vmatpush.msra.mxu0 %v25
  %717 = vmatpush.msra.mxu0 %v24
  %718 = vmatpush.msra.mxu0 %v23
  %719 = vmatpush.msra.mxu0 %v22
  %720 = vmatpush.msra.mxu0 %v21
  %721 = vmatpush.msra.mxu0 %v20
  %722 = vmatmul.f32.gmra.mxu0 %v701
  %v723 = vpop.f32.mrf.mxu0
  %v724 = vadd.f32 %v42, %v723
  %725 = vdwg.mxu0
  %726 = vmatpush.msra.mxu0 0.0
  %727 = vmatpush.msra.mxu0 0.0
  %728 = vmatpush.msra.mxu0 0.0
  %729 = vmatpush.msra.mxu0 0.0
  %730 = vmatpush.msra.mxu0 0.0
  %731 = vmatpush.msra.mxu0 0.0
  %732 = vmatpush.msra.mxu0 0.0
  %733 = vmatpush.msra.mxu0 0.0
  %734 = vmatpush.msra.mxu0 0.0
  %735 = vmatpush.msra.mxu0 0.0
  %736 = vmatpush.msra.mxu0 0.0
  %737 = vmatpush.msra.mxu0 0.0
  %738 = vmatpush.msra.mxu0 0.0
  %739 = vmatpush.msra.mxu0 0.0
  %740 = vmatpush.msra.mxu0 %v37
  %741 = vmatpush.msra.mxu0 %v36
  %742 = vmatmul.f32.gmra.mxu0 %v704
  %v743 = vpop.f32.mrf.mxu0
  %v744 = vadd.f32 %v724, %v743
  %745 = vdwg.mxu0
  %v746 = vmax.f32 %v744, 0.0
  %s747 = scalar_lea.vmem %s0, 304
  %v748 = vld [vmem:[%s747] sm:$0xff]
  %v749 = vld [vmem:[%s747 + $0x8] sm:$0xff]
  %v751 = vsel %vm44, %v749, 0
  %753 = vmatpush.msra.mxu0 %v35
  %754 = vmatpush.msra.mxu0 %v34
  %755 = vmatpush.msra.mxu0 %v33
  %756 = vmatpush.msra.mxu0 %v32
  %757 = vmatpush.msra.mxu0 %v31
  %758 = vmatpush.msra.mxu0 %v30
  %759 = vmatpush.msra.mxu0 %v29
  %760 = vmatpush.msra.mxu0 %v28
  %761 = vmatpush.msra.mxu0 %v27
  %762 = vmatpush.msra.mxu0 %v26
  %763 = vmatpush.msra.mxu0 %v25
  %764 = vmatpush.msra.mxu0 %v24
  %765 = vmatpush.msra.mxu0 %v23
  %766 = vmatpush.msra.mxu0 %v22
  %767 = vmatpush.msra.mxu0 %v21
  %768 = vmatpush.msra.mxu0 %v20
  %769 = vmatmul.f32.gmra.mxu0 %v748
  %v770 = vpop.f32.mrf.mxu0
  %v771 = vadd.f32 %v42, %v770
  %772 = vdwg.mxu0
  %773 = vmatpush.msra.mxu0 0.0
  %774 = vmatpush.msra.mxu0 0.0
  %775 = vmatpush.msra.mxu0 0.0
  %776 = vmatpush.msra.mxu0 0.0
  %777 = vmatpush.msra.mxu0 0.0
  %778 = vmatpush.msra.mxu0 0.0
  %779 = vmatpush.msra.mxu0 0.0
  %780 = vmatpush.msra.mxu0 0.0
  %781 = vmatpush.msra.mxu0 0.0
  %782 = vmatpush.msra.mxu0 0.0
  %783 = vmatpush.msra.mxu0 0.0
  %784 = vmatpush.msra.mxu0 0.0
  %785 = vmatpush.msra.mxu0 0.0
  %786 = vmatpush.msra.mxu0 0.0
  %787 = vmatpush.msra.mxu0 %v37
  %788 = vmatpush.msra.mxu0 %v36
  %789 = vmatmul.f32.gmra.mxu0 %v751
  %v790 = vpop.f32.mrf.mxu0
  %v791 = vadd.f32 %v771, %v790
  %792 = vdwg.mxu0
  %v793 = vmax.f32 %v791, 0.0
  %v794 = vmax.f32 %v746, %v793
  %s795 = scalar_lea.vmem %s0, 560
  %v796 = vld [vmem:[%s795] sm:$0xff]
  %v797 = vld [vmem:[%s795 + $0x8] sm:$0xff]
  %v799 = vsel %vm44, %v797, 0
  %801 = vmatpush.msra.mxu0 %v35
  %802 = vmatpush.msra.mxu0 %v34
  %803 = vmatpush.msra.mxu0 %v33
  %804 = vmatpush.msra.mxu0 %v32
  %805 = vmatpush.msra.mxu0 %v31
  %806 = vmatpush.msra.mxu0 %v30
  %807 = vmatpush.msra.mxu0 %v29
  %808 = vmatpush.msra.mxu0 %v28
  %809 = vmatpush.msra.mxu0 %v27
  %810 = vmatpush.msra.mxu0 %v26
  %811 = vmatpush.msra.mxu0 %v25
  %812 = vmatpush.msra.mxu0 %v24
  %813 = vmatpush.msra.mxu0 %v23
  %814 = vmatpush.msra.mxu0 %v22
  %815 = vmatpush.msra.mxu0 %v21
  %816 = vmatpush.msra.mxu0 %v20
  %817 = vmatmul.f32.gmra.mxu0 %v796
  %v818 = vpop.f32.mrf.mxu0
  %v819 = vadd.f32 %v42, %v818
  %820 = vdwg.mxu0
  %821 = vmatpush.msra.mxu0 0.0
  %822 = vmatpush.msra.mxu0 0.0
  %823 = vmatpush.msra.mxu0 0.0
  %824 = vmatpush.msra.mxu0 0.0
  %825 = vmatpush.msra.mxu0 0.0
  %826 = vmatpush.msra.mxu0 0.0
  %827 = vmatpush.msra.mxu0 0.0
  %828 = vmatpush.msra.mxu0 0.0
  %829 = vmatpush.msra.mxu0 0.0
  %830 = vmatpush.msra.mxu0 0.0
  %831 = vmatpush.msra.mxu0 0.0
  %832 = vmatpush.msra.mxu0 0.0
  %833 = vmatpush.msra.mxu0 0.0
  %834 = vmatpush.msra.mxu0 0.0
  %835 = vmatpush.msra.mxu0 %v37
  %836 = vmatpush.msra.mxu0 %v36
  %837 = vmatmul.f32.gmra.mxu0 %v799
  %v838 = vpop.f32.mrf.mxu0
  %v839 = vadd.f32 %v819, %v838
  %840 = vdwg.mxu0
  %v841 = vmax.f32 %v839, 0.0
  %v842 = vmax.f32 %v794, %v841
  %s843 = scalar_lea.vmem %s0, 816
  %v844 = vld [vmem:[%s843] sm:$0xff]
  %v845 = vld [vmem:[%s843 + $0x8] sm:$0xff]
  %v847 = vsel %vm44, %v845, 0
  %849 = vmatpush.msra.mxu0 %v35
  %850 = vmatpush.msra.mxu0 %v34
  %851 = vmatpush.msra.mxu0 %v33
  %852 = vmatpush.msra.mxu0 %v32
  %853 = vmatpush.msra.mxu0 %v31
  %854 = vmatpush.msra.mxu0 %v30
  %855 = vmatpush.msra.mxu0 %v29
  %856 = vmatpush.msra.mxu0 %v28
  %857 = vmatpush.msra.mxu0 %v27
  %858 = vmatpush.msra.mxu0 %v26
  %859 = vmatpush.msra.mxu0 %v25
  %860 = vmatpush.msra.mxu0 %v24
  %861 = vmatpush.msra.mxu0 %v23
  %862 = vmatpush.msra.mxu0 %v22
  %863 = vmatpush.msra.mxu0 %v21
  %864 = vmatpush.msra.mxu0 %v20
  %865 = vmatmul.f32.gmra.mxu0 %v844
  %v866 = vpop.f32.mrf.mxu0
  %v867 = vadd.f32 %v42, %v866
  %868 = vdwg.mxu0
  %869 = vmatpush.msra.mxu0 0.0
  %870 = vmatpush.msra.mxu0 0.0
  %871 = vmatpush.msra.mxu0 0.0
  %872 = vmatpush.msra.mxu0 0.0
  %873 = vmatpush.msra.mxu0 0.0
  %874 = vmatpush.msra.mxu0 0.0
  %875 = vmatpush.msra.mxu0 0.0
  %876 = vmatpush.msra.mxu0 0.0
  %877 = vmatpush.msra.mxu0 0.0
  %878 = vmatpush.msra.mxu0 0.0
  %879 = vmatpush.msra.mxu0 0.0
  %880 = vmatpush.msra.mxu0 0.0
  %881 = vmatpush.msra.mxu0 0.0
  %882 = vmatpush.msra.mxu0 0.0
  %883 = vmatpush.msra.mxu0 %v37
  %884 = vmatpush.msra.mxu0 %v36
  %885 = vmatmul.f32.gmra.mxu0 %v847
  %v886 = vpop.f32.mrf.mxu0
  %v887 = vadd.f32 %v867, %v886
  %888 = vdwg.mxu0
  %v889 = vmax.f32 %v887, 0.0
  %v890 = vmax.f32 %v842, %v889
  %s891 = scalar_lea.vmem %s3, 96
  %v892 = vld [vmem:[%s891] sm:$0xff]
  %v893 = vld [vmem:[%s891 + $0x8] sm:$0xff]
  %v894 = vld [vmem:[%s891 + $0x10] sm:$0xff]
  %v895 = vld [vmem:[%s891 + $0x18] sm:$0xff]
  %v897 = vsel %vm433, %v890, 0
  %899 = vmatpush.msra.mxu0 0.0
  %900 = vmatpush.msra.mxu0 0.0
  %901 = vmatpush.msra.mxu0 0.0
  %902 = vmatpush.msra.mxu0 0.0
  %903 = vmatpush.msra.mxu0 0.0
  %904 = vmatpush.msra.mxu0 0.0
  %905 = vmatpush.msra.mxu0 0.0
  %906 = vmatpush.msra.mxu0 0.0
  %907 = vmatpush.msra.mxu0 0.0
  %908 = vmatpush.msra.mxu0 0.0
  %909 = vmatpush.msra.mxu0 0.0
  %910 = vmatpush.msra.mxu0 0.0
  %911 = vmatpush.msra.mxu0 %v895
  %912 = vmatpush.msra.mxu0 %v894
  %913 = vmatpush.msra.mxu0 %v893
  %914 = vmatpush.msra.mxu0 %v892
  %915 = vmatmul.f32.gmra.mxu0 %v897
  %v916 = vpop.f32.mrf.mxu0
  %v917 = vadd.f32 0.0, %v916
  %918 = vdwg.mxu0
  %v919 = vadd.f32 %v699, %v917
  %s920 = scalar_lea.vmem %s0, 64
  %v921 = vld [vmem:[%s920] sm:$0xff]
  %v922 = vld [vmem:[%s920 + $0x8] sm:$0xff]
  %v924 = vsel %vm44, %v922, 0
  %926 = vmatpush.msra.mxu0 %v35
  %927 = vmatpush.msra.mxu0 %v34
  %928 = vmatpush.msra.mxu0 %v33
  %929 = vmatpush.msra.mxu0 %v32
  %930 = vmatpush.msra.mxu0 %v31
  %931 = vmatpush.msra.mxu0 %v30
  %932 = vmatpush.msra.mxu0 %v29
  %933 = vmatpush.msra.mxu0 %v28
  %934 = vmatpush.msra.mxu0 %v27
  %935 = vmatpush.msra.mxu0 %v26
  %936 = vmatpush.msra.mxu0 %v25
  %937 = vmatpush.msra.mxu0 %v24
  %938 = vmatpush.msra.mxu0 %v23
  %939 = vmatpush.msra.mxu0 %v22
  %940 = vmatpush.msra.mxu0 %v21
  %941 = vmatpush.msra.mxu0 %v20
  %942 = vmatmul.f32.gmra.mxu0 %v921
  %v943 = vpop.f32.mrf.mxu0
  %v944 = vadd.f32 %v42, %v943
  %945 = vdwg.mxu0
  %946 = vmatpush.msra.mxu0 0.0
  %947 = vmatpush.msra.mxu0 0.0
  %948 = vmatpush.msra.mxu0 0.0
  %949 = vmatpush.msra.mxu0 0.0
  %950 = vmatpush.msra.mxu0 0.0
  %951 = vmatpush.msra.mxu0 0.0
  %952 = vmatpush.msra.mxu0 0.0
  %953 = vmatpush.msra.mxu0 0.0
  %954 = vmatpush.msra.mxu0 0.0
  %955 = vmatpush.msra.mxu0 0.0
  %956 = vmatpush.msra.mxu0 0.0
  %957 = vmatpush.msra.mxu0 0.0
  %958 = vmatpush.msra.mxu0 0.0
  %959 = vmatpush.msra.mxu0 0.0
  %960 = vmatpush.msra.mxu0 %v37
  %961 = vmatpush.msra.mxu0 %v36
  %962 = vmatmul.f32.gmra.mxu0 %v924
  %v963 = vpop.f32.mrf.mxu0
  %v964 = vadd.f32 %v944, %v963
  %965 = vdwg.mxu0
  %v966 = vmax.f32 %v964, 0.0
  %s967 = scalar_lea.vmem %s0, 320
  %v968 = vld [vmem:[%s967] sm:$0xff]
  %v969 = vld [vmem:[%s967 + $0x8] sm:$0xff]
  %v971 = vsel %vm44, %v969, 0
  %973 = vmatpush.msra.mxu0 %v35
  %974 = vmatpush.msra.mxu0 %v34
  %975 = vmatpush.msra.mxu0 %v33
  %976 = vmatpush.msra.mxu0 %v32
  %977 = vmatpush.msra.mxu0 %v31
  %978 = vmatpush.msra.mxu0 %v30
  %979 = vmatpush.msra.mxu0 %v29
  %980 = vmatpush.msra.mxu0 %v28
  %981 = vmatpush.msra.mxu0 %v27
  %982 = vmatpush.msra.mxu0 %v26
  %983 = vmatpush.msra.mxu0 %v25
  %984 = vmatpush.msra.mxu0 %v24
  %985 = vmatpush.msra.mxu0 %v23
  %986 = vmatpush.msra.mxu0 %v22
  %987 = vmatpush.msra.mxu0 %v21
  %988 = vmatpush.msra.mxu0 %v20
  %989 = vmatmul.f32.gmra.mxu0 %v968
  %v990 = vpop.f32.mrf.mxu0
  %v991 = vadd.f32 %v42, %v990
  %992 = vdwg.mxu0
  %993 = vmatpush.msra.mxu0 0.0
  %994 = vmatpush.msra.mxu0 0.0
  %995 = vmatpush.msra.mxu0 0.0
  %996 = vmatpush.msra.mxu0 0.0
  %997 = vmatpush.msra.mxu0 0.0
  %998 = vmatpush.msra.mxu0 0.0
  %999 = vmatpush.msra.mxu0 0.0
  %1000 = vmatpush.msra.mxu0 0.0
  %1001 = vmatpush.msra.mxu0 0.0
  %1002 = vmatpush.msra.mxu0 0.0
  %1003 = vmatpush.msra.mxu0 0.0
  %1004 = vmatpush.msra.mxu0 0.0
  %1005 = vmatpush.msra.mxu0 0.0
  %1006 = vmatpush.msra.mxu0 0.0
  %1007 = vmatpush.msra.mxu0 %v37
  %1008 = vmatpush.msra.mxu0 %v36
  %1009 = vmatmul.f32.gmra.mxu0 %v971
  %v1010 = vpop.f32.mrf.mxu0
  %v1011 = vadd.f32 %v991, %v1010
  %1012 = vdwg.mxu0
  %v1013 = vmax.f32 %v1011, 0.0
  %v1014 = vmax.f32 %v966, %v1013
  %s1015 = scalar_lea.vmem %s0, 576
  %v1016 = vld [vmem:[%s1015] sm:$0xff]
  %v1017 = vld [vmem:[%s1015 + $0x8] sm:$0xff]
  %v1019 = vsel %vm44, %v1017, 0
  %1021 = vmatpush.msra.mxu0 %v35
  %1022 = vmatpush.msra.mxu0 %v34
  %1023 = vmatpush.msra.mxu0 %v33
  %1024 = vmatpush.msra.mxu0 %v32
  %1025 = vmatpush.msra.mxu0 %v31
  %1026 = vmatpush.msra.mxu0 %v30
  %1027 = vmatpush.msra.mxu0 %v29
  %1028 = vmatpush.msra.mxu0 %v28
  %1029 = vmatpush.msra.mxu0 %v27
  %1030 = vmatpush.msra.mxu0 %v26
  %1031 = vmatpush.msra.mxu0 %v25
  %1032 = vmatpush.msra.mxu0 %v24
  %1033 = vmatpush.msra.mxu0 %v23
  %1034 = vmatpush.msra.mxu0 %v22
  %1035 = vmatpush.msra.mxu0 %v21
  %1036 = vmatpush.msra.mxu0 %v20
  %1037 = vmatmul.f32.gmra.mxu0 %v1016
  %v1038 = vpop.f32.mrf.mxu0
  %v1039 = vadd.f32 %v42, %v1038
  %1040 = vdwg.mxu0
  %1041 = vmatpush.msra.mxu0 0.0
  %1042 = vmatpush.msra.mxu0 0.0
  %1043 = vmatpush.msra.mxu0 0.0
  %1044 = vmatpush.msra.mxu0 0.0
  %1045 = vmatpush.msra.mxu0 0.0
  %1046 = vmatpush.msra.mxu0 0.0
  %1047 = vmatpush.msra.mxu0 0.0
  %1048 = vmatpush.msra.mxu0 0.0
  %1049 = vmatpush.msra.mxu0 0.0
  %1050 = vmatpush.msra.mxu0 0.0
  %1051 = vmatpush.msra.mxu0 0.0
  %1052 = vmatpush.msra.mxu0 0.0
  %1053 = vmatpush.msra.mxu0 0.0
  %1054 = vmatpush.msra.mxu0 0.0
  %1055 = vmatpush.msra.mxu0 %v37
  %1056 = vmatpush.msra.mxu0 %v36
  %1057 = vmatmul.f32.gmra.mxu0 %v1019
  %v1058 = vpop.f32.mrf.mxu0
  %v1059 = vadd.f32 %v1039, %v1058
  %1060 = vdwg.mxu0
  %v1061 = vmax.f32 %v1059, 0.0
  %v1062 = vmax.f32 %v1014, %v1061
  %s1063 = scalar_lea.vmem %s0, 832
  %v1064 = vld [vmem:[%s1063] sm:$0xff]
  %v1065 = vld [vmem:[%s1063 + $0x8] sm:$0xff]
  %v1067 = vsel %vm44, %v1065, 0
  %1069 = vmatpush.msra.mxu0 %v35
  %1070 = vmatpush.msra.mxu0 %v34
  %1071 = vmatpush.msra.mxu0 %v33
  %1072 = vmatpush.msra.mxu0 %v32
  %1073 = vmatpush.msra.mxu0 %v31
  %1074 = vmatpush.msra.mxu0 %v30
  %1075 = vmatpush.msra.mxu0 %v29
  %1076 = vmatpush.msra.mxu0 %v28
  %1077 = vmatpush.msra.mxu0 %v27
  %1078 = vmatpush.msra.mxu0 %v26
  %1079 = vmatpush.msra.mxu0 %v25
  %1080 = vmatpush.msra.mxu0 %v24
  %1081 = vmatpush.msra.mxu0 %v23
  %1082 = vmatpush.msra.mxu0 %v22
  %1083 = vmatpush.msra.mxu0 %v21
  %1084 = vmatpush.msra.mxu0 %v20
  %1085 = vmatmul.f32.gmra.mxu0 %v1064
  %v1086 = vpop.f32.mrf.mxu0
  %v1087 = vadd.f32 %v42, %v1086
  %1088 = vdwg.mxu0
  %1089 = vmatpush.msra.mxu0 0.0
  %1090 = vmatpush.msra.mxu0 0.0
  %1091 = vmatpush.msra.mxu0 0.0
  %1092 = vmatpush.msra.mxu0 0.0
  %1093 = vmatpush.msra.mxu0 0.0
  %1094 = vmatpush.msra.mxu0 0.0
  %1095 = vmatpush.msra.mxu0 0.0
  %1096 = vmatpush.msra.mxu0 0.0
  %1097 = vmatpush.msra.mxu0 0.0
  %1098 = vmatpush.msra.mxu0 0.0
  %1099 = vmatpush.msra.mxu0 0.0
  %1100 = vmatpush.msra.mxu0 0.0
  %1101 = vmatpush.msra.mxu0 0.0
  %1102 = vmatpush.msra.mxu0 0.0
  %1103 = vmatpush.msra.mxu0 %v37
  %1104 = vmatpush.msra.mxu0 %v36
  %1105 = vmatmul.f32.gmra.mxu0 %v1067
  %v1106 = vpop.f32.mrf.mxu0
  %v1107 = vadd.f32 %v1087, %v1106
  %1108 = vdwg.mxu0
  %v1109 = vmax.f32 %v1107, 0.0
  %v1110 = vmax.f32 %v1062, %v1109
  %s1111 = scalar_lea.vmem %s3, 128
  %v1112 = vld [vmem:[%s1111] sm:$0xff]
  %v1113 = vld [vmem:[%s1111 + $0x8] sm:$0xff]
  %v1114 = vld [vmem:[%s1111 + $0x10] sm:$0xff]
  %v1115 = vld [vmem:[%s1111 + $0x18] sm:$0xff]
  %v1117 = vsel %vm433, %v1110, 0
  %1119 = vmatpush.msra.mxu0 0.0
  %1120 = vmatpush.msra.mxu0 0.0
  %1121 = vmatpush.msra.mxu0 0.0
  %1122 = vmatpush.msra.mxu0 0.0
  %1123 = vmatpush.msra.mxu0 0.0
  %1124 = vmatpush.msra.mxu0 0.0
  %1125 = vmatpush.msra.mxu0 0.0
  %1126 = vmatpush.msra.mxu0 0.0
  %1127 = vmatpush.msra.mxu0 0.0
  %1128 = vmatpush.msra.mxu0 0.0
  %1129 = vmatpush.msra.mxu0 0.0
  %1130 = vmatpush.msra.mxu0 0.0
  %1131 = vmatpush.msra.mxu0 %v1115
  %1132 = vmatpush.msra.mxu0 %v1114
  %1133 = vmatpush.msra.mxu0 %v1113
  %1134 = vmatpush.msra.mxu0 %v1112
  %1135 = vmatmul.f32.gmra.mxu0 %v1117
  %v1136 = vpop.f32.mrf.mxu0
  %v1137 = vadd.f32 0.0, %v1136
  %1138 = vdwg.mxu0
  %v1139 = vadd.f32 %v919, %v1137
  %s1140 = scalar_lea.vmem %s0, 80
  %v1141 = vld [vmem:[%s1140] sm:$0xff]
  %v1142 = vld [vmem:[%s1140 + $0x8] sm:$0xff]
  %v1144 = vsel %vm44, %v1142, 0
  %1146 = vmatpush.msra.mxu0 %v35
  %1147 = vmatpush.msra.mxu0 %v34
  %1148 = vmatpush.msra.mxu0 %v33
  %1149 = vmatpush.msra.mxu0 %v32
  %1150 = vmatpush.msra.mxu0 %v31
  %1151 = vmatpush.msra.mxu0 %v30
  %1152 = vmatpush.msra.mxu0 %v29
  %1153 = vmatpush.msra.mxu0 %v28
  %1154 = vmatpush.msra.mxu0 %v27
  %1155 = vmatpush.msra.mxu0 %v26
  %1156 = vmatpush.msra.mxu0 %v25
  %1157 = vmatpush.msra.mxu0 %v24
  %1158 = vmatpush.msra.mxu0 %v23
  %1159 = vmatpush.msra.mxu0 %v22
  %1160 = vmatpush.msra.mxu0 %v21
  %1161 = vmatpush.msra.mxu0 %v20
  %1162 = vmatmul.f32.gmra.mxu0 %v1141
  %v1163 = vpop.f32.mrf.mxu0
  %v1164 = vadd.f32 %v42, %v1163
  %1165 = vdwg.mxu0
  %1166 = vmatpush.msra.mxu0 0.0
  %1167 = vmatpush.msra.mxu0 0.0
  %1168 = vmatpush.msra.mxu0 0.0
  %1169 = vmatpush.msra.mxu0 0.0
  %1170 = vmatpush.msra.mxu0 0.0
  %1171 = vmatpush.msra.mxu0 0.0
  %1172 = vmatpush.msra.mxu0 0.0
  %1173 = vmatpush.msra.mxu0 0.0
  %1174 = vmatpush.msra.mxu0 0.0
  %1175 = vmatpush.msra.mxu0 0.0
  %1176 = vmatpush.msra.mxu0 0.0
  %1177 = vmatpush.msra.mxu0 0.0
  %1178 = vmatpush.msra.mxu0 0.0
  %1179 = vmatpush.msra.mxu0 0.0
  %1180 = vmatpush.msra.mxu0 %v37
  %1181 = vmatpush.msra.mxu0 %v36
  %1182 = vmatmul.f32.gmra.mxu0 %v1144
  %v1183 = vpop.f32.mrf.mxu0
  %v1184 = vadd.f32 %v1164, %v1183
  %1185 = vdwg.mxu0
  %v1186 = vmax.f32 %v1184, 0.0
  %s1187 = scalar_lea.vmem %s0, 336
  %v1188 = vld [vmem:[%s1187] sm:$0xff]
  %v1189 = vld [vmem:[%s1187 + $0x8] sm:$0xff]
  %v1191 = vsel %vm44, %v1189, 0
  %1193 = vmatpush.msra.mxu0 %v35
  %1194 = vmatpush.msra.mxu0 %v34
  %1195 = vmatpush.msra.mxu0 %v33
  %1196 = vmatpush.msra.mxu0 %v32
  %1197 = vmatpush.msra.mxu0 %v31
  %1198 = vmatpush.msra.mxu0 %v30
  %1199 = vmatpush.msra.mxu0 %v29
  %1200 = vmatpush.msra.mxu0 %v28
  %1201 = vmatpush.msra.mxu0 %v27
  %1202 = vmatpush.msra.mxu0 %v26
  %1203 = vmatpush.msra.mxu0 %v25
  %1204 = vmatpush.msra.mxu0 %v24
  %1205 = vmatpush.msra.mxu0 %v23
  %1206 = vmatpush.msra.mxu0 %v22
  %1207 = vmatpush.msra.mxu0 %v21
  %1208 = vmatpush.msra.mxu0 %v20
  %1209 = vmatmul.f32.gmra.mxu0 %v1188
  %v1210 = vpop.f32.mrf.mxu0
  %v1211 = vadd.f32 %v42, %v1210
  %1212 = vdwg.mxu0
  %1213 = vmatpush.msra.mxu0 0.0
  %1214 = vmatpush.msra.mxu0 0.0
  %1215 = vmatpush.msra.mxu0 0.0
  %1216 = vmatpush.msra.mxu0 0.0
  %1217 = vmatpush.msra.mxu0 0.0
  %1218 = vmatpush.msra.mxu0 0.0
  %1219 = vmatpush.msra.mxu0 0.0
  %1220 = vmatpush.msra.mxu0 0.0
  %1221 = vmatpush.msra.mxu0 0.0
  %1222 = vmatpush.msra.mxu0 0.0
  %1223 = vmatpush.msra.mxu0 0.0
  %1224 = vmatpush.msra.mxu0 0.0
  %1225 = vmatpush.msra.mxu0 0.0
  %1226 = vmatpush.msra.mxu0 0.0
  %1227 = vmatpush.msra.mxu0 %v37
  %1228 = vmatpush.msra.mxu0 %v36
  %1229 = vmatmul.f32.gmra.mxu0 %v1191
  %v1230 = vpop.f32.mrf.mxu0
  %v1231 = vadd.f32 %v1211, %v1230
  %1232 = vdwg.mxu0
  %v1233 = vmax.f32 %v1231, 0.0
  %v1234 = vmax.f32 %v1186, %v1233
  %s1235 = scalar_lea.vmem %s0, 592
  %v1236 = vld [vmem:[%s1235] sm:$0xff]
  %v1237 = vld [vmem:[%s1235 + $0x8] sm:$0xff]
  %v1239 = vsel %vm44, %v1237, 0
  %1241 = vmatpush.msra.mxu0 %v35
  %1242 = vmatpush.msra.mxu0 %v34
  %1243 = vmatpush.msra.mxu0 %v33
  %1244 = vmatpush.msra.mxu0 %v32
  %1245 = vmatpush.msra.mxu0 %v31
  %1246 = vmatpush.msra.mxu0 %v30
  %1247 = vmatpush.msra.mxu0 %v29
  %1248 = vmatpush.msra.mxu0 %v28
  %1249 = vmatpush.msra.mxu0 %v27
  %1250 = vmatpush.msra.mxu0 %v26
  %1251 = vmatpush.msra.mxu0 %v25
  %1252 = vmatpush.msra.mxu0 %v24
  %1253 = vmatpush.msra.mxu0 %v23
  %1254 = vmatpush.msra.mxu0 %v22
  %1255 = vmatpush.msra.mxu0 %v21
  %1256 = vmatpush.msra.mxu0 %v20
  %1257 = vmatmul.f32.gmra.mxu0 %v1236
  %v1258 = vpop.f32.mrf.mxu0
  %v1259 = vadd.f32 %v42, %v1258
  %1260 = vdwg.mxu0
  %1261 = vmatpush.msra.mxu0 0.0
  %1262 = vmatpush.msra.mxu0 0.0
  %1263 = vmatpush.msra.mxu0 0.0
  %1264 = vmatpush.msra.mxu0 0.0
  %1265 = vmatpush.msra.mxu0 0.0
  %1266 = vmatpush.msra.mxu0 0.0
  %1267 = vmatpush.msra.mxu0 0.0
  %1268 = vmatpush.msra.mxu0 0.0
  %1269 = vmatpush.msra.mxu0 0.0
  %1270 = vmatpush.msra.mxu0 0.0
  %1271 = vmatpush.msra.mxu0 0.0
  %1272 = vmatpush.msra.mxu0 0.0
  %1273 = vmatpush.msra.mxu0 0.0
  %1274 = vmatpush.msra.mxu0 0.0
  %1275 = vmatpush.msra.mxu0 %v37
  %1276 = vmatpush.msra.mxu0 %v36
  %1277 = vmatmul.f32.gmra.mxu0 %v1239
  %v1278 = vpop.f32.mrf.mxu0
  %v1279 = vadd.f32 %v1259, %v1278
  %1280 = vdwg.mxu0
  %v1281 = vmax.f32 %v1279, 0.0
  %v1282 = vmax.f32 %v1234, %v1281
  %s1283 = scalar_lea.vmem %s0, 848
  %v1284 = vld [vmem:[%s1283] sm:$0xff]
  %v1285 = vld [vmem:[%s1283 + $0x8] sm:$0xff]
  %v1287 = vsel %vm44, %v1285, 0
  %1289 = vmatpush.msra.mxu0 %v35
  %1290 = vmatpush.msra.mxu0 %v34
  %1291 = vmatpush.msra.mxu0 %v33
  %1292 = vmatpush.msra.mxu0 %v32
  %1293 = vmatpush.msra.mxu0 %v31
  %1294 = vmatpush.msra.mxu0 %v30
  %1295 = vmatpush.msra.mxu0 %v29
  %1296 = vmatpush.msra.mxu0 %v28
  %1297 = vmatpush.msra.mxu0 %v27
  %1298 = vmatpush.msra.mxu0 %v26
  %1299 = vmatpush.msra.mxu0 %v25
  %1300 = vmatpush.msra.mxu0 %v24
  %1301 = vmatpush.msra.mxu0 %v23
  %1302 = vmatpush.msra.mxu0 %v22
  %1303 = vmatpush.msra.mxu0 %v21
  %1304 = vmatpush.msra.mxu0 %v20
  %1305 = vmatmul.f32.gmra.mxu0 %v1284
  %v1306 = vpop.f32.mrf.mxu0
  %v1307 = vadd.f32 %v42, %v1306
  %1308 = vdwg.mxu0
  %1309 = vmatpush.msra.mxu0 0.0
  %1310 = vmatpush.msra.mxu0 0.0
  %1311 = vmatpush.msra.mxu0 0.0
  %1312 = vmatpush.msra.mxu0 0.0
  %1313 = vmatpush.msra.mxu0 0.0
  %1314 = vmatpush.msra.mxu0 0.0
  %1315 = vmatpush.msra.mxu0 0.0
  %1316 = vmatpush.msra.mxu0 0.0
  %1317 = vmatpush.msra.mxu0 0.0
  %1318 = vmatpush.msra.mxu0 0.0
  %1319 = vmatpush.msra.mxu0 0.0
  %1320 = vmatpush.msra.mxu0 0.0
  %1321 = vmatpush.msra.mxu0 0.0
  %1322 = vmatpush.msra.mxu0 0.0
  %1323 = vmatpush.msra.mxu0 %v37
  %1324 = vmatpush.msra.mxu0 %v36
  %1325 = vmatmul.f32.gmra.mxu0 %v1287
  %v1326 = vpop.f32.mrf.mxu0
  %v1327 = vadd.f32 %v1307, %v1326
  %1328 = vdwg.mxu0
  %v1329 = vmax.f32 %v1327, 0.0
  %v1330 = vmax.f32 %v1282, %v1329
  %s1331 = scalar_lea.vmem %s3, 160
  %v1332 = vld [vmem:[%s1331] sm:$0xff]
  %v1333 = vld [vmem:[%s1331 + $0x8] sm:$0xff]
  %v1334 = vld [vmem:[%s1331 + $0x10] sm:$0xff]
  %v1335 = vld [vmem:[%s1331 + $0x18] sm:$0xff]
  %v1337 = vsel %vm433, %v1330, 0
  %1339 = vmatpush.msra.mxu0 0.0
  %1340 = vmatpush.msra.mxu0 0.0
  %1341 = vmatpush.msra.mxu0 0.0
  %1342 = vmatpush.msra.mxu0 0.0
  %1343 = vmatpush.msra.mxu0 0.0
  %1344 = vmatpush.msra.mxu0 0.0
  %1345 = vmatpush.msra.mxu0 0.0
  %1346 = vmatpush.msra.mxu0 0.0
  %1347 = vmatpush.msra.mxu0 0.0
  %1348 = vmatpush.msra.mxu0 0.0
  %1349 = vmatpush.msra.mxu0 0.0
  %1350 = vmatpush.msra.mxu0 0.0
  %1351 = vmatpush.msra.mxu0 %v1335
  %1352 = vmatpush.msra.mxu0 %v1334
  %1353 = vmatpush.msra.mxu0 %v1333
  %1354 = vmatpush.msra.mxu0 %v1332
  %1355 = vmatmul.f32.gmra.mxu0 %v1337
  %v1356 = vpop.f32.mrf.mxu0
  %v1357 = vadd.f32 0.0, %v1356
  %1358 = vdwg.mxu0
  %v1359 = vadd.f32 %v1139, %v1357
  %s1360 = scalar_lea.vmem %s0, 96
  %v1361 = vld [vmem:[%s1360] sm:$0xff]
  %v1362 = vld [vmem:[%s1360 + $0x8] sm:$0xff]
  %v1364 = vsel %vm44, %v1362, 0
  %1366 = vmatpush.msra.mxu0 %v35
  %1367 = vmatpush.msra.mxu0 %v34
  %1368 = vmatpush.msra.mxu0 %v33
  %1369 = vmatpush.msra.mxu0 %v32
  %1370 = vmatpush.msra.mxu0 %v31
  %1371 = vmatpush.msra.mxu0 %v30
  %1372 = vmatpush.msra.mxu0 %v29
  %1373 = vmatpush.msra.mxu0 %v28
  %1374 = vmatpush.msra.mxu0 %v27
  %1375 = vmatpush.msra.mxu0 %v26
  %1376 = vmatpush.msra.mxu0 %v25
  %1377 = vmatpush.msra.mxu0 %v24
  %1378 = vmatpush.msra.mxu0 %v23
  %1379 = vmatpush.msra.mxu0 %v22
  %1380 = vmatpush.msra.mxu0 %v21
  %1381 = vmatpush.msra.mxu0 %v20
  %1382 = vmatmul.f32.gmra.mxu0 %v1361
  %v1383 = vpop.f32.mrf.mxu0
  %v1384 = vadd.f32 %v42, %v1383
  %1385 = vdwg.mxu0
  %1386 = vmatpush.msra.mxu0 0.0
  %1387 = vmatpush.msra.mxu0 0.0
  %1388 = vmatpush.msra.mxu0 0.0
  %1389 = vmatpush.msra.mxu0 0.0
  %1390 = vmatpush.msra.mxu0 0.0
  %1391 = vmatpush.msra.mxu0 0.0
  %1392 = vmatpush.msra.mxu0 0.0
  %1393 = vmatpush.msra.mxu0 0.0
  %1394 = vmatpush.msra.mxu0 0.0
  %1395 = vmatpush.msra.mxu0 0.0
  %1396 = vmatpush.msra.mxu0 0.0
  %1397 = vmatpush.msra.mxu0 0.0
  %1398 = vmatpush.msra.mxu0 0.0
  %1399 = vmatpush.msra.mxu0 0.0
  %1400 = vmatpush.msra.mxu0 %v37
  %1401 = vmatpush.msra.mxu0 %v36
  %1402 = vmatmul.f32.gmra.mxu0 %v1364
  %v1403 = vpop.f32.mrf.mxu0
  %v1404 = vadd.f32 %v1384, %v1403
  %1405 = vdwg.mxu0
  %v1406 = vmax.f32 %v1404, 0.0
  %s1407 = scalar_lea.vmem %s0, 352
  %v1408 = vld [vmem:[%s1407] sm:$0xff]
  %v1409 = vld [vmem:[%s1407 + $0x8] sm:$0xff]
  %v1411 = vsel %vm44, %v1409, 0
  %1413 = vmatpush.msra.mxu0 %v35
  %1414 = vmatpush.msra.mxu0 %v34
  %1415 = vmatpush.msra.mxu0 %v33
  %1416 = vmatpush.msra.mxu0 %v32
  %1417 = vmatpush.msra.mxu0 %v31
  %1418 = vmatpush.msra.mxu0 %v30
  %1419 = vmatpush.msra.mxu0 %v29
  %1420 = vmatpush.msra.mxu0 %v28
  %1421 = vmatpush.msra.mxu0 %v27
  %1422 = vmatpush.msra.mxu0 %v26
  %1423 = vmatpush.msra.mxu0 %v25
  %1424 = vmatpush.msra.mxu0 %v24
  %1425 = vmatpush.msra.mxu0 %v23
  %1426 = vmatpush.msra.mxu0 %v22
  %1427 = vmatpush.msra.mxu0 %v21
  %1428 = vmatpush.msra.mxu0 %v20
  %1429 = vmatmul.f32.gmra.mxu0 %v1408
  %v1430 = vpop.f32.mrf.mxu0
  %v1431 = vadd.f32 %v42, %v1430
  %1432 = vdwg.mxu0
  %1433 = vmatpush.msra.mxu0 0.0
  %1434 = vmatpush.msra.mxu0 0.0
  %1435 = vmatpush.msra.mxu0 0.0
  %1436 = vmatpush.msra.mxu0 0.0
  %1437 = vmatpush.msra.mxu0 0.0
  %1438 = vmatpush.msra.mxu0 0.0
  %1439 = vmatpush.msra.mxu0 0.0
  %1440 = vmatpush.msra.mxu0 0.0
  %1441 = vmatpush.msra.mxu0 0.0
  %1442 = vmatpush.msra.mxu0 0.0
  %1443 = vmatpush.msra.mxu0 0.0
  %1444 = vmatpush.msra.mxu0 0.0
  %1445 = vmatpush.msra.mxu0 0.0
  %1446 = vmatpush.msra.mxu0 0.0
  %1447 = vmatpush.msra.mxu0 %v37
  %1448 = vmatpush.msra.mxu0 %v36
  %1449 = vmatmul.f32.gmra.mxu0 %v1411
  %v1450 = vpop.f32.mrf.mxu0
  %v1451 = vadd.f32 %v1431, %v1450
  %1452 = vdwg.mxu0
  %v1453 = vmax.f32 %v1451, 0.0
  %v1454 = vmax.f32 %v1406, %v1453
  %s1455 = scalar_lea.vmem %s0, 608
  %v1456 = vld [vmem:[%s1455] sm:$0xff]
  %v1457 = vld [vmem:[%s1455 + $0x8] sm:$0xff]
  %v1459 = vsel %vm44, %v1457, 0
  %1461 = vmatpush.msra.mxu0 %v35
  %1462 = vmatpush.msra.mxu0 %v34
  %1463 = vmatpush.msra.mxu0 %v33
  %1464 = vmatpush.msra.mxu0 %v32
  %1465 = vmatpush.msra.mxu0 %v31
  %1466 = vmatpush.msra.mxu0 %v30
  %1467 = vmatpush.msra.mxu0 %v29
  %1468 = vmatpush.msra.mxu0 %v28
  %1469 = vmatpush.msra.mxu0 %v27
  %1470 = vmatpush.msra.mxu0 %v26
  %1471 = vmatpush.msra.mxu0 %v25
  %1472 = vmatpush.msra.mxu0 %v24
  %1473 = vmatpush.msra.mxu0 %v23
  %1474 = vmatpush.msra.mxu0 %v22
  %1475 = vmatpush.msra.mxu0 %v21
  %1476 = vmatpush.msra.mxu0 %v20
  %1477 = vmatmul.f32.gmra.mxu0 %v1456
  %v1478 = vpop.f32.mrf.mxu0
  %v1479 = vadd.f32 %v42, %v1478
  %1480 = vdwg.mxu0
  %1481 = vmatpush.msra.mxu0 0.0
  %1482 = vmatpush.msra.mxu0 0.0
  %1483 = vmatpush.msra.mxu0 0.0
  %1484 = vmatpush.msra.mxu0 0.0
  %1485 = vmatpush.msra.mxu0 0.0
  %1486 = vmatpush.msra.mxu0 0.0
  %1487 = vmatpush.msra.mxu0 0.0
  %1488 = vmatpush.msra.mxu0 0.0
  %1489 = vmatpush.msra.mxu0 0.0
  %1490 = vmatpush.msra.mxu0 0.0
  %1491 = vmatpush.msra.mxu0 0.0
  %1492 = vmatpush.msra.mxu0 0.0
  %1493 = vmatpush.msra.mxu0 0.0
  %1494 = vmatpush.msra.mxu0 0.0
  %1495 = vmatpush.msra.mxu0 %v37
  %1496 = vmatpush.msra.mxu0 %v36
  %1497 = vmatmul.f32.gmra.mxu0 %v1459
  %v1498 = vpop.f32.mrf.mxu0
  %v1499 = vadd.f32 %v1479, %v1498
  %1500 = vdwg.mxu0
  %v1501 = vmax.f32 %v1499, 0.0
  %v1502 = vmax.f32 %v1454, %v1501
  %s1503 = scalar_lea.vmem %s0, 864
  %v1504 = vld [vmem:[%s1503] sm:$0xff]
  %v1505 = vld [vmem:[%s1503 + $0x8] sm:$0xff]
  %v1507 = vsel %vm44, %v1505, 0
  %1509 = vmatpush.msra.mxu0 %v35
  %1510 = vmatpush.msra.mxu0 %v34
  %1511 = vmatpush.msra.mxu0 %v33
  %1512 = vmatpush.msra.mxu0 %v32
  %1513 = vmatpush.msra.mxu0 %v31
  %1514 = vmatpush.msra.mxu0 %v30
  %1515 = vmatpush.msra.mxu0 %v29
  %1516 = vmatpush.msra.mxu0 %v28
  %1517 = vmatpush.msra.mxu0 %v27
  %1518 = vmatpush.msra.mxu0 %v26
  %1519 = vmatpush.msra.mxu0 %v25
  %1520 = vmatpush.msra.mxu0 %v24
  %1521 = vmatpush.msra.mxu0 %v23
  %1522 = vmatpush.msra.mxu0 %v22
  %1523 = vmatpush.msra.mxu0 %v21
  %1524 = vmatpush.msra.mxu0 %v20
  %1525 = vmatmul.f32.gmra.mxu0 %v1504
  %v1526 = vpop.f32.mrf.mxu0
  %v1527 = vadd.f32 %v42, %v1526
  %1528 = vdwg.mxu0
  %1529 = vmatpush.msra.mxu0 0.0
  %1530 = vmatpush.msra.mxu0 0.0
  %1531 = vmatpush.msra.mxu0 0.0
  %1532 = vmatpush.msra.mxu0 0.0
  %1533 = vmatpush.msra.mxu0 0.0
  %1534 = vmatpush.msra.mxu0 0.0
  %1535 = vmatpush.msra.mxu0 0.0
  %1536 = vmatpush.msra.mxu0 0.0
  %1537 = vmatpush.msra.mxu0 0.0
  %1538 = vmatpush.msra.mxu0 0.0
  %1539 = vmatpush.msra.mxu0 0.0
  %1540 = vmatpush.msra.mxu0 0.0
  %1541 = vmatpush.msra.mxu0 0.0
  %1542 = vmatpush.msra.mxu0 0.0
  %1543 = vmatpush.msra.mxu0 %v37
  %1544 = vmatpush.msra.mxu0 %v36
  %1545 = vmatmul.f32.gmra.mxu0 %v1507
  %v1546 = vpop.f32.mrf.mxu0
  %v1547 = vadd.f32 %v1527, %v1546
  %1548 = vdwg.mxu0
  %v1549 = vmax.f32 %v1547, 0.0
  %v1550 = vmax.f32 %v1502, %v1549
  %s1551 = scalar_lea.vmem %s3, 192
  %v1552 = vld [vmem:[%s1551] sm:$0xff]
  %v1553 = vld [vmem:[%s1551 + $0x8] sm:$0xff]
  %v1554 = vld [vmem:[%s1551 + $0x10] sm:$0xff]
  %v1555 = vld [vmem:[%s1551 + $0x18] sm:$0xff]
  %v1557 = vsel %vm433, %v1550, 0
  %1559 = vmatpush.msra.mxu0 0.0
  %1560 = vmatpush.msra.mxu0 0.0
  %1561 = vmatpush.msra.mxu0 0.0
  %1562 = vmatpush.msra.mxu0 0.0
  %1563 = vmatpush.msra.mxu0 0.0
  %1564 = vmatpush.msra.mxu0 0.0
  %1565 = vmatpush.msra.mxu0 0.0
  %1566 = vmatpush.msra.mxu0 0.0
  %1567 = vmatpush.msra.mxu0 0.0
  %1568 = vmatpush.msra.mxu0 0.0
  %1569 = vmatpush.msra.mxu0 0.0
  %1570 = vmatpush.msra.mxu0 0.0
  %1571 = vmatpush.msra.mxu0 %v1555
  %1572 = vmatpush.msra.mxu0 %v1554
  %1573 = vmatpush.msra.mxu0 %v1553
  %1574 = vmatpush.msra.mxu0 %v1552
  %1575 = vmatmul.f32.gmra.mxu0 %v1557
  %v1576 = vpop.f32.mrf.mxu0
  %v1577 = vadd.f32 0.0, %v1576
  %1578 = vdwg.mxu0
  %v1579 = vadd.f32 %v1359, %v1577
  %s1580 = scalar_lea.vmem %s0, 112
  %v1581 = vld [vmem:[%s1580] sm:$0xff]
  %v1582 = vld [vmem:[%s1580 + $0x8] sm:$0xff]
  %v1584 = vsel %vm44, %v1582, 0
  %1586 = vmatpush.msra.mxu0 %v35
  %1587 = vmatpush.msra.mxu0 %v34
  %1588 = vmatpush.msra.mxu0 %v33
  %1589 = vmatpush.msra.mxu0 %v32
  %1590 = vmatpush.msra.mxu0 %v31
  %1591 = vmatpush.msra.mxu0 %v30
  %1592 = vmatpush.msra.mxu0 %v29
  %1593 = vmatpush.msra.mxu0 %v28
  %1594 = vmatpush.msra.mxu0 %v27
  %1595 = vmatpush.msra.mxu0 %v26
  %1596 = vmatpush.msra.mxu0 %v25
  %1597 = vmatpush.msra.mxu0 %v24
  %1598 = vmatpush.msra.mxu0 %v23
  %1599 = vmatpush.msra.mxu0 %v22
  %1600 = vmatpush.msra.mxu0 %v21
  %1601 = vmatpush.msra.mxu0 %v20
  %1602 = vmatmul.f32.gmra.mxu0 %v1581
  %v1603 = vpop.f32.mrf.mxu0
  %v1604 = vadd.f32 %v42, %v1603
  %1605 = vdwg.mxu0
  %1606 = vmatpush.msra.mxu0 0.0
  %1607 = vmatpush.msra.mxu0 0.0
  %1608 = vmatpush.msra.mxu0 0.0
  %1609 = vmatpush.msra.mxu0 0.0
  %1610 = vmatpush.msra.mxu0 0.0
  %1611 = vmatpush.msra.mxu0 0.0
  %1612 = vmatpush.msra.mxu0 0.0
  %1613 = vmatpush.msra.mxu0 0.0
  %1614 = vmatpush.msra.mxu0 0.0
  %1615 = vmatpush.msra.mxu0 0.0
  %1616 = vmatpush.msra.mxu0 0.0
  %1617 = vmatpush.msra.mxu0 0.0
  %1618 = vmatpush.msra.mxu0 0.0
  %1619 = vmatpush.msra.mxu0 0.0
  %1620 = vmatpush.msra.mxu0 %v37
  %1621 = vmatpush.msra.mxu0 %v36
  %1622 = vmatmul.f32.gmra.mxu0 %v1584
  %v1623 = vpop.f32.mrf.mxu0
  %v1624 = vadd.f32 %v1604, %v1623
  %1625 = vdwg.mxu0
  %v1626 = vmax.f32 %v1624, 0.0
  %s1627 = scalar_lea.vmem %s0, 368
  %v1628 = vld [vmem:[%s1627] sm:$0xff]
  %v1629 = vld [vmem:[%s1627 + $0x8] sm:$0xff]
  %v1631 = vsel %vm44, %v1629, 0
  %1633 = vmatpush.msra.mxu0 %v35
  %1634 = vmatpush.msra.mxu0 %v34
  %1635 = vmatpush.msra.mxu0 %v33
  %1636 = vmatpush.msra.mxu0 %v32
  %1637 = vmatpush.msra.mxu0 %v31
  %1638 = vmatpush.msra.mxu0 %v30
  %1639 = vmatpush.msra.mxu0 %v29
  %1640 = vmatpush.msra.mxu0 %v28
  %1641 = vmatpush.msra.mxu0 %v27
  %1642 = vmatpush.msra.mxu0 %v26
  %1643 = vmatpush.msra.mxu0 %v25
  %1644 = vmatpush.msra.mxu0 %v24
  %1645 = vmatpush.msra.mxu0 %v23
  %1646 = vmatpush.msra.mxu0 %v22
  %1647 = vmatpush.msra.mxu0 %v21
  %1648 = vmatpush.msra.mxu0 %v20
  %1649 = vmatmul.f32.gmra.mxu0 %v1628
  %v1650 = vpop.f32.mrf.mxu0
  %v1651 = vadd.f32 %v42, %v1650
  %1652 = vdwg.mxu0
  %1653 = vmatpush.msra.mxu0 0.0
  %1654 = vmatpush.msra.mxu0 0.0
  %1655 = vmatpush.msra.mxu0 0.0
  %1656 = vmatpush.msra.mxu0 0.0
  %1657 = vmatpush.msra.mxu0 0.0
  %1658 = vmatpush.msra.mxu0 0.0
  %1659 = vmatpush.msra.mxu0 0.0
  %1660 = vmatpush.msra.mxu0 0.0
  %1661 = vmatpush.msra.mxu0 0.0
  %1662 = vmatpush.msra.mxu0 0.0
  %1663 = vmatpush.msra.mxu0 0.0
  %1664 = vmatpush.msra.mxu0 0.0
  %1665 = vmatpush.msra.mxu0 0.0
  %1666 = vmatpush.msra.mxu0 0.0
  %1667 = vmatpush.msra.mxu0 %v37
  %1668 = vmatpush.msra.mxu0 %v36
  %1669 = vmatmul.f32.gmra.mxu0 %v1631
  %v1670 = vpop.f32.mrf.mxu0
  %v1671 = vadd.f32 %v1651, %v1670
  %1672 = vdwg.mxu0
  %v1673 = vmax.f32 %v1671, 0.0
  %v1674 = vmax.f32 %v1626, %v1673
  %s1675 = scalar_lea.vmem %s0, 624
  %v1676 = vld [vmem:[%s1675] sm:$0xff]
  %v1677 = vld [vmem:[%s1675 + $0x8] sm:$0xff]
  %v1679 = vsel %vm44, %v1677, 0
  %1681 = vmatpush.msra.mxu0 %v35
  %1682 = vmatpush.msra.mxu0 %v34
  %1683 = vmatpush.msra.mxu0 %v33
  %1684 = vmatpush.msra.mxu0 %v32
  %1685 = vmatpush.msra.mxu0 %v31
  %1686 = vmatpush.msra.mxu0 %v30
  %1687 = vmatpush.msra.mxu0 %v29
  %1688 = vmatpush.msra.mxu0 %v28
  %1689 = vmatpush.msra.mxu0 %v27
  %1690 = vmatpush.msra.mxu0 %v26
  %1691 = vmatpush.msra.mxu0 %v25
  %1692 = vmatpush.msra.mxu0 %v24
  %1693 = vmatpush.msra.mxu0 %v23
  %1694 = vmatpush.msra.mxu0 %v22
  %1695 = vmatpush.msra.mxu0 %v21
  %1696 = vmatpush.msra.mxu0 %v20
  %1697 = vmatmul.f32.gmra.mxu0 %v1676
  %v1698 = vpop.f32.mrf.mxu0
  %v1699 = vadd.f32 %v42, %v1698
  %1700 = vdwg.mxu0
  %1701 = vmatpush.msra.mxu0 0.0
  %1702 = vmatpush.msra.mxu0 0.0
  %1703 = vmatpush.msra.mxu0 0.0
  %1704 = vmatpush.msra.mxu0 0.0
  %1705 = vmatpush.msra.mxu0 0.0
  %1706 = vmatpush.msra.mxu0 0.0
  %1707 = vmatpush.msra.mxu0 0.0
  %1708 = vmatpush.msra.mxu0 0.0
  %1709 = vmatpush.msra.mxu0 0.0
  %1710 = vmatpush.msra.mxu0 0.0
  %1711 = vmatpush.msra.mxu0 0.0
  %1712 = vmatpush.msra.mxu0 0.0
  %1713 = vmatpush.msra.mxu0 0.0
  %1714 = vmatpush.msra.mxu0 0.0
  %1715 = vmatpush.msra.mxu0 %v37
  %1716 = vmatpush.msra.mxu0 %v36
  %1717 = vmatmul.f32.gmra.mxu0 %v1679
  %v1718 = vpop.f32.mrf.mxu0
  %v1719 = vadd.f32 %v1699, %v1718
  %1720 = vdwg.mxu0
  %v1721 = vmax.f32 %v1719, 0.0
  %v1722 = vmax.f32 %v1674, %v1721
  %s1723 = scalar_lea.vmem %s0, 880
  %v1724 = vld [vmem:[%s1723] sm:$0xff]
  %v1725 = vld [vmem:[%s1723 + $0x8] sm:$0xff]
  %v1727 = vsel %vm44, %v1725, 0
  %1729 = vmatpush.msra.mxu0 %v35
  %1730 = vmatpush.msra.mxu0 %v34
  %1731 = vmatpush.msra.mxu0 %v33
  %1732 = vmatpush.msra.mxu0 %v32
  %1733 = vmatpush.msra.mxu0 %v31
  %1734 = vmatpush.msra.mxu0 %v30
  %1735 = vmatpush.msra.mxu0 %v29
  %1736 = vmatpush.msra.mxu0 %v28
  %1737 = vmatpush.msra.mxu0 %v27
  %1738 = vmatpush.msra.mxu0 %v26
  %1739 = vmatpush.msra.mxu0 %v25
  %1740 = vmatpush.msra.mxu0 %v24
  %1741 = vmatpush.msra.mxu0 %v23
  %1742 = vmatpush.msra.mxu0 %v22
  %1743 = vmatpush.msra.mxu0 %v21
  %1744 = vmatpush.msra.mxu0 %v20
  %1745 = vmatmul.f32.gmra.mxu0 %v1724
  %v1746 = vpop.f32.mrf.mxu0
  %v1747 = vadd.f32 %v42, %v1746
  %1748 = vdwg.mxu0
  %1749 = vmatpush.msra.mxu0 0.0
  %1750 = vmatpush.msra.mxu0 0.0
  %1751 = vmatpush.msra.mxu0 0.0
  %1752 = vmatpush.msra.mxu0 0.0
  %1753 = vmatpush.msra.mxu0 0.0
  %1754 = vmatpush.msra.mxu0 0.0
  %1755 = vmatpush.msra.mxu0 0.0
  %1756 = vmatpush.msra.mxu0 0.0
  %1757 = vmatpush.msra.mxu0 0.0
  %1758 = vmatpush.msra.mxu0 0.0
  %1759 = vmatpush.msra.mxu0 0.0
  %1760 = vmatpush.msra.mxu0 0.0
  %1761 = vmatpush.msra.mxu0 0.0
  %1762 = vmatpush.msra.mxu0 0.0
  %1763 = vmatpush.msra.mxu0 %v37
  %1764 = vmatpush.msra.mxu0 %v36
  %1765 = vmatmul.f32.gmra.mxu0 %v1727
  %v1766 = vpop.f32.mrf.mxu0
  %v1767 = vadd.f32 %v1747, %v1766
  %1768 = vdwg.mxu0
  %v1769 = vmax.f32 %v1767, 0.0
  %v1770 = vmax.f32 %v1722, %v1769
  %s1771 = scalar_lea.vmem %s3, 224
  %v1772 = vld [vmem:[%s1771] sm:$0xff]
  %v1773 = vld [vmem:[%s1771 + $0x8] sm:$0xff]
  %v1774 = vld [vmem:[%s1771 + $0x10] sm:$0xff]
  %v1775 = vld [vmem:[%s1771 + $0x18] sm:$0xff]
  %v1777 = vsel %vm433, %v1770, 0
  %1779 = vmatpush.msra.mxu0 0.0
  %1780 = vmatpush.msra.mxu0 0.0
  %1781 = vmatpush.msra.mxu0 0.0
  %1782 = vmatpush.msra.mxu0 0.0
  %1783 = vmatpush.msra.mxu0 0.0
  %1784 = vmatpush.msra.mxu0 0.0
  %1785 = vmatpush.msra.mxu0 0.0
  %1786 = vmatpush.msra.mxu0 0.0
  %1787 = vmatpush.msra.mxu0 0.0
  %1788 = vmatpush.msra.mxu0 0.0
  %1789 = vmatpush.msra.mxu0 0.0
  %1790 = vmatpush.msra.mxu0 0.0
  %1791 = vmatpush.msra.mxu0 %v1775
  %1792 = vmatpush.msra.mxu0 %v1774
  %1793 = vmatpush.msra.mxu0 %v1773
  %1794 = vmatpush.msra.mxu0 %v1772
  %1795 = vmatmul.f32.gmra.mxu0 %v1777
  %v1796 = vpop.f32.mrf.mxu0
  %v1797 = vadd.f32 0.0, %v1796
  %1798 = vdwg.mxu0
  %v1799 = vadd.f32 %v1579, %v1797
  %s1800 = scalar_lea.vmem %s0, 128
  %v1801 = vld [vmem:[%s1800] sm:$0xff]
  %v1802 = vld [vmem:[%s1800 + $0x8] sm:$0xff]
  %v1804 = vsel %vm44, %v1802, 0
  %1806 = vmatpush.msra.mxu0 %v35
  %1807 = vmatpush.msra.mxu0 %v34
  %1808 = vmatpush.msra.mxu0 %v33
  %1809 = vmatpush.msra.mxu0 %v32
  %1810 = vmatpush.msra.mxu0 %v31
  %1811 = vmatpush.msra.mxu0 %v30
  %1812 = vmatpush.msra.mxu0 %v29
  %1813 = vmatpush.msra.mxu0 %v28
  %1814 = vmatpush.msra.mxu0 %v27
  %1815 = vmatpush.msra.mxu0 %v26
  %1816 = vmatpush.msra.mxu0 %v25
  %1817 = vmatpush.msra.mxu0 %v24
  %1818 = vmatpush.msra.mxu0 %v23
  %1819 = vmatpush.msra.mxu0 %v22
  %1820 = vmatpush.msra.mxu0 %v21
  %1821 = vmatpush.msra.mxu0 %v20
  %1822 = vmatmul.f32.gmra.mxu0 %v1801
  %v1823 = vpop.f32.mrf.mxu0
  %v1824 = vadd.f32 %v42, %v1823
  %1825 = vdwg.mxu0
  %1826 = vmatpush.msra.mxu0 0.0
  %1827 = vmatpush.msra.mxu0 0.0
  %1828 = vmatpush.msra.mxu0 0.0
  %1829 = vmatpush.msra.mxu0 0.0
  %1830 = vmatpush.msra.mxu0 0.0
  %1831 = vmatpush.msra.mxu0 0.0
  %1832 = vmatpush.msra.mxu0 0.0
  %1833 = vmatpush.msra.mxu0 0.0
  %1834 = vmatpush.msra.mxu0 0.0
  %1835 = vmatpush.msra.mxu0 0.0
  %1836 = vmatpush.msra.mxu0 0.0
  %1837 = vmatpush.msra.mxu0 0.0
  %1838 = vmatpush.msra.mxu0 0.0
  %1839 = vmatpush.msra.mxu0 0.0
  %1840 = vmatpush.msra.mxu0 %v37
  %1841 = vmatpush.msra.mxu0 %v36
  %1842 = vmatmul.f32.gmra.mxu0 %v1804
  %v1843 = vpop.f32.mrf.mxu0
  %v1844 = vadd.f32 %v1824, %v1843
  %1845 = vdwg.mxu0
  %v1846 = vmax.f32 %v1844, 0.0
  %s1847 = scalar_lea.vmem %s0, 384
  %v1848 = vld [vmem:[%s1847] sm:$0xff]
  %v1849 = vld [vmem:[%s1847 + $0x8] sm:$0xff]
  %v1851 = vsel %vm44, %v1849, 0
  %1853 = vmatpush.msra.mxu0 %v35
  %1854 = vmatpush.msra.mxu0 %v34
  %1855 = vmatpush.msra.mxu0 %v33
  %1856 = vmatpush.msra.mxu0 %v32
  %1857 = vmatpush.msra.mxu0 %v31
  %1858 = vmatpush.msra.mxu0 %v30
  %1859 = vmatpush.msra.mxu0 %v29
  %1860 = vmatpush.msra.mxu0 %v28
  %1861 = vmatpush.msra.mxu0 %v27
  %1862 = vmatpush.msra.mxu0 %v26
  %1863 = vmatpush.msra.mxu0 %v25
  %1864 = vmatpush.msra.mxu0 %v24
  %1865 = vmatpush.msra.mxu0 %v23
  %1866 = vmatpush.msra.mxu0 %v22
  %1867 = vmatpush.msra.mxu0 %v21
  %1868 = vmatpush.msra.mxu0 %v20
  %1869 = vmatmul.f32.gmra.mxu0 %v1848
  %v1870 = vpop.f32.mrf.mxu0
  %v1871 = vadd.f32 %v42, %v1870
  %1872 = vdwg.mxu0
  %1873 = vmatpush.msra.mxu0 0.0
  %1874 = vmatpush.msra.mxu0 0.0
  %1875 = vmatpush.msra.mxu0 0.0
  %1876 = vmatpush.msra.mxu0 0.0
  %1877 = vmatpush.msra.mxu0 0.0
  %1878 = vmatpush.msra.mxu0 0.0
  %1879 = vmatpush.msra.mxu0 0.0
  %1880 = vmatpush.msra.mxu0 0.0
  %1881 = vmatpush.msra.mxu0 0.0
  %1882 = vmatpush.msra.mxu0 0.0
  %1883 = vmatpush.msra.mxu0 0.0
  %1884 = vmatpush.msra.mxu0 0.0
  %1885 = vmatpush.msra.mxu0 0.0
  %1886 = vmatpush.msra.mxu0 0.0
  %1887 = vmatpush.msra.mxu0 %v37
  %1888 = vmatpush.msra.mxu0 %v36
  %1889 = vmatmul.f32.gmra.mxu0 %v1851
  %v1890 = vpop.f32.mrf.mxu0
  %v1891 = vadd.f32 %v1871, %v1890
  %1892 = vdwg.mxu0
  %v1893 = vmax.f32 %v1891, 0.0
  %v1894 = vmax.f32 %v1846, %v1893
  %s1895 = scalar_lea.vmem %s0, 640
  %v1896 = vld [vmem:[%s1895] sm:$0xff]
  %v1897 = vld [vmem:[%s1895 + $0x8] sm:$0xff]
  %v1899 = vsel %vm44, %v1897, 0
  %1901 = vmatpush.msra.mxu0 %v35
  %1902 = vmatpush.msra.mxu0 %v34
  %1903 = vmatpush.msra.mxu0 %v33
  %1904 = vmatpush.msra.mxu0 %v32
  %1905 = vmatpush.msra.mxu0 %v31
  %1906 = vmatpush.msra.mxu0 %v30
  %1907 = vmatpush.msra.mxu0 %v29
  %1908 = vmatpush.msra.mxu0 %v28
  %1909 = vmatpush.msra.mxu0 %v27
  %1910 = vmatpush.msra.mxu0 %v26
  %1911 = vmatpush.msra.mxu0 %v25
  %1912 = vmatpush.msra.mxu0 %v24
  %1913 = vmatpush.msra.mxu0 %v23
  %1914 = vmatpush.msra.mxu0 %v22
  %1915 = vmatpush.msra.mxu0 %v21
  %1916 = vmatpush.msra.mxu0 %v20
  %1917 = vmatmul.f32.gmra.mxu0 %v1896
  %v1918 = vpop.f32.mrf.mxu0
  %v1919 = vadd.f32 %v42, %v1918
  %1920 = vdwg.mxu0
  %1921 = vmatpush.msra.mxu0 0.0
  %1922 = vmatpush.msra.mxu0 0.0
  %1923 = vmatpush.msra.mxu0 0.0
  %1924 = vmatpush.msra.mxu0 0.0
  %1925 = vmatpush.msra.mxu0 0.0
  %1926 = vmatpush.msra.mxu0 0.0
  %1927 = vmatpush.msra.mxu0 0.0
  %1928 = vmatpush.msra.mxu0 0.0
  %1929 = vmatpush.msra.mxu0 0.0
  %1930 = vmatpush.msra.mxu0 0.0
  %1931 = vmatpush.msra.mxu0 0.0
  %1932 = vmatpush.msra.mxu0 0.0
  %1933 = vmatpush.msra.mxu0 0.0
  %1934 = vmatpush.msra.mxu0 0.0
  %1935 = vmatpush.msra.mxu0 %v37
  %1936 = vmatpush.msra.mxu0 %v36
  %1937 = vmatmul.f32.gmra.mxu0 %v1899
  %v1938 = vpop.f32.mrf.mxu0
  %v1939 = vadd.f32 %v1919, %v1938
  %1940 = vdwg.mxu0
  %v1941 = vmax.f32 %v1939, 0.0
  %v1942 = vmax.f32 %v1894, %v1941
  %s1943 = scalar_lea.vmem %s0, 896
  %v1944 = vld [vmem:[%s1943] sm:$0xff]
  %v1945 = vld [vmem:[%s1943 + $0x8] sm:$0xff]
  %v1947 = vsel %vm44, %v1945, 0
  %1949 = vmatpush.msra.mxu0 %v35
  %1950 = vmatpush.msra.mxu0 %v34
  %1951 = vmatpush.msra.mxu0 %v33
  %1952 = vmatpush.msra.mxu0 %v32
  %1953 = vmatpush.msra.mxu0 %v31
  %1954 = vmatpush.msra.mxu0 %v30
  %1955 = vmatpush.msra.mxu0 %v29
  %1956 = vmatpush.msra.mxu0 %v28
  %1957 = vmatpush.msra.mxu0 %v27
  %1958 = vmatpush.msra.mxu0 %v26
  %1959 = vmatpush.msra.mxu0 %v25
  %1960 = vmatpush.msra.mxu0 %v24
  %1961 = vmatpush.msra.mxu0 %v23
  %1962 = vmatpush.msra.mxu0 %v22
  %1963 = vmatpush.msra.mxu0 %v21
  %1964 = vmatpush.msra.mxu0 %v20
  %1965 = vmatmul.f32.gmra.mxu0 %v1944
  %v1966 = vpop.f32.mrf.mxu0
  %v1967 = vadd.f32 %v42, %v1966
  %1968 = vdwg.mxu0
  %1969 = vmatpush.msra.mxu0 0.0
  %1970 = vmatpush.msra.mxu0 0.0
  %1971 = vmatpush.msra.mxu0 0.0
  %1972 = vmatpush.msra.mxu0 0.0
  %1973 = vmatpush.msra.mxu0 0.0
  %1974 = vmatpush.msra.mxu0 0.0
  %1975 = vmatpush.msra.mxu0 0.0
  %1976 = vmatpush.msra.mxu0 0.0
  %1977 = vmatpush.msra.mxu0 0.0
  %1978 = vmatpush.msra.mxu0 0.0
  %1979 = vmatpush.msra.mxu0 0.0
  %1980 = vmatpush.msra.mxu0 0.0
  %1981 = vmatpush.msra.mxu0 0.0
  %1982 = vmatpush.msra.mxu0 0.0
  %1983 = vmatpush.msra.mxu0 %v37
  %1984 = vmatpush.msra.mxu0 %v36
  %1985 = vmatmul.f32.gmra.mxu0 %v1947
  %v1986 = vpop.f32.mrf.mxu0
  %v1987 = vadd.f32 %v1967, %v1986
  %1988 = vdwg.mxu0
  %v1989 = vmax.f32 %v1987, 0.0
  %v1990 = vmax.f32 %v1942, %v1989
  %s1991 = scalar_lea.vmem %s3, 256
  %v1992 = vld [vmem:[%s1991] sm:$0xff]
  %v1993 = vld [vmem:[%s1991 + $0x8] sm:$0xff]
  %v1994 = vld [vmem:[%s1991 + $0x10] sm:$0xff]
  %v1995 = vld [vmem:[%s1991 + $0x18] sm:$0xff]
  %v1997 = vsel %vm433, %v1990, 0
  %1999 = vmatpush.msra.mxu0 0.0
  %2000 = vmatpush.msra.mxu0 0.0
  %2001 = vmatpush.msra.mxu0 0.0
  %2002 = vmatpush.msra.mxu0 0.0
  %2003 = vmatpush.msra.mxu0 0.0
  %2004 = vmatpush.msra.mxu0 0.0
  %2005 = vmatpush.msra.mxu0 0.0
  %2006 = vmatpush.msra.mxu0 0.0
  %2007 = vmatpush.msra.mxu0 0.0
  %2008 = vmatpush.msra.mxu0 0.0
  %2009 = vmatpush.msra.mxu0 0.0
  %2010 = vmatpush.msra.mxu0 0.0
  %2011 = vmatpush.msra.mxu0 %v1995
  %2012 = vmatpush.msra.mxu0 %v1994
  %2013 = vmatpush.msra.mxu0 %v1993
  %2014 = vmatpush.msra.mxu0 %v1992
  %2015 = vmatmul.f32.gmra.mxu0 %v1997
  %v2016 = vpop.f32.mrf.mxu0
  %v2017 = vadd.f32 0.0, %v2016
  %2018 = vdwg.mxu0
  %v2019 = vadd.f32 %v1799, %v2017
  %s2020 = scalar_lea.vmem %s0, 144
  %v2021 = vld [vmem:[%s2020] sm:$0xff]
  %v2022 = vld [vmem:[%s2020 + $0x8] sm:$0xff]
  %v2024 = vsel %vm44, %v2022, 0
  %2026 = vmatpush.msra.mxu0 %v35
  %2027 = vmatpush.msra.mxu0 %v34
  %2028 = vmatpush.msra.mxu0 %v33
  %2029 = vmatpush.msra.mxu0 %v32
  %2030 = vmatpush.msra.mxu0 %v31
  %2031 = vmatpush.msra.mxu0 %v30
  %2032 = vmatpush.msra.mxu0 %v29
  %2033 = vmatpush.msra.mxu0 %v28
  %2034 = vmatpush.msra.mxu0 %v27
  %2035 = vmatpush.msra.mxu0 %v26
  %2036 = vmatpush.msra.mxu0 %v25
  %2037 = vmatpush.msra.mxu0 %v24
  %2038 = vmatpush.msra.mxu0 %v23
  %2039 = vmatpush.msra.mxu0 %v22
  %2040 = vmatpush.msra.mxu0 %v21
  %2041 = vmatpush.msra.mxu0 %v20
  %2042 = vmatmul.f32.gmra.mxu0 %v2021
  %v2043 = vpop.f32.mrf.mxu0
  %v2044 = vadd.f32 %v42, %v2043
  %2045 = vdwg.mxu0
  %2046 = vmatpush.msra.mxu0 0.0
  %2047 = vmatpush.msra.mxu0 0.0
  %2048 = vmatpush.msra.mxu0 0.0
  %2049 = vmatpush.msra.mxu0 0.0
  %2050 = vmatpush.msra.mxu0 0.0
  %2051 = vmatpush.msra.mxu0 0.0
  %2052 = vmatpush.msra.mxu0 0.0
  %2053 = vmatpush.msra.mxu0 0.0
  %2054 = vmatpush.msra.mxu0 0.0
  %2055 = vmatpush.msra.mxu0 0.0
  %2056 = vmatpush.msra.mxu0 0.0
  %2057 = vmatpush.msra.mxu0 0.0
  %2058 = vmatpush.msra.mxu0 0.0
  %2059 = vmatpush.msra.mxu0 0.0
  %2060 = vmatpush.msra.mxu0 %v37
  %2061 = vmatpush.msra.mxu0 %v36
  %2062 = vmatmul.f32.gmra.mxu0 %v2024
  %v2063 = vpop.f32.mrf.mxu0
  %v2064 = vadd.f32 %v2044, %v2063
  %2065 = vdwg.mxu0
  %v2066 = vmax.f32 %v2064, 0.0
  %s2067 = scalar_lea.vmem %s0, 400
  %v2068 = vld [vmem:[%s2067] sm:$0xff]
  %v2069 = vld [vmem:[%s2067 + $0x8] sm:$0xff]
  %v2071 = vsel %vm44, %v2069, 0
  %2073 = vmatpush.msra.mxu0 %v35
  %2074 = vmatpush.msra.mxu0 %v34
  %2075 = vmatpush.msra.mxu0 %v33
  %2076 = vmatpush.msra.mxu0 %v32
  %2077 = vmatpush.msra.mxu0 %v31
  %2078 = vmatpush.msra.mxu0 %v30
  %2079 = vmatpush.msra.mxu0 %v29
  %2080 = vmatpush.msra.mxu0 %v28
  %2081 = vmatpush.msra.mxu0 %v27
  %2082 = vmatpush.msra.mxu0 %v26
  %2083 = vmatpush.msra.mxu0 %v25
  %2084 = vmatpush.msra.mxu0 %v24
  %2085 = vmatpush.msra.mxu0 %v23
  %2086 = vmatpush.msra.mxu0 %v22
  %2087 = vmatpush.msra.mxu0 %v21
  %2088 = vmatpush.msra.mxu0 %v20
  %2089 = vmatmul.f32.gmra.mxu0 %v2068
  %v2090 = vpop.f32.mrf.mxu0
  %v2091 = vadd.f32 %v42, %v2090
  %2092 = vdwg.mxu0
  %2093 = vmatpush.msra.mxu0 0.0
  %2094 = vmatpush.msra.mxu0 0.0
  %2095 = vmatpush.msra.mxu0 0.0
  %2096 = vmatpush.msra.mxu0 0.0
  %2097 = vmatpush.msra.mxu0 0.0
  %2098 = vmatpush.msra.mxu0 0.0
  %2099 = vmatpush.msra.mxu0 0.0
  %2100 = vmatpush.msra.mxu0 0.0
  %2101 = vmatpush.msra.mxu0 0.0
  %2102 = vmatpush.msra.mxu0 0.0
  %2103 = vmatpush.msra.mxu0 0.0
  %2104 = vmatpush.msra.mxu0 0.0
  %2105 = vmatpush.msra.mxu0 0.0
  %2106 = vmatpush.msra.mxu0 0.0
  %2107 = vmatpush.msra.mxu0 %v37
  %2108 = vmatpush.msra.mxu0 %v36
  %2109 = vmatmul.f32.gmra.mxu0 %v2071
  %v2110 = vpop.f32.mrf.mxu0
  %v2111 = vadd.f32 %v2091, %v2110
  %2112 = vdwg.mxu0
  %v2113 = vmax.f32 %v2111, 0.0
  %v2114 = vmax.f32 %v2066, %v2113
  %s2115 = scalar_lea.vmem %s0, 656
  %v2116 = vld [vmem:[%s2115] sm:$0xff]
  %v2117 = vld [vmem:[%s2115 + $0x8] sm:$0xff]
  %v2119 = vsel %vm44, %v2117, 0
  %2121 = vmatpush.msra.mxu0 %v35
  %2122 = vmatpush.msra.mxu0 %v34
  %2123 = vmatpush.msra.mxu0 %v33
  %2124 = vmatpush.msra.mxu0 %v32
  %2125 = vmatpush.msra.mxu0 %v31
  %2126 = vmatpush.msra.mxu0 %v30
  %2127 = vmatpush.msra.mxu0 %v29
  %2128 = vmatpush.msra.mxu0 %v28
  %2129 = vmatpush.msra.mxu0 %v27
  %2130 = vmatpush.msra.mxu0 %v26
  %2131 = vmatpush.msra.mxu0 %v25
  %2132 = vmatpush.msra.mxu0 %v24
  %2133 = vmatpush.msra.mxu0 %v23
  %2134 = vmatpush.msra.mxu0 %v22
  %2135 = vmatpush.msra.mxu0 %v21
  %2136 = vmatpush.msra.mxu0 %v20
  %2137 = vmatmul.f32.gmra.mxu0 %v2116
  %v2138 = vpop.f32.mrf.mxu0
  %v2139 = vadd.f32 %v42, %v2138
  %2140 = vdwg.mxu0
  %2141 = vmatpush.msra.mxu0 0.0
  %2142 = vmatpush.msra.mxu0 0.0
  %2143 = vmatpush.msra.mxu0 0.0
  %2144 = vmatpush.msra.mxu0 0.0
  %2145 = vmatpush.msra.mxu0 0.0
  %2146 = vmatpush.msra.mxu0 0.0
  %2147 = vmatpush.msra.mxu0 0.0
  %2148 = vmatpush.msra.mxu0 0.0
  %2149 = vmatpush.msra.mxu0 0.0
  %2150 = vmatpush.msra.mxu0 0.0
  %2151 = vmatpush.msra.mxu0 0.0
  %2152 = vmatpush.msra.mxu0 0.0
  %2153 = vmatpush.msra.mxu0 0.0
  %2154 = vmatpush.msra.mxu0 0.0
  %2155 = vmatpush.msra.mxu0 %v37
  %2156 = vmatpush.msra.mxu0 %v36
  %2157 = vmatmul.f32.gmra.mxu0 %v2119
  %v2158 = vpop.f32.mrf.mxu0
  %v2159 = vadd.f32 %v2139, %v2158
  %2160 = vdwg.mxu0
  %v2161 = vmax.f32 %v2159, 0.0
  %v2162 = vmax.f32 %v2114, %v2161
  %s2163 = scalar_lea.vmem %s0, 912
  %v2164 = vld [vmem:[%s2163] sm:$0xff]
  %v2165 = vld [vmem:[%s2163 + $0x8] sm:$0xff]
  %v2167 = vsel %vm44, %v2165, 0
  %2169 = vmatpush.msra.mxu0 %v35
  %2170 = vmatpush.msra.mxu0 %v34
  %2171 = vmatpush.msra.mxu0 %v33
  %2172 = vmatpush.msra.mxu0 %v32
  %2173 = vmatpush.msra.mxu0 %v31
  %2174 = vmatpush.msra.mxu0 %v30
  %2175 = vmatpush.msra.mxu0 %v29
  %2176 = vmatpush.msra.mxu0 %v28
  %2177 = vmatpush.msra.mxu0 %v27
  %2178 = vmatpush.msra.mxu0 %v26
  %2179 = vmatpush.msra.mxu0 %v25
  %2180 = vmatpush.msra.mxu0 %v24
  %2181 = vmatpush.msra.mxu0 %v23
  %2182 = vmatpush.msra.mxu0 %v22
  %2183 = vmatpush.msra.mxu0 %v21
  %2184 = vmatpush.msra.mxu0 %v20
  %2185 = vmatmul.f32.gmra.mxu0 %v2164
  %v2186 = vpop.f32.mrf.mxu0
  %v2187 = vadd.f32 %v42, %v2186
  %2188 = vdwg.mxu0
  %2189 = vmatpush.msra.mxu0 0.0
  %2190 = vmatpush.msra.mxu0 0.0
  %2191 = vmatpush.msra.mxu0 0.0
  %2192 = vmatpush.msra.mxu0 0.0
  %2193 = vmatpush.msra.mxu0 0.0
  %2194 = vmatpush.msra.mxu0 0.0
  %2195 = vmatpush.msra.mxu0 0.0
  %2196 = vmatpush.msra.mxu0 0.0
  %2197 = vmatpush.msra.mxu0 0.0
  %2198 = vmatpush.msra.mxu0 0.0
  %2199 = vmatpush.msra.mxu0 0.0
  %2200 = vmatpush.msra.mxu0 0.0
  %2201 = vmatpush.msra.mxu0 0.0
  %2202 = vmatpush.msra.mxu0 0.0
  %2203 = vmatpush.msra.mxu0 %v37
  %2204 = vmatpush.msra.mxu0 %v36
  %2205 = vmatmul.f32.gmra.mxu0 %v2167
  %v2206 = vpop.f32.mrf.mxu0
  %v2207 = vadd.f32 %v2187, %v2206
  %2208 = vdwg.mxu0
  %v2209 = vmax.f32 %v2207, 0.0
  %v2210 = vmax.f32 %v2162, %v2209
  %s2211 = scalar_lea.vmem %s3, 288
  %v2212 = vld [vmem:[%s2211] sm:$0xff]
  %v2213 = vld [vmem:[%s2211 + $0x8] sm:$0xff]
  %v2214 = vld [vmem:[%s2211 + $0x10] sm:$0xff]
  %v2215 = vld [vmem:[%s2211 + $0x18] sm:$0xff]
  %v2217 = vsel %vm433, %v2210, 0
  %2219 = vmatpush.msra.mxu0 0.0
  %2220 = vmatpush.msra.mxu0 0.0
  %2221 = vmatpush.msra.mxu0 0.0
  %2222 = vmatpush.msra.mxu0 0.0
  %2223 = vmatpush.msra.mxu0 0.0
  %2224 = vmatpush.msra.mxu0 0.0
  %2225 = vmatpush.msra.mxu0 0.0
  %2226 = vmatpush.msra.mxu0 0.0
  %2227 = vmatpush.msra.mxu0 0.0
  %2228 = vmatpush.msra.mxu0 0.0
  %2229 = vmatpush.msra.mxu0 0.0
  %2230 = vmatpush.msra.mxu0 0.0
  %2231 = vmatpush.msra.mxu0 %v2215
  %2232 = vmatpush.msra.mxu0 %v2214
  %2233 = vmatpush.msra.mxu0 %v2213
  %2234 = vmatpush.msra.mxu0 %v2212
  %2235 = vmatmul.f32.gmra.mxu0 %v2217
  %v2236 = vpop.f32.mrf.mxu0
  %v2237 = vadd.f32 0.0, %v2236
  %2238 = vdwg.mxu0
  %v2239 = vadd.f32 %v2019, %v2237
  %s2240 = scalar_lea.vmem %s0, 160
  %v2241 = vld [vmem:[%s2240] sm:$0xff]
  %v2242 = vld [vmem:[%s2240 + $0x8] sm:$0xff]
  %v2244 = vsel %vm44, %v2242, 0
  %2246 = vmatpush.msra.mxu0 %v35
  %2247 = vmatpush.msra.mxu0 %v34
  %2248 = vmatpush.msra.mxu0 %v33
  %2249 = vmatpush.msra.mxu0 %v32
  %2250 = vmatpush.msra.mxu0 %v31
  %2251 = vmatpush.msra.mxu0 %v30
  %2252 = vmatpush.msra.mxu0 %v29
  %2253 = vmatpush.msra.mxu0 %v28
  %2254 = vmatpush.msra.mxu0 %v27
  %2255 = vmatpush.msra.mxu0 %v26
  %2256 = vmatpush.msra.mxu0 %v25
  %2257 = vmatpush.msra.mxu0 %v24
  %2258 = vmatpush.msra.mxu0 %v23
  %2259 = vmatpush.msra.mxu0 %v22
  %2260 = vmatpush.msra.mxu0 %v21
  %2261 = vmatpush.msra.mxu0 %v20
  %2262 = vmatmul.f32.gmra.mxu0 %v2241
  %v2263 = vpop.f32.mrf.mxu0
  %v2264 = vadd.f32 %v42, %v2263
  %2265 = vdwg.mxu0
  %2266 = vmatpush.msra.mxu0 0.0
  %2267 = vmatpush.msra.mxu0 0.0
  %2268 = vmatpush.msra.mxu0 0.0
  %2269 = vmatpush.msra.mxu0 0.0
  %2270 = vmatpush.msra.mxu0 0.0
  %2271 = vmatpush.msra.mxu0 0.0
  %2272 = vmatpush.msra.mxu0 0.0
  %2273 = vmatpush.msra.mxu0 0.0
  %2274 = vmatpush.msra.mxu0 0.0
  %2275 = vmatpush.msra.mxu0 0.0
  %2276 = vmatpush.msra.mxu0 0.0
  %2277 = vmatpush.msra.mxu0 0.0
  %2278 = vmatpush.msra.mxu0 0.0
  %2279 = vmatpush.msra.mxu0 0.0
  %2280 = vmatpush.msra.mxu0 %v37
  %2281 = vmatpush.msra.mxu0 %v36
  %2282 = vmatmul.f32.gmra.mxu0 %v2244
  %v2283 = vpop.f32.mrf.mxu0
  %v2284 = vadd.f32 %v2264, %v2283
  %2285 = vdwg.mxu0
  %v2286 = vmax.f32 %v2284, 0.0
  %s2287 = scalar_lea.vmem %s0, 416
  %v2288 = vld [vmem:[%s2287] sm:$0xff]
  %v2289 = vld [vmem:[%s2287 + $0x8] sm:$0xff]
  %v2291 = vsel %vm44, %v2289, 0
  %2293 = vmatpush.msra.mxu0 %v35
  %2294 = vmatpush.msra.mxu0 %v34
  %2295 = vmatpush.msra.mxu0 %v33
  %2296 = vmatpush.msra.mxu0 %v32
  %2297 = vmatpush.msra.mxu0 %v31
  %2298 = vmatpush.msra.mxu0 %v30
  %2299 = vmatpush.msra.mxu0 %v29
  %2300 = vmatpush.msra.mxu0 %v28
  %2301 = vmatpush.msra.mxu0 %v27
  %2302 = vmatpush.msra.mxu0 %v26
  %2303 = vmatpush.msra.mxu0 %v25
  %2304 = vmatpush.msra.mxu0 %v24
  %2305 = vmatpush.msra.mxu0 %v23
  %2306 = vmatpush.msra.mxu0 %v22
  %2307 = vmatpush.msra.mxu0 %v21
  %2308 = vmatpush.msra.mxu0 %v20
  %2309 = vmatmul.f32.gmra.mxu0 %v2288
  %v2310 = vpop.f32.mrf.mxu0
  %v2311 = vadd.f32 %v42, %v2310
  %2312 = vdwg.mxu0
  %2313 = vmatpush.msra.mxu0 0.0
  %2314 = vmatpush.msra.mxu0 0.0
  %2315 = vmatpush.msra.mxu0 0.0
  %2316 = vmatpush.msra.mxu0 0.0
  %2317 = vmatpush.msra.mxu0 0.0
  %2318 = vmatpush.msra.mxu0 0.0
  %2319 = vmatpush.msra.mxu0 0.0
  %2320 = vmatpush.msra.mxu0 0.0
  %2321 = vmatpush.msra.mxu0 0.0
  %2322 = vmatpush.msra.mxu0 0.0
  %2323 = vmatpush.msra.mxu0 0.0
  %2324 = vmatpush.msra.mxu0 0.0
  %2325 = vmatpush.msra.mxu0 0.0
  %2326 = vmatpush.msra.mxu0 0.0
  %2327 = vmatpush.msra.mxu0 %v37
  %2328 = vmatpush.msra.mxu0 %v36
  %2329 = vmatmul.f32.gmra.mxu0 %v2291
  %v2330 = vpop.f32.mrf.mxu0
  %v2331 = vadd.f32 %v2311, %v2330
  %2332 = vdwg.mxu0
  %v2333 = vmax.f32 %v2331, 0.0
  %v2334 = vmax.f32 %v2286, %v2333
  %s2335 = scalar_lea.vmem %s0, 672
  %v2336 = vld [vmem:[%s2335] sm:$0xff]
  %v2337 = vld [vmem:[%s2335 + $0x8] sm:$0xff]
  %v2339 = vsel %vm44, %v2337, 0
  %2341 = vmatpush.msra.mxu0 %v35
  %2342 = vmatpush.msra.mxu0 %v34
  %2343 = vmatpush.msra.mxu0 %v33
  %2344 = vmatpush.msra.mxu0 %v32
  %2345 = vmatpush.msra.mxu0 %v31
  %2346 = vmatpush.msra.mxu0 %v30
  %2347 = vmatpush.msra.mxu0 %v29
  %2348 = vmatpush.msra.mxu0 %v28
  %2349 = vmatpush.msra.mxu0 %v27
  %2350 = vmatpush.msra.mxu0 %v26
  %2351 = vmatpush.msra.mxu0 %v25
  %2352 = vmatpush.msra.mxu0 %v24
  %2353 = vmatpush.msra.mxu0 %v23
  %2354 = vmatpush.msra.mxu0 %v22
  %2355 = vmatpush.msra.mxu0 %v21
  %2356 = vmatpush.msra.mxu0 %v20
  %2357 = vmatmul.f32.gmra.mxu0 %v2336
  %v2358 = vpop.f32.mrf.mxu0
  %v2359 = vadd.f32 %v42, %v2358
  %2360 = vdwg.mxu0
  %2361 = vmatpush.msra.mxu0 0.0
  %2362 = vmatpush.msra.mxu0 0.0
  %2363 = vmatpush.msra.mxu0 0.0
  %2364 = vmatpush.msra.mxu0 0.0
  %2365 = vmatpush.msra.mxu0 0.0
  %2366 = vmatpush.msra.mxu0 0.0
  %2367 = vmatpush.msra.mxu0 0.0
  %2368 = vmatpush.msra.mxu0 0.0
  %2369 = vmatpush.msra.mxu0 0.0
  %2370 = vmatpush.msra.mxu0 0.0
  %2371 = vmatpush.msra.mxu0 0.0
  %2372 = vmatpush.msra.mxu0 0.0
  %2373 = vmatpush.msra.mxu0 0.0
  %2374 = vmatpush.msra.mxu0 0.0
  %2375 = vmatpush.msra.mxu0 %v37
  %2376 = vmatpush.msra.mxu0 %v36
  %2377 = vmatmul.f32.gmra.mxu0 %v2339
  %v2378 = vpop.f32.mrf.mxu0
  %v2379 = vadd.f32 %v2359, %v2378
  %2380 = vdwg.mxu0
  %v2381 = vmax.f32 %v2379, 0.0
  %v2382 = vmax.f32 %v2334, %v2381
  %s2383 = scalar_lea.vmem %s0, 928
  %v2384 = vld [vmem:[%s2383] sm:$0xff]
  %v2385 = vld [vmem:[%s2383 + $0x8] sm:$0xff]
  %v2387 = vsel %vm44, %v2385, 0
  %2389 = vmatpush.msra.mxu0 %v35
  %2390 = vmatpush.msra.mxu0 %v34
  %2391 = vmatpush.msra.mxu0 %v33
  %2392 = vmatpush.msra.mxu0 %v32
  %2393 = vmatpush.msra.mxu0 %v31
  %2394 = vmatpush.msra.mxu0 %v30
  %2395 = vmatpush.msra.mxu0 %v29
  %2396 = vmatpush.msra.mxu0 %v28
  %2397 = vmatpush.msra.mxu0 %v27
  %2398 = vmatpush.msra.mxu0 %v26
  %2399 = vmatpush.msra.mxu0 %v25
  %2400 = vmatpush.msra.mxu0 %v24
  %2401 = vmatpush.msra.mxu0 %v23
  %2402 = vmatpush.msra.mxu0 %v22
  %2403 = vmatpush.msra.mxu0 %v21
  %2404 = vmatpush.msra.mxu0 %v20
  %2405 = vmatmul.f32.gmra.mxu0 %v2384
  %v2406 = vpop.f32.mrf.mxu0
  %v2407 = vadd.f32 %v42, %v2406
  %2408 = vdwg.mxu0
  %2409 = vmatpush.msra.mxu0 0.0
  %2410 = vmatpush.msra.mxu0 0.0
  %2411 = vmatpush.msra.mxu0 0.0
  %2412 = vmatpush.msra.mxu0 0.0
  %2413 = vmatpush.msra.mxu0 0.0
  %2414 = vmatpush.msra.mxu0 0.0
  %2415 = vmatpush.msra.mxu0 0.0
  %2416 = vmatpush.msra.mxu0 0.0
  %2417 = vmatpush.msra.mxu0 0.0
  %2418 = vmatpush.msra.mxu0 0.0
  %2419 = vmatpush.msra.mxu0 0.0
  %2420 = vmatpush.msra.mxu0 0.0
  %2421 = vmatpush.msra.mxu0 0.0
  %2422 = vmatpush.msra.mxu0 0.0
  %2423 = vmatpush.msra.mxu0 %v37
  %2424 = vmatpush.msra.mxu0 %v36
  %2425 = vmatmul.f32.gmra.mxu0 %v2387
  %v2426 = vpop.f32.mrf.mxu0
  %v2427 = vadd.f32 %v2407, %v2426
  %2428 = vdwg.mxu0
  %v2429 = vmax.f32 %v2427, 0.0
  %v2430 = vmax.f32 %v2382, %v2429
  %s2431 = scalar_lea.vmem %s3, 320
  %v2432 = vld [vmem:[%s2431] sm:$0xff]
  %v2433 = vld [vmem:[%s2431 + $0x8] sm:$0xff]
  %v2434 = vld [vmem:[%s2431 + $0x10] sm:$0xff]
  %v2435 = vld [vmem:[%s2431 + $0x18] sm:$0xff]
  %v2437 = vsel %vm433, %v2430, 0
  %2439 = vmatpush.msra.mxu0 0.0
  %2440 = vmatpush.msra.mxu0 0.0
  %2441 = vmatpush.msra.mxu0 0.0
  %2442 = vmatpush.msra.mxu0 0.0
  %2443 = vmatpush.msra.mxu0 0.0
  %2444 = vmatpush.msra.mxu0 0.0
  %2445 = vmatpush.msra.mxu0 0.0
  %2446 = vmatpush.msra.mxu0 0.0
  %2447 = vmatpush.msra.mxu0 0.0
  %2448 = vmatpush.msra.mxu0 0.0
  %2449 = vmatpush.msra.mxu0 0.0
  %2450 = vmatpush.msra.mxu0 0.0
  %2451 = vmatpush.msra.mxu0 %v2435
  %2452 = vmatpush.msra.mxu0 %v2434
  %2453 = vmatpush.msra.mxu0 %v2433
  %2454 = vmatpush.msra.mxu0 %v2432
  %2455 = vmatmul.f32.gmra.mxu0 %v2437
  %v2456 = vpop.f32.mrf.mxu0
  %v2457 = vadd.f32 0.0, %v2456
  %2458 = vdwg.mxu0
  %v2459 = vadd.f32 %v2239, %v2457
  %s2460 = scalar_lea.vmem %s0, 176
  %v2461 = vld [vmem:[%s2460] sm:$0xff]
  %v2462 = vld [vmem:[%s2460 + $0x8] sm:$0xff]
  %v2464 = vsel %vm44, %v2462, 0
  %2466 = vmatpush.msra.mxu0 %v35
  %2467 = vmatpush.msra.mxu0 %v34
  %2468 = vmatpush.msra.mxu0 %v33
  %2469 = vmatpush.msra.mxu0 %v32
  %2470 = vmatpush.msra.mxu0 %v31
  %2471 = vmatpush.msra.mxu0 %v30
  %2472 = vmatpush.msra.mxu0 %v29
  %2473 = vmatpush.msra.mxu0 %v28
  %2474 = vmatpush.msra.mxu0 %v27
  %2475 = vmatpush.msra.mxu0 %v26
  %2476 = vmatpush.msra.mxu0 %v25
  %2477 = vmatpush.msra.mxu0 %v24
  %2478 = vmatpush.msra.mxu0 %v23
  %2479 = vmatpush.msra.mxu0 %v22
  %2480 = vmatpush.msra.mxu0 %v21
  %2481 = vmatpush.msra.mxu0 %v20
  %2482 = vmatmul.f32.gmra.mxu0 %v2461
  %v2483 = vpop.f32.mrf.mxu0
  %v2484 = vadd.f32 %v42, %v2483
  %2485 = vdwg.mxu0
  %2486 = vmatpush.msra.mxu0 0.0
  %2487 = vmatpush.msra.mxu0 0.0
  %2488 = vmatpush.msra.mxu0 0.0
  %2489 = vmatpush.msra.mxu0 0.0
  %2490 = vmatpush.msra.mxu0 0.0
  %2491 = vmatpush.msra.mxu0 0.0
  %2492 = vmatpush.msra.mxu0 0.0
  %2493 = vmatpush.msra.mxu0 0.0
  %2494 = vmatpush.msra.mxu0 0.0
  %2495 = vmatpush.msra.mxu0 0.0
  %2496 = vmatpush.msra.mxu0 0.0
  %2497 = vmatpush.msra.mxu0 0.0
  %2498 = vmatpush.msra.mxu0 0.0
  %2499 = vmatpush.msra.mxu0 0.0
  %2500 = vmatpush.msra.mxu0 %v37
  %2501 = vmatpush.msra.mxu0 %v36
  %2502 = vmatmul.f32.gmra.mxu0 %v2464
  %v2503 = vpop.f32.mrf.mxu0
  %v2504 = vadd.f32 %v2484, %v2503
  %2505 = vdwg.mxu0
  %v2506 = vmax.f32 %v2504, 0.0
  %s2507 = scalar_lea.vmem %s0, 432
  %v2508 = vld [vmem:[%s2507] sm:$0xff]
  %v2509 = vld [vmem:[%s2507 + $0x8] sm:$0xff]
  %v2511 = vsel %vm44, %v2509, 0
  %2513 = vmatpush.msra.mxu0 %v35
  %2514 = vmatpush.msra.mxu0 %v34
  %2515 = vmatpush.msra.mxu0 %v33
  %2516 = vmatpush.msra.mxu0 %v32
  %2517 = vmatpush.msra.mxu0 %v31
  %2518 = vmatpush.msra.mxu0 %v30
  %2519 = vmatpush.msra.mxu0 %v29
  %2520 = vmatpush.msra.mxu0 %v28
  %2521 = vmatpush.msra.mxu0 %v27
  %2522 = vmatpush.msra.mxu0 %v26
  %2523 = vmatpush.msra.mxu0 %v25
  %2524 = vmatpush.msra.mxu0 %v24
  %2525 = vmatpush.msra.mxu0 %v23
  %2526 = vmatpush.msra.mxu0 %v22
  %2527 = vmatpush.msra.mxu0 %v21
  %2528 = vmatpush.msra.mxu0 %v20
  %2529 = vmatmul.f32.gmra.mxu0 %v2508
  %v2530 = vpop.f32.mrf.mxu0
  %v2531 = vadd.f32 %v42, %v2530
  %2532 = vdwg.mxu0
  %2533 = vmatpush.msra.mxu0 0.0
  %2534 = vmatpush.msra.mxu0 0.0
  %2535 = vmatpush.msra.mxu0 0.0
  %2536 = vmatpush.msra.mxu0 0.0
  %2537 = vmatpush.msra.mxu0 0.0
  %2538 = vmatpush.msra.mxu0 0.0
  %2539 = vmatpush.msra.mxu0 0.0
  %2540 = vmatpush.msra.mxu0 0.0
  %2541 = vmatpush.msra.mxu0 0.0
  %2542 = vmatpush.msra.mxu0 0.0
  %2543 = vmatpush.msra.mxu0 0.0
  %2544 = vmatpush.msra.mxu0 0.0
  %2545 = vmatpush.msra.mxu0 0.0
  %2546 = vmatpush.msra.mxu0 0.0
  %2547 = vmatpush.msra.mxu0 %v37
  %2548 = vmatpush.msra.mxu0 %v36
  %2549 = vmatmul.f32.gmra.mxu0 %v2511
  %v2550 = vpop.f32.mrf.mxu0
  %v2551 = vadd.f32 %v2531, %v2550
  %2552 = vdwg.mxu0
  %v2553 = vmax.f32 %v2551, 0.0
  %v2554 = vmax.f32 %v2506, %v2553
  %s2555 = scalar_lea.vmem %s0, 688
  %v2556 = vld [vmem:[%s2555] sm:$0xff]
  %v2557 = vld [vmem:[%s2555 + $0x8] sm:$0xff]
  %v2559 = vsel %vm44, %v2557, 0
  %2561 = vmatpush.msra.mxu0 %v35
  %2562 = vmatpush.msra.mxu0 %v34
  %2563 = vmatpush.msra.mxu0 %v33
  %2564 = vmatpush.msra.mxu0 %v32
  %2565 = vmatpush.msra.mxu0 %v31
  %2566 = vmatpush.msra.mxu0 %v30
  %2567 = vmatpush.msra.mxu0 %v29
  %2568 = vmatpush.msra.mxu0 %v28
  %2569 = vmatpush.msra.mxu0 %v27
  %2570 = vmatpush.msra.mxu0 %v26
  %2571 = vmatpush.msra.mxu0 %v25
  %2572 = vmatpush.msra.mxu0 %v24
  %2573 = vmatpush.msra.mxu0 %v23
  %2574 = vmatpush.msra.mxu0 %v22
  %2575 = vmatpush.msra.mxu0 %v21
  %2576 = vmatpush.msra.mxu0 %v20
  %2577 = vmatmul.f32.gmra.mxu0 %v2556
  %v2578 = vpop.f32.mrf.mxu0
  %v2579 = vadd.f32 %v42, %v2578
  %2580 = vdwg.mxu0
  %2581 = vmatpush.msra.mxu0 0.0
  %2582 = vmatpush.msra.mxu0 0.0
  %2583 = vmatpush.msra.mxu0 0.0
  %2584 = vmatpush.msra.mxu0 0.0
  %2585 = vmatpush.msra.mxu0 0.0
  %2586 = vmatpush.msra.mxu0 0.0
  %2587 = vmatpush.msra.mxu0 0.0
  %2588 = vmatpush.msra.mxu0 0.0
  %2589 = vmatpush.msra.mxu0 0.0
  %2590 = vmatpush.msra.mxu0 0.0
  %2591 = vmatpush.msra.mxu0 0.0
  %2592 = vmatpush.msra.mxu0 0.0
  %2593 = vmatpush.msra.mxu0 0.0
  %2594 = vmatpush.msra.mxu0 0.0
  %2595 = vmatpush.msra.mxu0 %v37
  %2596 = vmatpush.msra.mxu0 %v36
  %2597 = vmatmul.f32.gmra.mxu0 %v2559
  %v2598 = vpop.f32.mrf.mxu0
  %v2599 = vadd.f32 %v2579, %v2598
  %2600 = vdwg.mxu0
  %v2601 = vmax.f32 %v2599, 0.0
  %v2602 = vmax.f32 %v2554, %v2601
  %s2603 = scalar_lea.vmem %s0, 944
  %v2604 = vld [vmem:[%s2603] sm:$0xff]
  %v2605 = vld [vmem:[%s2603 + $0x8] sm:$0xff]
  %v2607 = vsel %vm44, %v2605, 0
  %2609 = vmatpush.msra.mxu0 %v35
  %2610 = vmatpush.msra.mxu0 %v34
  %2611 = vmatpush.msra.mxu0 %v33
  %2612 = vmatpush.msra.mxu0 %v32
  %2613 = vmatpush.msra.mxu0 %v31
  %2614 = vmatpush.msra.mxu0 %v30
  %2615 = vmatpush.msra.mxu0 %v29
  %2616 = vmatpush.msra.mxu0 %v28
  %2617 = vmatpush.msra.mxu0 %v27
  %2618 = vmatpush.msra.mxu0 %v26
  %2619 = vmatpush.msra.mxu0 %v25
  %2620 = vmatpush.msra.mxu0 %v24
  %2621 = vmatpush.msra.mxu0 %v23
  %2622 = vmatpush.msra.mxu0 %v22
  %2623 = vmatpush.msra.mxu0 %v21
  %2624 = vmatpush.msra.mxu0 %v20
  %2625 = vmatmul.f32.gmra.mxu0 %v2604
  %v2626 = vpop.f32.mrf.mxu0
  %v2627 = vadd.f32 %v42, %v2626
  %2628 = vdwg.mxu0
  %2629 = vmatpush.msra.mxu0 0.0
  %2630 = vmatpush.msra.mxu0 0.0
  %2631 = vmatpush.msra.mxu0 0.0
  %2632 = vmatpush.msra.mxu0 0.0
  %2633 = vmatpush.msra.mxu0 0.0
  %2634 = vmatpush.msra.mxu0 0.0
  %2635 = vmatpush.msra.mxu0 0.0
  %2636 = vmatpush.msra.mxu0 0.0
  %2637 = vmatpush.msra.mxu0 0.0
  %2638 = vmatpush.msra.mxu0 0.0
  %2639 = vmatpush.msra.mxu0 0.0
  %2640 = vmatpush.msra.mxu0 0.0
  %2641 = vmatpush.msra.mxu0 0.0
  %2642 = vmatpush.msra.mxu0 0.0
  %2643 = vmatpush.msra.mxu0 %v37
  %2644 = vmatpush.msra.mxu0 %v36
  %2645 = vmatmul.f32.gmra.mxu0 %v2607
  %v2646 = vpop.f32.mrf.mxu0
  %v2647 = vadd.f32 %v2627, %v2646
  %2648 = vdwg.mxu0
  %v2649 = vmax.f32 %v2647, 0.0
  %v2650 = vmax.f32 %v2602, %v2649
  %s2651 = scalar_lea.vmem %s3, 352
  %v2652 = vld [vmem:[%s2651] sm:$0xff]
  %v2653 = vld [vmem:[%s2651 + $0x8] sm:$0xff]
  %v2654 = vld [vmem:[%s2651 + $0x10] sm:$0xff]
  %v2655 = vld [vmem:[%s2651 + $0x18] sm:$0xff]
  %v2657 = vsel %vm433, %v2650, 0
  %2659 = vmatpush.msra.mxu0 0.0
  %2660 = vmatpush.msra.mxu0 0.0
  %2661 = vmatpush.msra.mxu0 0.0
  %2662 = vmatpush.msra.mxu0 0.0
  %2663 = vmatpush.msra.mxu0 0.0
  %2664 = vmatpush.msra.mxu0 0.0
  %2665 = vmatpush.msra.mxu0 0.0
  %2666 = vmatpush.msra.mxu0 0.0
  %2667 = vmatpush.msra.mxu0 0.0
  %2668 = vmatpush.msra.mxu0 0.0
  %2669 = vmatpush.msra.mxu0 0.0
  %2670 = vmatpush.msra.mxu0 0.0
  %2671 = vmatpush.msra.mxu0 %v2655
  %2672 = vmatpush.msra.mxu0 %v2654
  %2673 = vmatpush.msra.mxu0 %v2653
  %2674 = vmatpush.msra.mxu0 %v2652
  %2675 = vmatmul.f32.gmra.mxu0 %v2657
  %v2676 = vpop.f32.mrf.mxu0
  %v2677 = vadd.f32 0.0, %v2676
  %2678 = vdwg.mxu0
  %v2679 = vadd.f32 %v2459, %v2677
  %s2680 = scalar_lea.vmem %s0, 192
  %v2681 = vld [vmem:[%s2680] sm:$0xff]
  %v2682 = vld [vmem:[%s2680 + $0x8] sm:$0xff]
  %v2684 = vsel %vm44, %v2682, 0
  %2686 = vmatpush.msra.mxu0 %v35
  %2687 = vmatpush.msra.mxu0 %v34
  %2688 = vmatpush.msra.mxu0 %v33
  %2689 = vmatpush.msra.mxu0 %v32
  %2690 = vmatpush.msra.mxu0 %v31
  %2691 = vmatpush.msra.mxu0 %v30
  %2692 = vmatpush.msra.mxu0 %v29
  %2693 = vmatpush.msra.mxu0 %v28
  %2694 = vmatpush.msra.mxu0 %v27
  %2695 = vmatpush.msra.mxu0 %v26
  %2696 = vmatpush.msra.mxu0 %v25
  %2697 = vmatpush.msra.mxu0 %v24
  %2698 = vmatpush.msra.mxu0 %v23
  %2699 = vmatpush.msra.mxu0 %v22
  %2700 = vmatpush.msra.mxu0 %v21
  %2701 = vmatpush.msra.mxu0 %v20
  %2702 = vmatmul.f32.gmra.mxu0 %v2681
  %v2703 = vpop.f32.mrf.mxu0
  %v2704 = vadd.f32 %v42, %v2703
  %2705 = vdwg.mxu0
  %2706 = vmatpush.msra.mxu0 0.0
  %2707 = vmatpush.msra.mxu0 0.0
  %2708 = vmatpush.msra.mxu0 0.0
  %2709 = vmatpush.msra.mxu0 0.0
  %2710 = vmatpush.msra.mxu0 0.0
  %2711 = vmatpush.msra.mxu0 0.0
  %2712 = vmatpush.msra.mxu0 0.0
  %2713 = vmatpush.msra.mxu0 0.0
  %2714 = vmatpush.msra.mxu0 0.0
  %2715 = vmatpush.msra.mxu0 0.0
  %2716 = vmatpush.msra.mxu0 0.0
  %2717 = vmatpush.msra.mxu0 0.0
  %2718 = vmatpush.msra.mxu0 0.0
  %2719 = vmatpush.msra.mxu0 0.0
  %2720 = vmatpush.msra.mxu0 %v37
  %2721 = vmatpush.msra.mxu0 %v36
  %2722 = vmatmul.f32.gmra.mxu0 %v2684
  %v2723 = vpop.f32.mrf.mxu0
  %v2724 = vadd.f32 %v2704, %v2723
  %2725 = vdwg.mxu0
  %v2726 = vmax.f32 %v2724, 0.0
  %s2727 = scalar_lea.vmem %s0, 448
  %v2728 = vld [vmem:[%s2727] sm:$0xff]
  %v2729 = vld [vmem:[%s2727 + $0x8] sm:$0xff]
  %v2731 = vsel %vm44, %v2729, 0
  %2733 = vmatpush.msra.mxu0 %v35
  %2734 = vmatpush.msra.mxu0 %v34
  %2735 = vmatpush.msra.mxu0 %v33
  %2736 = vmatpush.msra.mxu0 %v32
  %2737 = vmatpush.msra.mxu0 %v31
  %2738 = vmatpush.msra.mxu0 %v30
  %2739 = vmatpush.msra.mxu0 %v29
  %2740 = vmatpush.msra.mxu0 %v28
  %2741 = vmatpush.msra.mxu0 %v27
  %2742 = vmatpush.msra.mxu0 %v26
  %2743 = vmatpush.msra.mxu0 %v25
  %2744 = vmatpush.msra.mxu0 %v24
  %2745 = vmatpush.msra.mxu0 %v23
  %2746 = vmatpush.msra.mxu0 %v22
  %2747 = vmatpush.msra.mxu0 %v21
  %2748 = vmatpush.msra.mxu0 %v20
  %2749 = vmatmul.f32.gmra.mxu0 %v2728
  %v2750 = vpop.f32.mrf.mxu0
  %v2751 = vadd.f32 %v42, %v2750
  %2752 = vdwg.mxu0
  %2753 = vmatpush.msra.mxu0 0.0
  %2754 = vmatpush.msra.mxu0 0.0
  %2755 = vmatpush.msra.mxu0 0.0
  %2756 = vmatpush.msra.mxu0 0.0
  %2757 = vmatpush.msra.mxu0 0.0
  %2758 = vmatpush.msra.mxu0 0.0
  %2759 = vmatpush.msra.mxu0 0.0
  %2760 = vmatpush.msra.mxu0 0.0
  %2761 = vmatpush.msra.mxu0 0.0
  %2762 = vmatpush.msra.mxu0 0.0
  %2763 = vmatpush.msra.mxu0 0.0
  %2764 = vmatpush.msra.mxu0 0.0
  %2765 = vmatpush.msra.mxu0 0.0
  %2766 = vmatpush.msra.mxu0 0.0
  %2767 = vmatpush.msra.mxu0 %v37
  %2768 = vmatpush.msra.mxu0 %v36
  %2769 = vmatmul.f32.gmra.mxu0 %v2731
  %v2770 = vpop.f32.mrf.mxu0
  %v2771 = vadd.f32 %v2751, %v2770
  %2772 = vdwg.mxu0
  %v2773 = vmax.f32 %v2771, 0.0
  %v2774 = vmax.f32 %v2726, %v2773
  %s2775 = scalar_lea.vmem %s0, 704
  %v2776 = vld [vmem:[%s2775] sm:$0xff]
  %v2777 = vld [vmem:[%s2775 + $0x8] sm:$0xff]
  %v2779 = vsel %vm44, %v2777, 0
  %2781 = vmatpush.msra.mxu0 %v35
  %2782 = vmatpush.msra.mxu0 %v34
  %2783 = vmatpush.msra.mxu0 %v33
  %2784 = vmatpush.msra.mxu0 %v32
  %2785 = vmatpush.msra.mxu0 %v31
  %2786 = vmatpush.msra.mxu0 %v30
  %2787 = vmatpush.msra.mxu0 %v29
  %2788 = vmatpush.msra.mxu0 %v28
  %2789 = vmatpush.msra.mxu0 %v27
  %2790 = vmatpush.msra.mxu0 %v26
  %2791 = vmatpush.msra.mxu0 %v25
  %2792 = vmatpush.msra.mxu0 %v24
  %2793 = vmatpush.msra.mxu0 %v23
  %2794 = vmatpush.msra.mxu0 %v22
  %2795 = vmatpush.msra.mxu0 %v21
  %2796 = vmatpush.msra.mxu0 %v20
  %2797 = vmatmul.f32.gmra.mxu0 %v2776
  %v2798 = vpop.f32.mrf.mxu0
  %v2799 = vadd.f32 %v42, %v2798
  %2800 = vdwg.mxu0
  %2801 = vmatpush.msra.mxu0 0.0
  %2802 = vmatpush.msra.mxu0 0.0
  %2803 = vmatpush.msra.mxu0 0.0
  %2804 = vmatpush.msra.mxu0 0.0
  %2805 = vmatpush.msra.mxu0 0.0
  %2806 = vmatpush.msra.mxu0 0.0
  %2807 = vmatpush.msra.mxu0 0.0
  %2808 = vmatpush.msra.mxu0 0.0
  %2809 = vmatpush.msra.mxu0 0.0
  %2810 = vmatpush.msra.mxu0 0.0
  %2811 = vmatpush.msra.mxu0 0.0
  %2812 = vmatpush.msra.mxu0 0.0
  %2813 = vmatpush.msra.mxu0 0.0
  %2814 = vmatpush.msra.mxu0 0.0
  %2815 = vmatpush.msra.mxu0 %v37
  %2816 = vmatpush.msra.mxu0 %v36
  %2817 = vmatmul.f32.gmra.mxu0 %v2779
  %v2818 = vpop.f32.mrf.mxu0
  %v2819 = vadd.f32 %v2799, %v2818
  %2820 = vdwg.mxu0
  %v2821 = vmax.f32 %v2819, 0.0
  %v2822 = vmax.f32 %v2774, %v2821
  %s2823 = scalar_lea.vmem %s0, 960
  %v2824 = vld [vmem:[%s2823] sm:$0xff]
  %v2825 = vld [vmem:[%s2823 + $0x8] sm:$0xff]
  %v2827 = vsel %vm44, %v2825, 0
  %2829 = vmatpush.msra.mxu0 %v35
  %2830 = vmatpush.msra.mxu0 %v34
  %2831 = vmatpush.msra.mxu0 %v33
  %2832 = vmatpush.msra.mxu0 %v32
  %2833 = vmatpush.msra.mxu0 %v31
  %2834 = vmatpush.msra.mxu0 %v30
  %2835 = vmatpush.msra.mxu0 %v29
  %2836 = vmatpush.msra.mxu0 %v28
  %2837 = vmatpush.msra.mxu0 %v27
  %2838 = vmatpush.msra.mxu0 %v26
  %2839 = vmatpush.msra.mxu0 %v25
  %2840 = vmatpush.msra.mxu0 %v24
  %2841 = vmatpush.msra.mxu0 %v23
  %2842 = vmatpush.msra.mxu0 %v22
  %2843 = vmatpush.msra.mxu0 %v21
  %2844 = vmatpush.msra.mxu0 %v20
  %2845 = vmatmul.f32.gmra.mxu0 %v2824
  %v2846 = vpop.f32.mrf.mxu0
  %v2847 = vadd.f32 %v42, %v2846
  %2848 = vdwg.mxu0
  %2849 = vmatpush.msra.mxu0 0.0
  %2850 = vmatpush.msra.mxu0 0.0
  %2851 = vmatpush.msra.mxu0 0.0
  %2852 = vmatpush.msra.mxu0 0.0
  %2853 = vmatpush.msra.mxu0 0.0
  %2854 = vmatpush.msra.mxu0 0.0
  %2855 = vmatpush.msra.mxu0 0.0
  %2856 = vmatpush.msra.mxu0 0.0
  %2857 = vmatpush.msra.mxu0 0.0
  %2858 = vmatpush.msra.mxu0 0.0
  %2859 = vmatpush.msra.mxu0 0.0
  %2860 = vmatpush.msra.mxu0 0.0
  %2861 = vmatpush.msra.mxu0 0.0
  %2862 = vmatpush.msra.mxu0 0.0
  %2863 = vmatpush.msra.mxu0 %v37
  %2864 = vmatpush.msra.mxu0 %v36
  %2865 = vmatmul.f32.gmra.mxu0 %v2827
  %v2866 = vpop.f32.mrf.mxu0
  %v2867 = vadd.f32 %v2847, %v2866
  %2868 = vdwg.mxu0
  %v2869 = vmax.f32 %v2867, 0.0
  %v2870 = vmax.f32 %v2822, %v2869
  %s2871 = scalar_lea.vmem %s3, 384
  %v2872 = vld [vmem:[%s2871] sm:$0xff]
  %v2873 = vld [vmem:[%s2871 + $0x8] sm:$0xff]
  %v2874 = vld [vmem:[%s2871 + $0x10] sm:$0xff]
  %v2875 = vld [vmem:[%s2871 + $0x18] sm:$0xff]
  %v2877 = vsel %vm433, %v2870, 0
  %2879 = vmatpush.msra.mxu0 0.0
  %2880 = vmatpush.msra.mxu0 0.0
  %2881 = vmatpush.msra.mxu0 0.0
  %2882 = vmatpush.msra.mxu0 0.0
  %2883 = vmatpush.msra.mxu0 0.0
  %2884 = vmatpush.msra.mxu0 0.0
  %2885 = vmatpush.msra.mxu0 0.0
  %2886 = vmatpush.msra.mxu0 0.0
  %2887 = vmatpush.msra.mxu0 0.0
  %2888 = vmatpush.msra.mxu0 0.0
  %2889 = vmatpush.msra.mxu0 0.0
  %2890 = vmatpush.msra.mxu0 0.0
  %2891 = vmatpush.msra.mxu0 %v2875
  %2892 = vmatpush.msra.mxu0 %v2874
  %2893 = vmatpush.msra.mxu0 %v2873
  %2894 = vmatpush.msra.mxu0 %v2872
  %2895 = vmatmul.f32.gmra.mxu0 %v2877
  %v2896 = vpop.f32.mrf.mxu0
  %v2897 = vadd.f32 0.0, %v2896
  %2898 = vdwg.mxu0
  %v2899 = vadd.f32 %v2679, %v2897
  %s2900 = scalar_lea.vmem %s0, 208
  %v2901 = vld [vmem:[%s2900] sm:$0xff]
  %v2902 = vld [vmem:[%s2900 + $0x8] sm:$0xff]
  %v2904 = vsel %vm44, %v2902, 0
  %2906 = vmatpush.msra.mxu0 %v35
  %2907 = vmatpush.msra.mxu0 %v34
  %2908 = vmatpush.msra.mxu0 %v33
  %2909 = vmatpush.msra.mxu0 %v32
  %2910 = vmatpush.msra.mxu0 %v31
  %2911 = vmatpush.msra.mxu0 %v30
  %2912 = vmatpush.msra.mxu0 %v29
  %2913 = vmatpush.msra.mxu0 %v28
  %2914 = vmatpush.msra.mxu0 %v27
  %2915 = vmatpush.msra.mxu0 %v26
  %2916 = vmatpush.msra.mxu0 %v25
  %2917 = vmatpush.msra.mxu0 %v24
  %2918 = vmatpush.msra.mxu0 %v23
  %2919 = vmatpush.msra.mxu0 %v22
  %2920 = vmatpush.msra.mxu0 %v21
  %2921 = vmatpush.msra.mxu0 %v20
  %2922 = vmatmul.f32.gmra.mxu0 %v2901
  %v2923 = vpop.f32.mrf.mxu0
  %v2924 = vadd.f32 %v42, %v2923
  %2925 = vdwg.mxu0
  %2926 = vmatpush.msra.mxu0 0.0
  %2927 = vmatpush.msra.mxu0 0.0
  %2928 = vmatpush.msra.mxu0 0.0
  %2929 = vmatpush.msra.mxu0 0.0
  %2930 = vmatpush.msra.mxu0 0.0
  %2931 = vmatpush.msra.mxu0 0.0
  %2932 = vmatpush.msra.mxu0 0.0
  %2933 = vmatpush.msra.mxu0 0.0
  %2934 = vmatpush.msra.mxu0 0.0
  %2935 = vmatpush.msra.mxu0 0.0
  %2936 = vmatpush.msra.mxu0 0.0
  %2937 = vmatpush.msra.mxu0 0.0
  %2938 = vmatpush.msra.mxu0 0.0
  %2939 = vmatpush.msra.mxu0 0.0
  %2940 = vmatpush.msra.mxu0 %v37
  %2941 = vmatpush.msra.mxu0 %v36
  %2942 = vmatmul.f32.gmra.mxu0 %v2904
  %v2943 = vpop.f32.mrf.mxu0
  %v2944 = vadd.f32 %v2924, %v2943
  %2945 = vdwg.mxu0
  %v2946 = vmax.f32 %v2944, 0.0
  %s2947 = scalar_lea.vmem %s0, 464
  %v2948 = vld [vmem:[%s2947] sm:$0xff]
  %v2949 = vld [vmem:[%s2947 + $0x8] sm:$0xff]
  %v2951 = vsel %vm44, %v2949, 0
  %2953 = vmatpush.msra.mxu0 %v35
  %2954 = vmatpush.msra.mxu0 %v34
  %2955 = vmatpush.msra.mxu0 %v33
  %2956 = vmatpush.msra.mxu0 %v32
  %2957 = vmatpush.msra.mxu0 %v31
  %2958 = vmatpush.msra.mxu0 %v30
  %2959 = vmatpush.msra.mxu0 %v29
  %2960 = vmatpush.msra.mxu0 %v28
  %2961 = vmatpush.msra.mxu0 %v27
  %2962 = vmatpush.msra.mxu0 %v26
  %2963 = vmatpush.msra.mxu0 %v25
  %2964 = vmatpush.msra.mxu0 %v24
  %2965 = vmatpush.msra.mxu0 %v23
  %2966 = vmatpush.msra.mxu0 %v22
  %2967 = vmatpush.msra.mxu0 %v21
  %2968 = vmatpush.msra.mxu0 %v20
  %2969 = vmatmul.f32.gmra.mxu0 %v2948
  %v2970 = vpop.f32.mrf.mxu0
  %v2971 = vadd.f32 %v42, %v2970
  %2972 = vdwg.mxu0
  %2973 = vmatpush.msra.mxu0 0.0
  %2974 = vmatpush.msra.mxu0 0.0
  %2975 = vmatpush.msra.mxu0 0.0
  %2976 = vmatpush.msra.mxu0 0.0
  %2977 = vmatpush.msra.mxu0 0.0
  %2978 = vmatpush.msra.mxu0 0.0
  %2979 = vmatpush.msra.mxu0 0.0
  %2980 = vmatpush.msra.mxu0 0.0
  %2981 = vmatpush.msra.mxu0 0.0
  %2982 = vmatpush.msra.mxu0 0.0
  %2983 = vmatpush.msra.mxu0 0.0
  %2984 = vmatpush.msra.mxu0 0.0
  %2985 = vmatpush.msra.mxu0 0.0
  %2986 = vmatpush.msra.mxu0 0.0
  %2987 = vmatpush.msra.mxu0 %v37
  %2988 = vmatpush.msra.mxu0 %v36
  %2989 = vmatmul.f32.gmra.mxu0 %v2951
  %v2990 = vpop.f32.mrf.mxu0
  %v2991 = vadd.f32 %v2971, %v2990
  %2992 = vdwg.mxu0
  %v2993 = vmax.f32 %v2991, 0.0
  %v2994 = vmax.f32 %v2946, %v2993
  %s2995 = scalar_lea.vmem %s0, 720
  %v2996 = vld [vmem:[%s2995] sm:$0xff]
  %v2997 = vld [vmem:[%s2995 + $0x8] sm:$0xff]
  %v2999 = vsel %vm44, %v2997, 0
  %3001 = vmatpush.msra.mxu0 %v35
  %3002 = vmatpush.msra.mxu0 %v34
  %3003 = vmatpush.msra.mxu0 %v33
  %3004 = vmatpush.msra.mxu0 %v32
  %3005 = vmatpush.msra.mxu0 %v31
  %3006 = vmatpush.msra.mxu0 %v30
  %3007 = vmatpush.msra.mxu0 %v29
  %3008 = vmatpush.msra.mxu0 %v28
  %3009 = vmatpush.msra.mxu0 %v27
  %3010 = vmatpush.msra.mxu0 %v26
  %3011 = vmatpush.msra.mxu0 %v25
  %3012 = vmatpush.msra.mxu0 %v24
  %3013 = vmatpush.msra.mxu0 %v23
  %3014 = vmatpush.msra.mxu0 %v22
  %3015 = vmatpush.msra.mxu0 %v21
  %3016 = vmatpush.msra.mxu0 %v20
  %3017 = vmatmul.f32.gmra.mxu0 %v2996
  %v3018 = vpop.f32.mrf.mxu0
  %v3019 = vadd.f32 %v42, %v3018
  %3020 = vdwg.mxu0
  %3021 = vmatpush.msra.mxu0 0.0
  %3022 = vmatpush.msra.mxu0 0.0
  %3023 = vmatpush.msra.mxu0 0.0
  %3024 = vmatpush.msra.mxu0 0.0
  %3025 = vmatpush.msra.mxu0 0.0
  %3026 = vmatpush.msra.mxu0 0.0
  %3027 = vmatpush.msra.mxu0 0.0
  %3028 = vmatpush.msra.mxu0 0.0
  %3029 = vmatpush.msra.mxu0 0.0
  %3030 = vmatpush.msra.mxu0 0.0
  %3031 = vmatpush.msra.mxu0 0.0
  %3032 = vmatpush.msra.mxu0 0.0
  %3033 = vmatpush.msra.mxu0 0.0
  %3034 = vmatpush.msra.mxu0 0.0
  %3035 = vmatpush.msra.mxu0 %v37
  %3036 = vmatpush.msra.mxu0 %v36
  %3037 = vmatmul.f32.gmra.mxu0 %v2999
  %v3038 = vpop.f32.mrf.mxu0
  %v3039 = vadd.f32 %v3019, %v3038
  %3040 = vdwg.mxu0
  %v3041 = vmax.f32 %v3039, 0.0
  %v3042 = vmax.f32 %v2994, %v3041
  %s3043 = scalar_lea.vmem %s0, 976
  %v3044 = vld [vmem:[%s3043] sm:$0xff]
  %v3045 = vld [vmem:[%s3043 + $0x8] sm:$0xff]
  %v3047 = vsel %vm44, %v3045, 0
  %3049 = vmatpush.msra.mxu0 %v35
  %3050 = vmatpush.msra.mxu0 %v34
  %3051 = vmatpush.msra.mxu0 %v33
  %3052 = vmatpush.msra.mxu0 %v32
  %3053 = vmatpush.msra.mxu0 %v31
  %3054 = vmatpush.msra.mxu0 %v30
  %3055 = vmatpush.msra.mxu0 %v29
  %3056 = vmatpush.msra.mxu0 %v28
  %3057 = vmatpush.msra.mxu0 %v27
  %3058 = vmatpush.msra.mxu0 %v26
  %3059 = vmatpush.msra.mxu0 %v25
  %3060 = vmatpush.msra.mxu0 %v24
  %3061 = vmatpush.msra.mxu0 %v23
  %3062 = vmatpush.msra.mxu0 %v22
  %3063 = vmatpush.msra.mxu0 %v21
  %3064 = vmatpush.msra.mxu0 %v20
  %3065 = vmatmul.f32.gmra.mxu0 %v3044
  %v3066 = vpop.f32.mrf.mxu0
  %v3067 = vadd.f32 %v42, %v3066
  %3068 = vdwg.mxu0
  %3069 = vmatpush.msra.mxu0 0.0
  %3070 = vmatpush.msra.mxu0 0.0
  %3071 = vmatpush.msra.mxu0 0.0
  %3072 = vmatpush.msra.mxu0 0.0
  %3073 = vmatpush.msra.mxu0 0.0
  %3074 = vmatpush.msra.mxu0 0.0
  %3075 = vmatpush.msra.mxu0 0.0
  %3076 = vmatpush.msra.mxu0 0.0
  %3077 = vmatpush.msra.mxu0 0.0
  %3078 = vmatpush.msra.mxu0 0.0
  %3079 = vmatpush.msra.mxu0 0.0
  %3080 = vmatpush.msra.mxu0 0.0
  %3081 = vmatpush.msra.mxu0 0.0
  %3082 = vmatpush.msra.mxu0 0.0
  %3083 = vmatpush.msra.mxu0 %v37
  %3084 = vmatpush.msra.mxu0 %v36
  %3085 = vmatmul.f32.gmra.mxu0 %v3047
  %v3086 = vpop.f32.mrf.mxu0
  %v3087 = vadd.f32 %v3067, %v3086
  %3088 = vdwg.mxu0
  %v3089 = vmax.f32 %v3087, 0.0
  %v3090 = vmax.f32 %v3042, %v3089
  %s3091 = scalar_lea.vmem %s3, 416
  %v3092 = vld [vmem:[%s3091] sm:$0xff]
  %v3093 = vld [vmem:[%s3091 + $0x8] sm:$0xff]
  %v3094 = vld [vmem:[%s3091 + $0x10] sm:$0xff]
  %v3095 = vld [vmem:[%s3091 + $0x18] sm:$0xff]
  %v3097 = vsel %vm433, %v3090, 0
  %3099 = vmatpush.msra.mxu0 0.0
  %3100 = vmatpush.msra.mxu0 0.0
  %3101 = vmatpush.msra.mxu0 0.0
  %3102 = vmatpush.msra.mxu0 0.0
  %3103 = vmatpush.msra.mxu0 0.0
  %3104 = vmatpush.msra.mxu0 0.0
  %3105 = vmatpush.msra.mxu0 0.0
  %3106 = vmatpush.msra.mxu0 0.0
  %3107 = vmatpush.msra.mxu0 0.0
  %3108 = vmatpush.msra.mxu0 0.0
  %3109 = vmatpush.msra.mxu0 0.0
  %3110 = vmatpush.msra.mxu0 0.0
  %3111 = vmatpush.msra.mxu0 %v3095
  %3112 = vmatpush.msra.mxu0 %v3094
  %3113 = vmatpush.msra.mxu0 %v3093
  %3114 = vmatpush.msra.mxu0 %v3092
  %3115 = vmatmul.f32.gmra.mxu0 %v3097
  %v3116 = vpop.f32.mrf.mxu0
  %v3117 = vadd.f32 0.0, %v3116
  %3118 = vdwg.mxu0
  %v3119 = vadd.f32 %v2899, %v3117
  %s3120 = scalar_lea.vmem %s0, 224
  %v3121 = vld [vmem:[%s3120] sm:$0xff]
  %v3122 = vld [vmem:[%s3120 + $0x8] sm:$0xff]
  %v3124 = vsel %vm44, %v3122, 0
  %3126 = vmatpush.msra.mxu0 %v35
  %3127 = vmatpush.msra.mxu0 %v34
  %3128 = vmatpush.msra.mxu0 %v33
  %3129 = vmatpush.msra.mxu0 %v32
  %3130 = vmatpush.msra.mxu0 %v31
  %3131 = vmatpush.msra.mxu0 %v30
  %3132 = vmatpush.msra.mxu0 %v29
  %3133 = vmatpush.msra.mxu0 %v28
  %3134 = vmatpush.msra.mxu0 %v27
  %3135 = vmatpush.msra.mxu0 %v26
  %3136 = vmatpush.msra.mxu0 %v25
  %3137 = vmatpush.msra.mxu0 %v24
  %3138 = vmatpush.msra.mxu0 %v23
  %3139 = vmatpush.msra.mxu0 %v22
  %3140 = vmatpush.msra.mxu0 %v21
  %3141 = vmatpush.msra.mxu0 %v20
  %3142 = vmatmul.f32.gmra.mxu0 %v3121
  %v3143 = vpop.f32.mrf.mxu0
  %v3144 = vadd.f32 %v42, %v3143
  %3145 = vdwg.mxu0
  %3146 = vmatpush.msra.mxu0 0.0
  %3147 = vmatpush.msra.mxu0 0.0
  %3148 = vmatpush.msra.mxu0 0.0
  %3149 = vmatpush.msra.mxu0 0.0
  %3150 = vmatpush.msra.mxu0 0.0
  %3151 = vmatpush.msra.mxu0 0.0
  %3152 = vmatpush.msra.mxu0 0.0
  %3153 = vmatpush.msra.mxu0 0.0
  %3154 = vmatpush.msra.mxu0 0.0
  %3155 = vmatpush.msra.mxu0 0.0
  %3156 = vmatpush.msra.mxu0 0.0
  %3157 = vmatpush.msra.mxu0 0.0
  %3158 = vmatpush.msra.mxu0 0.0
  %3159 = vmatpush.msra.mxu0 0.0
  %3160 = vmatpush.msra.mxu0 %v37
  %3161 = vmatpush.msra.mxu0 %v36
  %3162 = vmatmul.f32.gmra.mxu0 %v3124
  %v3163 = vpop.f32.mrf.mxu0
  %v3164 = vadd.f32 %v3144, %v3163
  %3165 = vdwg.mxu0
  %v3166 = vmax.f32 %v3164, 0.0
  %s3167 = scalar_lea.vmem %s0, 480
  %v3168 = vld [vmem:[%s3167] sm:$0xff]
  %v3169 = vld [vmem:[%s3167 + $0x8] sm:$0xff]
  %v3171 = vsel %vm44, %v3169, 0
  %3173 = vmatpush.msra.mxu0 %v35
  %3174 = vmatpush.msra.mxu0 %v34
  %3175 = vmatpush.msra.mxu0 %v33
  %3176 = vmatpush.msra.mxu0 %v32
  %3177 = vmatpush.msra.mxu0 %v31
  %3178 = vmatpush.msra.mxu0 %v30
  %3179 = vmatpush.msra.mxu0 %v29
  %3180 = vmatpush.msra.mxu0 %v28
  %3181 = vmatpush.msra.mxu0 %v27
  %3182 = vmatpush.msra.mxu0 %v26
  %3183 = vmatpush.msra.mxu0 %v25
  %3184 = vmatpush.msra.mxu0 %v24
  %3185 = vmatpush.msra.mxu0 %v23
  %3186 = vmatpush.msra.mxu0 %v22
  %3187 = vmatpush.msra.mxu0 %v21
  %3188 = vmatpush.msra.mxu0 %v20
  %3189 = vmatmul.f32.gmra.mxu0 %v3168
  %v3190 = vpop.f32.mrf.mxu0
  %v3191 = vadd.f32 %v42, %v3190
  %3192 = vdwg.mxu0
  %3193 = vmatpush.msra.mxu0 0.0
  %3194 = vmatpush.msra.mxu0 0.0
  %3195 = vmatpush.msra.mxu0 0.0
  %3196 = vmatpush.msra.mxu0 0.0
  %3197 = vmatpush.msra.mxu0 0.0
  %3198 = vmatpush.msra.mxu0 0.0
  %3199 = vmatpush.msra.mxu0 0.0
  %3200 = vmatpush.msra.mxu0 0.0
  %3201 = vmatpush.msra.mxu0 0.0
  %3202 = vmatpush.msra.mxu0 0.0
  %3203 = vmatpush.msra.mxu0 0.0
  %3204 = vmatpush.msra.mxu0 0.0
  %3205 = vmatpush.msra.mxu0 0.0
  %3206 = vmatpush.msra.mxu0 0.0
  %3207 = vmatpush.msra.mxu0 %v37
  %3208 = vmatpush.msra.mxu0 %v36
  %3209 = vmatmul.f32.gmra.mxu0 %v3171
  %v3210 = vpop.f32.mrf.mxu0
  %v3211 = vadd.f32 %v3191, %v3210
  %3212 = vdwg.mxu0
  %v3213 = vmax.f32 %v3211, 0.0
  %v3214 = vmax.f32 %v3166, %v3213
  %s3215 = scalar_lea.vmem %s0, 736
  %v3216 = vld [vmem:[%s3215] sm:$0xff]
  %v3217 = vld [vmem:[%s3215 + $0x8] sm:$0xff]
  %v3219 = vsel %vm44, %v3217, 0
  %3221 = vmatpush.msra.mxu0 %v35
  %3222 = vmatpush.msra.mxu0 %v34
  %3223 = vmatpush.msra.mxu0 %v33
  %3224 = vmatpush.msra.mxu0 %v32
  %3225 = vmatpush.msra.mxu0 %v31
  %3226 = vmatpush.msra.mxu0 %v30
  %3227 = vmatpush.msra.mxu0 %v29
  %3228 = vmatpush.msra.mxu0 %v28
  %3229 = vmatpush.msra.mxu0 %v27
  %3230 = vmatpush.msra.mxu0 %v26
  %3231 = vmatpush.msra.mxu0 %v25
  %3232 = vmatpush.msra.mxu0 %v24
  %3233 = vmatpush.msra.mxu0 %v23
  %3234 = vmatpush.msra.mxu0 %v22
  %3235 = vmatpush.msra.mxu0 %v21
  %3236 = vmatpush.msra.mxu0 %v20
  %3237 = vmatmul.f32.gmra.mxu0 %v3216
  %v3238 = vpop.f32.mrf.mxu0
  %v3239 = vadd.f32 %v42, %v3238
  %3240 = vdwg.mxu0
  %3241 = vmatpush.msra.mxu0 0.0
  %3242 = vmatpush.msra.mxu0 0.0
  %3243 = vmatpush.msra.mxu0 0.0
  %3244 = vmatpush.msra.mxu0 0.0
  %3245 = vmatpush.msra.mxu0 0.0
  %3246 = vmatpush.msra.mxu0 0.0
  %3247 = vmatpush.msra.mxu0 0.0
  %3248 = vmatpush.msra.mxu0 0.0
  %3249 = vmatpush.msra.mxu0 0.0
  %3250 = vmatpush.msra.mxu0 0.0
  %3251 = vmatpush.msra.mxu0 0.0
  %3252 = vmatpush.msra.mxu0 0.0
  %3253 = vmatpush.msra.mxu0 0.0
  %3254 = vmatpush.msra.mxu0 0.0
  %3255 = vmatpush.msra.mxu0 %v37
  %3256 = vmatpush.msra.mxu0 %v36
  %3257 = vmatmul.f32.gmra.mxu0 %v3219
  %v3258 = vpop.f32.mrf.mxu0
  %v3259 = vadd.f32 %v3239, %v3258
  %3260 = vdwg.mxu0
  %v3261 = vmax.f32 %v3259, 0.0
  %v3262 = vmax.f32 %v3214, %v3261
  %s3263 = scalar_lea.vmem %s0, 992
  %v3264 = vld [vmem:[%s3263] sm:$0xff]
  %v3265 = vld [vmem:[%s3263 + $0x8] sm:$0xff]
  %v3267 = vsel %vm44, %v3265, 0
  %3269 = vmatpush.msra.mxu0 %v35
  %3270 = vmatpush.msra.mxu0 %v34
  %3271 = vmatpush.msra.mxu0 %v33
  %3272 = vmatpush.msra.mxu0 %v32
  %3273 = vmatpush.msra.mxu0 %v31
  %3274 = vmatpush.msra.mxu0 %v30
  %3275 = vmatpush.msra.mxu0 %v29
  %3276 = vmatpush.msra.mxu0 %v28
  %3277 = vmatpush.msra.mxu0 %v27
  %3278 = vmatpush.msra.mxu0 %v26
  %3279 = vmatpush.msra.mxu0 %v25
  %3280 = vmatpush.msra.mxu0 %v24
  %3281 = vmatpush.msra.mxu0 %v23
  %3282 = vmatpush.msra.mxu0 %v22
  %3283 = vmatpush.msra.mxu0 %v21
  %3284 = vmatpush.msra.mxu0 %v20
  %3285 = vmatmul.f32.gmra.mxu0 %v3264
  %v3286 = vpop.f32.mrf.mxu0
  %v3287 = vadd.f32 %v42, %v3286
  %3288 = vdwg.mxu0
  %3289 = vmatpush.msra.mxu0 0.0
  %3290 = vmatpush.msra.mxu0 0.0
  %3291 = vmatpush.msra.mxu0 0.0
  %3292 = vmatpush.msra.mxu0 0.0
  %3293 = vmatpush.msra.mxu0 0.0
  %3294 = vmatpush.msra.mxu0 0.0
  %3295 = vmatpush.msra.mxu0 0.0
  %3296 = vmatpush.msra.mxu0 0.0
  %3297 = vmatpush.msra.mxu0 0.0
  %3298 = vmatpush.msra.mxu0 0.0
  %3299 = vmatpush.msra.mxu0 0.0
  %3300 = vmatpush.msra.mxu0 0.0
  %3301 = vmatpush.msra.mxu0 0.0
  %3302 = vmatpush.msra.mxu0 0.0
  %3303 = vmatpush.msra.mxu0 %v37
  %3304 = vmatpush.msra.mxu0 %v36
  %3305 = vmatmul.f32.gmra.mxu0 %v3267
  %v3306 = vpop.f32.mrf.mxu0
  %v3307 = vadd.f32 %v3287, %v3306
  %3308 = vdwg.mxu0
  %v3309 = vmax.f32 %v3307, 0.0
  %v3310 = vmax.f32 %v3262, %v3309
  %s3311 = scalar_lea.vmem %s3, 448
  %v3312 = vld [vmem:[%s3311] sm:$0xff]
  %v3313 = vld [vmem:[%s3311 + $0x8] sm:$0xff]
  %v3314 = vld [vmem:[%s3311 + $0x10] sm:$0xff]
  %v3315 = vld [vmem:[%s3311 + $0x18] sm:$0xff]
  %v3317 = vsel %vm433, %v3310, 0
  %3319 = vmatpush.msra.mxu0 0.0
  %3320 = vmatpush.msra.mxu0 0.0
  %3321 = vmatpush.msra.mxu0 0.0
  %3322 = vmatpush.msra.mxu0 0.0
  %3323 = vmatpush.msra.mxu0 0.0
  %3324 = vmatpush.msra.mxu0 0.0
  %3325 = vmatpush.msra.mxu0 0.0
  %3326 = vmatpush.msra.mxu0 0.0
  %3327 = vmatpush.msra.mxu0 0.0
  %3328 = vmatpush.msra.mxu0 0.0
  %3329 = vmatpush.msra.mxu0 0.0
  %3330 = vmatpush.msra.mxu0 0.0
  %3331 = vmatpush.msra.mxu0 %v3315
  %3332 = vmatpush.msra.mxu0 %v3314
  %3333 = vmatpush.msra.mxu0 %v3313
  %3334 = vmatpush.msra.mxu0 %v3312
  %3335 = vmatmul.f32.gmra.mxu0 %v3317
  %v3336 = vpop.f32.mrf.mxu0
  %v3337 = vadd.f32 0.0, %v3336
  %3338 = vdwg.mxu0
  %v3339 = vadd.f32 %v3119, %v3337
  %s3340 = scalar_lea.vmem %s0, 240
  %v3341 = vld [vmem:[%s3340] sm:$0xff]
  %v3342 = vld [vmem:[%s3340 + $0x8] sm:$0xff]
  %v3344 = vsel %vm44, %v3342, 0
  %3346 = vmatpush.msra.mxu0 %v35
  %3347 = vmatpush.msra.mxu0 %v34
  %3348 = vmatpush.msra.mxu0 %v33
  %3349 = vmatpush.msra.mxu0 %v32
  %3350 = vmatpush.msra.mxu0 %v31
  %3351 = vmatpush.msra.mxu0 %v30
  %3352 = vmatpush.msra.mxu0 %v29
  %3353 = vmatpush.msra.mxu0 %v28
  %3354 = vmatpush.msra.mxu0 %v27
  %3355 = vmatpush.msra.mxu0 %v26
  %3356 = vmatpush.msra.mxu0 %v25
  %3357 = vmatpush.msra.mxu0 %v24
  %3358 = vmatpush.msra.mxu0 %v23
  %3359 = vmatpush.msra.mxu0 %v22
  %3360 = vmatpush.msra.mxu0 %v21
  %3361 = vmatpush.msra.mxu0 %v20
  %3362 = vmatmul.f32.gmra.mxu0 %v3341
  %v3363 = vpop.f32.mrf.mxu0
  %v3364 = vadd.f32 %v42, %v3363
  %3365 = vdwg.mxu0
  %3366 = vmatpush.msra.mxu0 0.0
  %3367 = vmatpush.msra.mxu0 0.0
  %3368 = vmatpush.msra.mxu0 0.0
  %3369 = vmatpush.msra.mxu0 0.0
  %3370 = vmatpush.msra.mxu0 0.0
  %3371 = vmatpush.msra.mxu0 0.0
  %3372 = vmatpush.msra.mxu0 0.0
  %3373 = vmatpush.msra.mxu0 0.0
  %3374 = vmatpush.msra.mxu0 0.0
  %3375 = vmatpush.msra.mxu0 0.0
  %3376 = vmatpush.msra.mxu0 0.0
  %3377 = vmatpush.msra.mxu0 0.0
  %3378 = vmatpush.msra.mxu0 0.0
  %3379 = vmatpush.msra.mxu0 0.0
  %3380 = vmatpush.msra.mxu0 %v37
  %3381 = vmatpush.msra.mxu0 %v36
  %3382 = vmatmul.f32.gmra.mxu0 %v3344
  %v3383 = vpop.f32.mrf.mxu0
  %v3384 = vadd.f32 %v3364, %v3383
  %3385 = vdwg.mxu0
  %v3386 = vmax.f32 %v3384, 0.0
  %s3387 = scalar_lea.vmem %s0, 496
  %v3388 = vld [vmem:[%s3387] sm:$0xff]
  %v3389 = vld [vmem:[%s3387 + $0x8] sm:$0xff]
  %v3391 = vsel %vm44, %v3389, 0
  %3393 = vmatpush.msra.mxu0 %v35
  %3394 = vmatpush.msra.mxu0 %v34
  %3395 = vmatpush.msra.mxu0 %v33
  %3396 = vmatpush.msra.mxu0 %v32
  %3397 = vmatpush.msra.mxu0 %v31
  %3398 = vmatpush.msra.mxu0 %v30
  %3399 = vmatpush.msra.mxu0 %v29
  %3400 = vmatpush.msra.mxu0 %v28
  %3401 = vmatpush.msra.mxu0 %v27
  %3402 = vmatpush.msra.mxu0 %v26
  %3403 = vmatpush.msra.mxu0 %v25
  %3404 = vmatpush.msra.mxu0 %v24
  %3405 = vmatpush.msra.mxu0 %v23
  %3406 = vmatpush.msra.mxu0 %v22
  %3407 = vmatpush.msra.mxu0 %v21
  %3408 = vmatpush.msra.mxu0 %v20
  %3409 = vmatmul.f32.gmra.mxu0 %v3388
  %v3410 = vpop.f32.mrf.mxu0
  %v3411 = vadd.f32 %v42, %v3410
  %3412 = vdwg.mxu0
  %3413 = vmatpush.msra.mxu0 0.0
  %3414 = vmatpush.msra.mxu0 0.0
  %3415 = vmatpush.msra.mxu0 0.0
  %3416 = vmatpush.msra.mxu0 0.0
  %3417 = vmatpush.msra.mxu0 0.0
  %3418 = vmatpush.msra.mxu0 0.0
  %3419 = vmatpush.msra.mxu0 0.0
  %3420 = vmatpush.msra.mxu0 0.0
  %3421 = vmatpush.msra.mxu0 0.0
  %3422 = vmatpush.msra.mxu0 0.0
  %3423 = vmatpush.msra.mxu0 0.0
  %3424 = vmatpush.msra.mxu0 0.0
  %3425 = vmatpush.msra.mxu0 0.0
  %3426 = vmatpush.msra.mxu0 0.0
  %3427 = vmatpush.msra.mxu0 %v37
  %3428 = vmatpush.msra.mxu0 %v36
  %3429 = vmatmul.f32.gmra.mxu0 %v3391
  %v3430 = vpop.f32.mrf.mxu0
  %v3431 = vadd.f32 %v3411, %v3430
  %3432 = vdwg.mxu0
  %v3433 = vmax.f32 %v3431, 0.0
  %v3434 = vmax.f32 %v3386, %v3433
  %s3435 = scalar_lea.vmem %s0, 752
  %v3436 = vld [vmem:[%s3435] sm:$0xff]
  %v3437 = vld [vmem:[%s3435 + $0x8] sm:$0xff]
  %v3439 = vsel %vm44, %v3437, 0
  %3441 = vmatpush.msra.mxu0 %v35
  %3442 = vmatpush.msra.mxu0 %v34
  %3443 = vmatpush.msra.mxu0 %v33
  %3444 = vmatpush.msra.mxu0 %v32
  %3445 = vmatpush.msra.mxu0 %v31
  %3446 = vmatpush.msra.mxu0 %v30
  %3447 = vmatpush.msra.mxu0 %v29
  %3448 = vmatpush.msra.mxu0 %v28
  %3449 = vmatpush.msra.mxu0 %v27
  %3450 = vmatpush.msra.mxu0 %v26
  %3451 = vmatpush.msra.mxu0 %v25
  %3452 = vmatpush.msra.mxu0 %v24
  %3453 = vmatpush.msra.mxu0 %v23
  %3454 = vmatpush.msra.mxu0 %v22
  %3455 = vmatpush.msra.mxu0 %v21
  %3456 = vmatpush.msra.mxu0 %v20
  %3457 = vmatmul.f32.gmra.mxu0 %v3436
  %v3458 = vpop.f32.mrf.mxu0
  %v3459 = vadd.f32 %v42, %v3458
  %3460 = vdwg.mxu0
  %3461 = vmatpush.msra.mxu0 0.0
  %3462 = vmatpush.msra.mxu0 0.0
  %3463 = vmatpush.msra.mxu0 0.0
  %3464 = vmatpush.msra.mxu0 0.0
  %3465 = vmatpush.msra.mxu0 0.0
  %3466 = vmatpush.msra.mxu0 0.0
  %3467 = vmatpush.msra.mxu0 0.0
  %3468 = vmatpush.msra.mxu0 0.0
  %3469 = vmatpush.msra.mxu0 0.0
  %3470 = vmatpush.msra.mxu0 0.0
  %3471 = vmatpush.msra.mxu0 0.0
  %3472 = vmatpush.msra.mxu0 0.0
  %3473 = vmatpush.msra.mxu0 0.0
  %3474 = vmatpush.msra.mxu0 0.0
  %3475 = vmatpush.msra.mxu0 %v37
  %3476 = vmatpush.msra.mxu0 %v36
  %3477 = vmatmul.f32.gmra.mxu0 %v3439
  %v3478 = vpop.f32.mrf.mxu0
  %v3479 = vadd.f32 %v3459, %v3478
  %3480 = vdwg.mxu0
  %v3481 = vmax.f32 %v3479, 0.0
  %v3482 = vmax.f32 %v3434, %v3481
  %s3483 = scalar_lea.vmem %s0, 1008
  %v3484 = vld [vmem:[%s3483] sm:$0xff]
  %v3485 = vld [vmem:[%s3483 + $0x8] sm:$0xff]
  %v3487 = vsel %vm44, %v3485, 0
  %3489 = vmatpush.msra.mxu0 %v35
  %3490 = vmatpush.msra.mxu0 %v34
  %3491 = vmatpush.msra.mxu0 %v33
  %3492 = vmatpush.msra.mxu0 %v32
  %3493 = vmatpush.msra.mxu0 %v31
  %3494 = vmatpush.msra.mxu0 %v30
  %3495 = vmatpush.msra.mxu0 %v29
  %3496 = vmatpush.msra.mxu0 %v28
  %3497 = vmatpush.msra.mxu0 %v27
  %3498 = vmatpush.msra.mxu0 %v26
  %3499 = vmatpush.msra.mxu0 %v25
  %3500 = vmatpush.msra.mxu0 %v24
  %3501 = vmatpush.msra.mxu0 %v23
  %3502 = vmatpush.msra.mxu0 %v22
  %3503 = vmatpush.msra.mxu0 %v21
  %3504 = vmatpush.msra.mxu0 %v20
  %3505 = vmatmul.f32.gmra.mxu0 %v3484
  %v3506 = vpop.f32.mrf.mxu0
  %v3507 = vadd.f32 %v42, %v3506
  %3508 = vdwg.mxu0
  %3509 = vmatpush.msra.mxu0 0.0
  %3510 = vmatpush.msra.mxu0 0.0
  %3511 = vmatpush.msra.mxu0 0.0
  %3512 = vmatpush.msra.mxu0 0.0
  %3513 = vmatpush.msra.mxu0 0.0
  %3514 = vmatpush.msra.mxu0 0.0
  %3515 = vmatpush.msra.mxu0 0.0
  %3516 = vmatpush.msra.mxu0 0.0
  %3517 = vmatpush.msra.mxu0 0.0
  %3518 = vmatpush.msra.mxu0 0.0
  %3519 = vmatpush.msra.mxu0 0.0
  %3520 = vmatpush.msra.mxu0 0.0
  %3521 = vmatpush.msra.mxu0 0.0
  %3522 = vmatpush.msra.mxu0 0.0
  %3523 = vmatpush.msra.mxu0 %v37
  %3524 = vmatpush.msra.mxu0 %v36
  %3525 = vmatmul.f32.gmra.mxu0 %v3487
  %v3526 = vpop.f32.mrf.mxu0
  %v3527 = vadd.f32 %v3507, %v3526
  %3528 = vdwg.mxu0
  %v3529 = vmax.f32 %v3527, 0.0
  %v3530 = vmax.f32 %v3482, %v3529
  %s3531 = scalar_lea.vmem %s3, 480
  %v3532 = vld [vmem:[%s3531] sm:$0xff]
  %v3533 = vld [vmem:[%s3531 + $0x8] sm:$0xff]
  %v3534 = vld [vmem:[%s3531 + $0x10] sm:$0xff]
  %v3535 = vld [vmem:[%s3531 + $0x18] sm:$0xff]
  %v3537 = vsel %vm433, %v3530, 0
  %3539 = vmatpush.msra.mxu0 0.0
  %3540 = vmatpush.msra.mxu0 0.0
  %3541 = vmatpush.msra.mxu0 0.0
  %3542 = vmatpush.msra.mxu0 0.0
  %3543 = vmatpush.msra.mxu0 0.0
  %3544 = vmatpush.msra.mxu0 0.0
  %3545 = vmatpush.msra.mxu0 0.0
  %3546 = vmatpush.msra.mxu0 0.0
  %3547 = vmatpush.msra.mxu0 0.0
  %3548 = vmatpush.msra.mxu0 0.0
  %3549 = vmatpush.msra.mxu0 0.0
  %3550 = vmatpush.msra.mxu0 0.0
  %3551 = vmatpush.msra.mxu0 %v3535
  %3552 = vmatpush.msra.mxu0 %v3534
  %3553 = vmatpush.msra.mxu0 %v3533
  %3554 = vmatpush.msra.mxu0 %v3532
  %3555 = vmatmul.f32.gmra.mxu0 %v3537
  %v3556 = vpop.f32.mrf.mxu0
  %v3557 = vadd.f32 0.0, %v3556
  %3558 = vdwg.mxu0
  %v3559 = vadd.f32 %v3339, %v3557
  %v3560 = vld [vmem:[%s4] sm:$0x1]
  %v3562 = vperm.slane %v3560, 0
  %v3564 = vadd.f32 %v3559, %v3562
  %v3565 = vmax.f32 %v3564, 0.0
  %3566 = vst [vmem:[%s5] sm:$0xff] %v3565
  // Predicated region
  $region22: #{gabor_backbone_forward.3} parent=0 // pred_check
    _
  $region23: #{gabor_backbone_forward.3} parent=0 // pred_check_branch
    %3568 = sbr.rel (0) target = $region25
  $region24: #{gabor_backbone_forward.3} parent=0 // pred_region
    _
  $region25: #{gabor_backbone_forward.3} parent=0 // pred_fallthru
    _
  // Predicated region
  $region26: #{gabor_backbone_forward.3} parent=0 // pred_check
    _
  $region27: #{gabor_backbone_forward.3} parent=0 // pred_check_branch
    %3570 = sbr.rel (0) target = $region29
  $region28: #{gabor_backbone_forward.3} parent=0 // pred_region
    _
  $region29: #{gabor_backbone_forward.3} parent=0 // pred_fallthru
    _

</llo_original>
